<compile_context>
chip_gen: v6e
topology: v6e:2x2x1
jax: 0.10.0
libtpu: 0.0.40
codegen_flags: <defaults>
</compile_context>

<pallas_src>
import jax
import jax.numpy as jnp
from jax.experimental import pallas as pl
from jax.experimental.pallas import tpu as pltpu


# ----------------------------------------------------------------------------
# Helpers
# ----------------------------------------------------------------------------

def _round_up(v, m):
    return (v + m - 1) // m * m


def _vmem_limit_bytes(H, W, wp, cin, cout1, cout2, io_itemsize):
    """Rough working-set estimate (scratch + resident weights + temporaries),
    doubled for compiler slack, clamped to a safe [32 MiB, 56 MiB] range."""
    bf, f32 = 2, 4
    est = (H + 3) * wp * cin * bf + (H + 2) * wp * 3 * cin * bf          # pad1 + cat1
    est += (H + 3) * wp * cout1 * bf + (H + 2) * wp * 3 * cout1 * bf     # pad2 + cat2
    est += 9 * cin * cout1 * bf + 9 * cout1 * cout2 * bf + cin * cout2 * bf  # weights
    est += 2 * H * W * cin * io_itemsize + 2 * H * W * cout2 * io_itemsize   # x / out (dbuf)
    est += 3 * H * wp * max(cout1, cout2) * f32                          # f32 accumulators
    limit = 2 * est + (4 << 20)
    return int(min(max(limit, 32 << 20), 56 << 20))


# ----------------------------------------------------------------------------
# In-kernel 3x3 "SAME" convolution pieces.
#
# The padded activation lives in a VMEM scratch of shape (H+3, Wp, C) with
# Wp = round_up(W+2, 8) and the interior at [1:H+1, 1:W+1].  Flattening to
# (Hp*Wp, C) is layout-free (Wp % 8 == 0); tap (dy, dx) of flat output index
# q = h*Wp + w is row q + dy*Wp + dx.  Columns >= W of the flat accumulator
# are junk and sliced away before use.
# ----------------------------------------------------------------------------

def _fill_pad(pad_ref, act, H, W):
    """Store `act` (H, W, C) into the interior of pad_ref and zero ONLY the
    halo border (top row, 2 bottom rows, left column, right padded columns)."""
    hp, wp, c = pad_ref.shape
    dt = pad_ref.dtype
    pad_ref[0:1, :, :] = jnp.zeros((1, wp, c), dt)                     # top halo row
    pad_ref[H + 1:, :, :] = jnp.zeros((hp - H - 1, wp, c), dt)         # bottom halo rows
    pad_ref[1:H + 1, 0:1, :] = jnp.zeros((H, 1, c), dt)                # left halo col
    pad_ref[1:H + 1, W + 1:, :] = jnp.zeros((H, wp - W - 1, c), dt)    # right halo cols
    pad_ref[1:H + 1, 1:W + 1, :] = act.astype(dt)                      # interior


def _conv3x3_packed(pad_ref, w_ref, H):
    """3x3 SAME conv from a padded scratch using K-packed taps.

    pad_ref: (H+3, Wp, Cin) bf16 scratch (already filled).
    w_ref:   (3, 3*Cin, Cout) bf16 weight ref (row dy holds taps dx=0..2).
    Returns: (H*Wp, Cout) f32 accumulator (junk columns >= W to be discarded).
    """
    hp, wp, cin = pad_ref.shape
    rows = (H + 2) * wp
    flat = pad_ref[...].reshape(hp * wp, cin)            # layout-free (wp % 8 == 0)
    # Lane-concat the 3 dx-shifted views once -> (rows, 3*Cin); only the dx=1,2
    # views are sublane-shifted copies.
    cat = jnp.concatenate(
        [jax.lax.slice(flat, (dx, 0), (dx + rows, cin)) for dx in range(3)], axis=1)

    rows_out = H * wp
    acc = None
    for dy in range(3):
        r0 = dy * wp                                     # multiple of 8 -> aligned slice
        lhs = jax.lax.slice(cat, (r0, 0), (r0 + rows_out, 3 * cin))
        part = jnp.dot(lhs, w_ref[dy], preferred_element_type=jnp.float32)
        acc = part if acc is None else acc + part        # init with first dot
    return acc


# ----------------------------------------------------------------------------
# Fused block kernel (scalars closed over as compile-time constants)
# ----------------------------------------------------------------------------

def _make_block_kernel(b1, b2, b3, b4, scale, equal, H, W):
    def body(x_ref, w1_ref, w2_ref, wsc_ref, o_ref, pad1, pad2):
        _, wp, cin = pad1.shape
        cout1 = w1_ref.shape[-1]
        cout2 = w2_ref.shape[-1]

        x = x_ref[...].astype(jnp.float32)
        # relu(x + b1): bf16 into the MXU (both conv1 and the 1x1 shortcut).
        xact = jnp.maximum(x + b1, 0.0).astype(jnp.bfloat16)

        # ---- conv1: mid = relu(conv3x3(xact, w1) + b2) + b3  (stays in VMEM) ----
        _fill_pad(pad1, xact, H, W)
        acc1 = _conv3x3_packed(pad1, w1_ref, H)                       # (H*wp, cout1) f32
        mid = (jnp.maximum(acc1 + b2, 0.0) + b3).astype(jnp.bfloat16)
        mid = mid.reshape(H, wp, cout1)[:, :W, :]                     # drop junk columns

        # ---- conv2: y = conv3x3(mid, w2) * scale + b4 ----
        _fill_pad(pad2, mid, H, W)
        acc2 = _conv3x3_packed(pad2, w2_ref, H)                       # (H*wp, cout2) f32
        y = (acc2 * scale + b4).reshape(H, wp, cout2)[:, :W, :]

        # ---- shortcut ----
        if equal:
            res = x                                                   # identity (f32)
        else:
            res = jnp.dot(xact.reshape(H * W, cin), wsc_ref[...],
                          preferred_element_type=jnp.float32).reshape(H, W, cout2)

        o_ref[...] = (y + res).astype(o_ref.dtype)

    if equal:
        def kernel(x_ref, w1_ref, w2_ref, o_ref, pad1, pad2):
            body(x_ref, w1_ref, w2_ref, None, o_ref, pad1, pad2)
    else:
        def kernel(x_ref, w1_ref, w2_ref, wsc_ref, o_ref, pad1, pad2):
            body(x_ref, w1_ref, w2_ref, wsc_ref, o_ref, pad1, pad2)
    return kernel


# ----------------------------------------------------------------------------
# pallas_call wrapper (NHWC)
# ----------------------------------------------------------------------------

def wrn_fixup_block_nhwc(x, w1_packed, w2_packed, *, b1, b2, b3, b4, scale,
                         w_sc=None):
    """Fused WRN Fixup basic block.  w1_packed/w2_packed: (3, 3*Cin, Cout) bf16."""
    N, H, W, cin = x.shape
    assert w1_packed.shape[:2] == (3, 3 * cin)
    cout1 = w1_packed.shape[-1]
    assert w2_packed.shape[:2] == (3, 3 * cout1)
    cout2 = w2_packed.shape[-1]
    wp = _round_up(W + 2, 8)
    equal = w_sc is None
    if equal:
        assert cin == cout2

    kernel = _make_block_kernel(float(b1), float(b2), float(b3), float(b4),
                                float(scale), equal, H, W)

    in_specs = [
        # x: one batch element per grid step.
        pl.BlockSpec((None, H, W, cin), lambda n: (n, 0, 0, 0)),
        # Weights: full blocks, constant index -> DMA'd once, resident for all n.
        pl.BlockSpec((3, 3 * cin, cout1), lambda n: (0, 0, 0)),
        pl.BlockSpec((3, 3 * cout1, cout2), lambda n: (0, 0, 0)),
    ]
    args = [x, w1_packed, w2_packed]
    if not equal:
        in_specs.append(pl.BlockSpec((cin, cout2), lambda n: (0, 0)))
        args.append(w_sc)

    scratch_shapes = [
        pltpu.VMEM((H + 3, wp, cin), jnp.bfloat16),    # padded xact
        pltpu.VMEM((H + 3, wp, cout1), jnp.bfloat16),  # padded mid
    ]

    return pl.pallas_call(
        kernel,
        out_shape=jax.ShapeDtypeStruct((N, H, W, cout2), x.dtype),
        grid=(N,),
        in_specs=in_specs,
        out_specs=pl.BlockSpec((None, H, W, cout2), lambda n: (n, 0, 0, 0)),
        scratch_shapes=scratch_shapes,
        compiler_params=pltpu.CompilerParams(
            dimension_semantics=("parallel",),
            vmem_limit_bytes=_vmem_limit_bytes(H, W, wp, cin, cout1, cout2,
                                               x.dtype.itemsize)),
    )(*args)


# ----------------------------------------------------------------------------
# Module
# ----------------------------------------------------------------------------

class WRNFixupBasicBlockPallas:
    def __init__(self, in_planes, out_planes, stride=1, dropRate=0.0, key=None):
        assert stride == 1, "TODO(synk): only stride=1 is implemented"
        assert dropRate == 0.0, "TODO(synk): dropout not implemented (dropRate=0)"
        self.in_planes = in_planes
        self.out_planes = out_planes
        self.equalInOut = (in_planes == out_planes)

        key = jax.random.PRNGKey(1) if key is None else key
        k1, k2, k3 = jax.random.split(key, 3)
        # Conv weights in HWIO, deterministic init (master copies in f32).
        self.w1 = 0.1 * jax.random.normal(k1, (3, 3, in_planes, out_planes), jnp.float32)
        self.w2 = 0.1 * jax.random.normal(k2, (3, 3, out_planes, out_planes), jnp.float32)
        self.w_sc = (None if self.equalInOut else
                     0.1 * jax.random.normal(k3, (in_planes, out_planes), jnp.float32))

        # bf16, per-row-packed copies consumed by the kernel: (3, 3*Cin, Cout).
        self.w1_packed = self.w1.reshape(3, 3 * in_planes, out_planes).astype(jnp.bfloat16)
        self.w2_packed = self.w2.reshape(3, 3 * out_planes, out_planes).astype(jnp.bfloat16)
        self.w_sc_bf16 = None if self.w_sc is None else self.w_sc.astype(jnp.bfloat16)

        # Fixup scalar parameters (Bias init 0 / Scale init 1 in torch -- perturbed
        # deterministically here so the correctness check is non-trivial).
        self.b1, self.b2, self.b3, self.b4 = 0.1, -0.05, 0.02, 0.03
        self.scale = 1.5

    # NHWC path (what a full network should use -- no per-block transposes).
    def forward_nhwc(self, x):
        return wrn_fixup_block_nhwc(
            x, self.w1_packed, self.w2_packed,
            b1=self.b1, b2=self.b2, b3=self.b3, b4=self.b4, scale=self.scale,
            w_sc=self.w_sc_bf16)

    def __call__(self, x_nchw):
        x = jnp.transpose(x_nchw, (0, 2, 3, 1))       # NCHW -> NHWC (boundary only)
        out = self.forward_nhwc(x)
        return jnp.transpose(out, (0, 3, 1, 2))       # NHWC -> NCHW

    # Matched-precision pure-JAX reference (bf16 MXU operands, f32 accumulation,
    # bf16 mid), for correctness checking only.
    def reference(self, x_nchw):
        x = jnp.transpose(x_nchw, (0, 2, 3, 1)).astype(jnp.float32)

        def conv(a_bf16, w, pad):
            return jax.lax.conv_general_dilated(
                a_bf16, w.astype(jnp.bfloat16), (1, 1), pad,
                dimension_numbers=("NHWC", "HWIO", "NHWC"),
                preferred_element_type=jnp.float32)

        xact = jnp.maximum(x + self.b1, 0.0).astype(jnp.bfloat16)
        mid = jnp.maximum(conv(xact, self.w1, "SAME") + self.b2, 0.0) + self.b3
        mid = mid.astype(jnp.bfloat16)
        out = conv(mid, self.w2, "SAME") * self.scale + self.b4
        if self.equalInOut:
            res = x
        else:
            res = conv(xact,
                       self.w_sc.reshape(1, 1, self.in_planes, self.out_planes),
                       "VALID")
        return jnp.transpose(out + res, (0, 3, 1, 2)).astype(x_nchw.dtype)


# ----------------------------------------------------------------------------
# Demo
# ----------------------------------------------------------------------------

if __name__ == "__main__":
    key = jax.random.PRNGKey(0)
    N, C_in, H, W = 2, 4, 16, 16
    C_out = 8  # in_planes != out_planes -> exercises the fused 1x1 shortcut
    x = jax.random.normal(key, (N, C_in, H, W), jnp.float32)

    # Projection (1x1) shortcut path.
    block = WRNFixupBasicBlockPallas(C_in, C_out, stride=1, key=jax.random.PRNGKey(1))
    out = jax.block_until_ready(block(x))
    assert out.shape == (N, C_out, H, W), out.shape
    err = float(jnp.max(jnp.abs(out - block.reference(x))))
    assert err < 1e-2, f"max abs error {err}"

    # Identity-shortcut (equalInOut) path.
    block_eq = WRNFixupBasicBlockPallas(C_in, C_in, stride=1, key=jax.random.PRNGKey(2))
    out_eq = jax.block_until_ready(block_eq(x))
    err_eq = float(jnp.max(jnp.abs(out_eq - block_eq.reference(x))))
    assert err_eq < 1e-2, f"max abs error (equalInOut) {err_eq}"

    print("KERNEL_OK")
</pallas_src>

<mosaic_0001>
module attributes {stable_mosaic.version = 11 : i64} {
  func.func @kernel(%arg0: i32, %arg1: memref<1x16x16x4xf32, #tpu.memory_space<vmem>>, %arg2: memref<3x12x8xbf16, #tpu.memory_space<vmem>>, %arg3: memref<3x24x8xbf16, #tpu.memory_space<vmem>>, %arg4: memref<4x8xbf16, #tpu.memory_space<vmem>>, %arg5: memref<1x16x16x8xf32, #tpu.memory_space<vmem>>, %arg6: memref<19x24x4xbf16, #tpu.memory_space<vmem>>, %arg7: memref<19x24x8xbf16, #tpu.memory_space<vmem>>) attributes {dimension_semantics = [#tpu.dimension_semantics<parallel>], iteration_bounds = array<i64: 2>, scalar_prefetch = 0 : i64, scratch_operands = 2 : i64, tpu.core_type = #tpu.core_type<tc>, window_params = [{transform_indices = @transform_0, window_bounds = array<i64: 1, 16, 16, 4>}, {pipeline_mode = #tpu.pipeline_mode<synchronous>, transform_indices = @transform_1, window_bounds = array<i64: 3, 12, 8>}, {pipeline_mode = #tpu.pipeline_mode<synchronous>, transform_indices = @transform_2, window_bounds = array<i64: 3, 24, 8>}, {pipeline_mode = #tpu.pipeline_mode<synchronous>, transform_indices = @transform_3, window_bounds = array<i64: 4, 8>}, {transform_indices = @transform_4, window_bounds = array<i64: 1, 16, 16, 8>}]} {
    %c0 = arith.constant 0 : index
    %c0_0 = arith.constant 0 : index
    %c0_1 = arith.constant 0 : index
    %c0_2 = arith.constant 0 : index
    %0 = vector.load %arg1[%c0, %c0_0, %c0_1, %c0_2] : memref<1x16x16x4xf32, #tpu.memory_space<vmem>>, vector<1x16x16x4xf32>
    %1 = vector.shape_cast %0 : vector<1x16x16x4xf32> to vector<16x16x4xf32>
    %cst = arith.constant 1.000000e-01 : f32
    %2 = vector.broadcast %cst : f32 to vector<16x16x4xf32>
    %3 = arith.addf %1, %2 : vector<16x16x4xf32>
    %cst_3 = arith.constant 0.000000e+00 : f32
    %4 = vector.broadcast %cst_3 : f32 to vector<16x16x4xf32>
    %5 = arith.maximumf %3, %4 : vector<16x16x4xf32>
    %6 = arith.truncf %5 : vector<16x16x4xf32> to vector<16x16x4xbf16>
    %cst_4 = arith.constant 0.000000e+00 : bf16
    %7 = vector.broadcast %cst_4 : bf16 to vector<1x24x4xbf16>
    %c0_5 = arith.constant 0 : index
    %c0_6 = arith.constant 0 : index
    %c0_7 = arith.constant 0 : index
    %8 = vector.load %arg6[%c0_5, %c0_6, %c0_7] : memref<19x24x4xbf16, #tpu.memory_space<vmem>>, vector<1x24x4xbf16>
    tpu.vector_store %arg6[%c0_5, %c0_6, %c0_7], %7 {strides = array<i32>} : memref<19x24x4xbf16, #tpu.memory_space<vmem>>, vector<1x24x4xbf16>,
    %cst_8 = arith.constant 0.000000e+00 : bf16
    %9 = vector.broadcast %cst_8 : bf16 to vector<2x24x4xbf16>
    %c17 = arith.constant 17 : index
    %c0_9 = arith.constant 0 : index
    %c0_10 = arith.constant 0 : index
    %10 = vector.load %arg6[%c17, %c0_9, %c0_10] : memref<19x24x4xbf16, #tpu.memory_space<vmem>>, vector<2x24x4xbf16>
    tpu.vector_store %arg6[%c17, %c0_9, %c0_10], %9 {strides = array<i32>} : memref<19x24x4xbf16, #tpu.memory_space<vmem>>, vector<2x24x4xbf16>,
    %cst_11 = arith.constant 0.000000e+00 : bf16
    %11 = vector.broadcast %cst_11 : bf16 to vector<16x1x4xbf16>
    %c1 = arith.constant 1 : index
    %c0_12 = arith.constant 0 : index
    %c0_13 = arith.constant 0 : index
    %12 = vector.load %arg6[%c1, %c0_12, %c0_13] : memref<19x24x4xbf16, #tpu.memory_space<vmem>>, vector<16x1x4xbf16>
    tpu.vector_store %arg6[%c1, %c0_12, %c0_13], %11 {strides = array<i32>} : memref<19x24x4xbf16, #tpu.memory_space<vmem>>, vector<16x1x4xbf16>,
    %cst_14 = arith.constant 0.000000e+00 : bf16
    %13 = vector.broadcast %cst_14 : bf16 to vector<16x7x4xbf16>
    %c1_15 = arith.constant 1 : index
    %c17_16 = arith.constant 17 : index
    %c0_17 = arith.constant 0 : index
    %14 = vector.load %arg6[%c1_15, %c17_16, %c0_17] : memref<19x24x4xbf16, #tpu.memory_space<vmem>>, vector<16x7x4xbf16>
    tpu.vector_store %arg6[%c1_15, %c17_16, %c0_17], %13 {strides = array<i32>} : memref<19x24x4xbf16, #tpu.memory_space<vmem>>, vector<16x7x4xbf16>,
    %c1_18 = arith.constant 1 : index
    %c1_19 = arith.constant 1 : index
    %c0_20 = arith.constant 0 : index
    %15 = vector.load %arg6[%c1_18, %c1_19, %c0_20] : memref<19x24x4xbf16, #tpu.memory_space<vmem>>, vector<16x16x4xbf16>
    tpu.vector_store %arg6[%c1_18, %c1_19, %c0_20], %6 {strides = array<i32>} : memref<19x24x4xbf16, #tpu.memory_space<vmem>>, vector<16x16x4xbf16>,
    %c0_21 = arith.constant 0 : index
    %c0_22 = arith.constant 0 : index
    %c0_23 = arith.constant 0 : index
    %16 = vector.load %arg6[%c0_21, %c0_22, %c0_23] : memref<19x24x4xbf16, #tpu.memory_space<vmem>>, vector<19x24x4xbf16>
    %17 = vector.shape_cast %16 : vector<19x24x4xbf16> to vector<456x4xbf16>
    %18 = vector.extract_strided_slice %17 {offsets = [0, 0], sizes = [432, 4], strides = [1, 1]} : vector<456x4xbf16> to vector<432x4xbf16>
    %19 = vector.extract_strided_slice %17 {offsets = [1, 0], sizes = [432, 4], strides = [1, 1]} : vector<456x4xbf16> to vector<432x4xbf16>
    %20 = vector.extract_strided_slice %17 {offsets = [2, 0], sizes = [432, 4], strides = [1, 1]} : vector<456x4xbf16> to vector<432x4xbf16>
    %21 = tpu.concatenate %18, %19, %20 in 1 : vector<432x4xbf16>, vector<432x4xbf16>, vector<432x4xbf16> -> vector<432x12xbf16>
    %22 = vector.extract_strided_slice %21 {offsets = [0, 0], sizes = [384, 12], strides = [1, 1]} : vector<432x12xbf16> to vector<384x12xbf16>
    %c0_24 = arith.constant 0 : index
    %c0_25 = arith.constant 0 : index
    %c0_26 = arith.constant 0 : index
    %23 = vector.load %arg2[%c0_24, %c0_25, %c0_26] : memref<3x12x8xbf16, #tpu.memory_space<vmem>>, vector<1x12x8xbf16>
    %24 = vector.shape_cast %23 : vector<1x12x8xbf16> to vector<12x8xbf16>
    %cst_27 = arith.constant dense<0.000000e+00> : vector<384x8xf32>
    %25 = tpu.matmul %22, %24, %cst_27 {dimension_numbers = #tpu.dot_dimension_numbers<[1], [0], [0], [1], [0, 0, 1, 1], [], []>} : vector<384x12xbf16>, vector<12x8xbf16>, vector<384x8xf32> -> vector<384x8xf32>
    %26 = vector.extract_strided_slice %21 {offsets = [24, 0], sizes = [384, 12], strides = [1, 1]} : vector<432x12xbf16> to vector<384x12xbf16>
    %c1_28 = arith.constant 1 : index
    %c0_29 = arith.constant 0 : index
    %c0_30 = arith.constant 0 : index
    %27 = vector.load %arg2[%c1_28, %c0_29, %c0_30] : memref<3x12x8xbf16, #tpu.memory_space<vmem>>, vector<1x12x8xbf16>
    %28 = vector.shape_cast %27 : vector<1x12x8xbf16> to vector<12x8xbf16>
    %cst_31 = arith.constant dense<0.000000e+00> : vector<384x8xf32>
    %29 = tpu.matmul %26, %28, %cst_31 {dimension_numbers = #tpu.dot_dimension_numbers<[1], [0], [0], [1], [0, 0, 1, 1], [], []>} : vector<384x12xbf16>, vector<12x8xbf16>, vector<384x8xf32> -> vector<384x8xf32>
    %30 = arith.addf %25, %29 : vector<384x8xf32>
    %31 = vector.extract_strided_slice %21 {offsets = [48, 0], sizes = [384, 12], strides = [1, 1]} : vector<432x12xbf16> to vector<384x12xbf16>
    %c2 = arith.constant 2 : index
    %c0_32 = arith.constant 0 : index
    %c0_33 = arith.constant 0 : index
    %32 = vector.load %arg2[%c2, %c0_32, %c0_33] : memref<3x12x8xbf16, #tpu.memory_space<vmem>>, vector<1x12x8xbf16>
    %33 = vector.shape_cast %32 : vector<1x12x8xbf16> to vector<12x8xbf16>
    %cst_34 = arith.constant dense<0.000000e+00> : vector<384x8xf32>
    %34 = tpu.matmul %31, %33, %cst_34 {dimension_numbers = #tpu.dot_dimension_numbers<[1], [0], [0], [1], [0, 0, 1, 1], [], []>} : vector<384x12xbf16>, vector<12x8xbf16>, vector<384x8xf32> -> vector<384x8xf32>
    %35 = arith.addf %30, %34 : vector<384x8xf32>
    %cst_35 = arith.constant -5.000000e-02 : f32
    %36 = vector.broadcast %cst_35 : f32 to vector<384x8xf32>
    %37 = arith.addf %35, %36 : vector<384x8xf32>
    %cst_36 = arith.constant 0.000000e+00 : f32
    %38 = vector.broadcast %cst_36 : f32 to vector<384x8xf32>
    %39 = arith.maximumf %37, %38 : vector<384x8xf32>
    %cst_37 = arith.constant 2.000000e-02 : f32
    %40 = vector.broadcast %cst_37 : f32 to vector<384x8xf32>
    %41 = arith.addf %39, %40 : vector<384x8xf32>
    %42 = arith.truncf %41 : vector<384x8xf32> to vector<384x8xbf16>
    %43 = vector.shape_cast %42 : vector<384x8xbf16> to vector<16x24x8xbf16>
    %44 = vector.extract_strided_slice %43 {offsets = [0, 0, 0], sizes = [16, 16, 8], strides = [1, 1, 1]} : vector<16x24x8xbf16> to vector<16x16x8xbf16>
    %cst_38 = arith.constant 0.000000e+00 : bf16
    %45 = vector.broadcast %cst_38 : bf16 to vector<1x24x8xbf16>
    %c0_39 = arith.constant 0 : index
    %c0_40 = arith.constant 0 : index
    %c0_41 = arith.constant 0 : index
    %46 = vector.load %arg7[%c0_39, %c0_40, %c0_41] : memref<19x24x8xbf16, #tpu.memory_space<vmem>>, vector<1x24x8xbf16>
    tpu.vector_store %arg7[%c0_39, %c0_40, %c0_41], %45 {strides = array<i32>} : memref<19x24x8xbf16, #tpu.memory_space<vmem>>, vector<1x24x8xbf16>,
    %cst_42 = arith.constant 0.000000e+00 : bf16
    %47 = vector.broadcast %cst_42 : bf16 to vector<2x24x8xbf16>
    %c17_43 = arith.constant 17 : index
    %c0_44 = arith.constant 0 : index
    %c0_45 = arith.constant 0 : index
    %48 = vector.load %arg7[%c17_43, %c0_44, %c0_45] : memref<19x24x8xbf16, #tpu.memory_space<vmem>>, vector<2x24x8xbf16>
    tpu.vector_store %arg7[%c17_43, %c0_44, %c0_45], %47 {strides = array<i32>} : memref<19x24x8xbf16, #tpu.memory_space<vmem>>, vector<2x24x8xbf16>,
    %cst_46 = arith.constant 0.000000e+00 : bf16
    %49 = vector.broadcast %cst_46 : bf16 to vector<16x1x8xbf16>
    %c1_47 = arith.constant 1 : index
    %c0_48 = arith.constant 0 : index
    %c0_49 = arith.constant 0 : index
    %50 = vector.load %arg7[%c1_47, %c0_48, %c0_49] : memref<19x24x8xbf16, #tpu.memory_space<vmem>>, vector<16x1x8xbf16>
    tpu.vector_store %arg7[%c1_47, %c0_48, %c0_49], %49 {strides = array<i32>} : memref<19x24x8xbf16, #tpu.memory_space<vmem>>, vector<16x1x8xbf16>,
    %cst_50 = arith.constant 0.000000e+00 : bf16
    %51 = vector.broadcast %cst_50 : bf16 to vector<16x7x8xbf16>
    %c1_51 = arith.constant 1 : index
    %c17_52 = arith.constant 17 : index
    %c0_53 = arith.constant 0 : index
    %52 = vector.load %arg7[%c1_51, %c17_52, %c0_53] : memref<19x24x8xbf16, #tpu.memory_space<vmem>>, vector<16x7x8xbf16>
    tpu.vector_store %arg7[%c1_51, %c17_52, %c0_53], %51 {strides = array<i32>} : memref<19x24x8xbf16, #tpu.memory_space<vmem>>, vector<16x7x8xbf16>,
    %c1_54 = arith.constant 1 : index
    %c1_55 = arith.constant 1 : index
    %c0_56 = arith.constant 0 : index
    %53 = vector.load %arg7[%c1_54, %c1_55, %c0_56] : memref<19x24x8xbf16, #tpu.memory_space<vmem>>, vector<16x16x8xbf16>
    tpu.vector_store %arg7[%c1_54, %c1_55, %c0_56], %44 {strides = array<i32>} : memref<19x24x8xbf16, #tpu.memory_space<vmem>>, vector<16x16x8xbf16>,
    %c0_57 = arith.constant 0 : index
    %c0_58 = arith.constant 0 : index
    %c0_59 = arith.constant 0 : index
    %54 = vector.load %arg7[%c0_57, %c0_58, %c0_59] : memref<19x24x8xbf16, #tpu.memory_space<vmem>>, vector<19x24x8xbf16>
    %55 = vector.shape_cast %54 : vector<19x24x8xbf16> to vector<456x8xbf16>
    %56 = vector.extract_strided_slice %55 {offsets = [0, 0], sizes = [432, 8], strides = [1, 1]} : vector<456x8xbf16> to vector<432x8xbf16>
    %57 = vector.extract_strided_slice %55 {offsets = [1, 0], sizes = [432, 8], strides = [1, 1]} : vector<456x8xbf16> to vector<432x8xbf16>
    %58 = vector.extract_strided_slice %55 {offsets = [2, 0], sizes = [432, 8], strides = [1, 1]} : vector<456x8xbf16> to vector<432x8xbf16>
    %59 = tpu.concatenate %56, %57, %58 in 1 : vector<432x8xbf16>, vector<432x8xbf16>, vector<432x8xbf16> -> vector<432x24xbf16>
    %60 = vector.extract_strided_slice %59 {offsets = [0, 0], sizes = [384, 24], strides = [1, 1]} : vector<432x24xbf16> to vector<384x24xbf16>
    %c0_60 = arith.constant 0 : index
    %c0_61 = arith.constant 0 : index
    %c0_62 = arith.constant 0 : index
    %61 = vector.load %arg3[%c0_60, %c0_61, %c0_62] : memref<3x24x8xbf16, #tpu.memory_space<vmem>>, vector<1x24x8xbf16>
    %62 = vector.shape_cast %61 : vector<1x24x8xbf16> to vector<24x8xbf16>
    %cst_63 = arith.constant dense<0.000000e+00> : vector<384x8xf32>
    %63 = tpu.matmul %60, %62, %cst_63 {dimension_numbers = #tpu.dot_dimension_numbers<[1], [0], [0], [1], [0, 0, 1, 1], [], []>} : vector<384x24xbf16>, vector<24x8xbf16>, vector<384x8xf32> -> vector<384x8xf32>
    %64 = vector.extract_strided_slice %59 {offsets = [24, 0], sizes = [384, 24], strides = [1, 1]} : vector<432x24xbf16> to vector<384x24xbf16>
    %c1_64 = arith.constant 1 : index
    %c0_65 = arith.constant 0 : index
    %c0_66 = arith.constant 0 : index
    %65 = vector.load %arg3[%c1_64, %c0_65, %c0_66] : memref<3x24x8xbf16, #tpu.memory_space<vmem>>, vector<1x24x8xbf16>
    %66 = vector.shape_cast %65 : vector<1x24x8xbf16> to vector<24x8xbf16>
    %cst_67 = arith.constant dense<0.000000e+00> : vector<384x8xf32>
    %67 = tpu.matmul %64, %66, %cst_67 {dimension_numbers = #tpu.dot_dimension_numbers<[1], [0], [0], [1], [0, 0, 1, 1], [], []>} : vector<384x24xbf16>, vector<24x8xbf16>, vector<384x8xf32> -> vector<384x8xf32>
    %68 = arith.addf %63, %67 : vector<384x8xf32>
    %69 = vector.extract_strided_slice %59 {offsets = [48, 0], sizes = [384, 24], strides = [1, 1]} : vector<432x24xbf16> to vector<384x24xbf16>
    %c2_68 = arith.constant 2 : index
    %c0_69 = arith.constant 0 : index
    %c0_70 = arith.constant 0 : index
    %70 = vector.load %arg3[%c2_68, %c0_69, %c0_70] : memref<3x24x8xbf16, #tpu.memory_space<vmem>>, vector<1x24x8xbf16>
    %71 = vector.shape_cast %70 : vector<1x24x8xbf16> to vector<24x8xbf16>
    %cst_71 = arith.constant dense<0.000000e+00> : vector<384x8xf32>
    %72 = tpu.matmul %69, %71, %cst_71 {dimension_numbers = #tpu.dot_dimension_numbers<[1], [0], [0], [1], [0, 0, 1, 1], [], []>} : vector<384x24xbf16>, vector<24x8xbf16>, vector<384x8xf32> -> vector<384x8xf32>
    %73 = arith.addf %68, %72 : vector<384x8xf32>
    %cst_72 = arith.constant 1.500000e+00 : f32
    %74 = vector.broadcast %cst_72 : f32 to vector<384x8xf32>
    %75 = arith.mulf %73, %74 : vector<384x8xf32>
    %cst_73 = arith.constant 3.000000e-02 : f32
    %76 = vector.broadcast %cst_73 : f32 to vector<384x8xf32>
    %77 = arith.addf %75, %76 : vector<384x8xf32>
    %78 = vector.shape_cast %77 : vector<384x8xf32> to vector<16x24x8xf32>
    %79 = vector.extract_strided_slice %78 {offsets = [0, 0, 0], sizes = [16, 16, 8], strides = [1, 1, 1]} : vector<16x24x8xf32> to vector<16x16x8xf32>
    %80 = vector.shape_cast %6 : vector<16x16x4xbf16> to vector<256x4xbf16>
    %c0_74 = arith.constant 0 : index
    %c0_75 = arith.constant 0 : index
    %81 = vector.load %arg4[%c0_74, %c0_75] : memref<4x8xbf16, #tpu.memory_space<vmem>>, vector<4x8xbf16>
    %cst_76 = arith.constant dense<0.000000e+00> : vector<256x8xf32>
    %82 = tpu.matmul %80, %81, %cst_76 {dimension_numbers = #tpu.dot_dimension_numbers<[1], [0], [0], [1], [0, 0, 1, 1], [], []>} : vector<256x4xbf16>, vector<4x8xbf16>, vector<256x8xf32> -> vector<256x8xf32>
    %83 = vector.shape_cast %82 : vector<256x8xf32> to vector<16x16x8xf32>
    %84 = arith.addf %79, %83 : vector<16x16x8xf32>
    %c0_77 = arith.constant 0 : index
    %c0_78 = arith.constant 0 : index
    %c0_79 = arith.constant 0 : index
    %c0_80 = arith.constant 0 : index
    %85 = vector.load %arg5[%c0_77, %c0_78, %c0_79, %c0_80] : memref<1x16x16x8xf32, #tpu.memory_space<vmem>>, vector<1x16x16x8xf32>
    %86 = vector.shape_cast %85 : vector<1x16x16x8xf32> to vector<16x16x8xf32>
    %87 = vector.shape_cast %84 : vector<16x16x8xf32> to vector<1x16x16x8xf32>
    tpu.vector_store %arg5[%c0_77, %c0_78, %c0_79, %c0_80], %87 {strides = array<i32>} : memref<1x16x16x8xf32, #tpu.memory_space<vmem>>, vector<1x16x16x8xf32>,
    return
  }
  func.func @transform_0(%arg0: i32) -> (i32, i32, i32, i32) {
    %c0_i32 = arith.constant 0 : i32
    %c0_i32_0 = arith.constant 0 : i32
    %c0_i32_1 = arith.constant 0 : i32
    %c0_i32_2 = arith.constant 0 : i32
    return %arg0, %c0_i32, %c0_i32_0, %c0_i32_1 : i32, i32, i32, i32
  }
  func.func @transform_1(%arg0: i32) -> (i32, i32, i32) {
    %c0_i32 = arith.constant 0 : i32
    %c0_i32_0 = arith.constant 0 : i32
    %c0_i32_1 = arith.constant 0 : i32
    %c0_i32_2 = arith.constant 0 : i32
    return %c0_i32, %c0_i32_0, %c0_i32_1 : i32, i32, i32
  }
  func.func @transform_2(%arg0: i32) -> (i32, i32, i32) {
    %c0_i32 = arith.constant 0 : i32
    %c0_i32_0 = arith.constant 0 : i32
    %c0_i32_1 = arith.constant 0 : i32
    %c0_i32_2 = arith.constant 0 : i32
    return %c0_i32, %c0_i32_0, %c0_i32_1 : i32, i32, i32
  }
  func.func @transform_3(%arg0: i32) -> (i32, i32) {
    %c0_i32 = arith.constant 0 : i32
    %c0_i32_0 = arith.constant 0 : i32
    %c0_i32_1 = arith.constant 0 : i32
    return %c0_i32, %c0_i32_0 : i32, i32
  }
  func.func @transform_4(%arg0: i32) -> (i32, i32, i32, i32) {
    %c0_i32 = arith.constant 0 : i32
    %c0_i32_0 = arith.constant 0 : i32
    %c0_i32_1 = arith.constant 0 : i32
    %c0_i32_2 = arith.constant 0 : i32
    return %arg0, %c0_i32, %c0_i32_0, %c0_i32_1 : i32, i32, i32, i32
  }
}

</mosaic_0001>

<llo_original>
// kernel: tpu_custom_call.1
$region0: #{tpu_custom_call.1}
  #allocation0 [shape = 'u32[]', space=smem, size = 0x4, offset = 0x4, fixed_abs, tag = 'smem constant byte address 0x4 - core index']
  #allocation1 [shape = 'u32[144,128]{1,0:T(1,128)}', space=vmem, size = 0x12000, scoped, tag = 'internal scratch']
  #allocation2 [shape = 'bf16[19,24,4]{2,1,0:T(8,128)(2,1)}', space=vmem, size = 0x1c800, scoped, tag = 'scratch operand']
  #allocation3 [shape = 'bf16[19,24,8]{2,1,0:T(8,128)(2,1)}', space=vmem, size = 0x1c800, scoped, tag = 'scratch operand']
  %s0 = inlined_call_operand.vmem [shape: f32[2,16,16,4], index: 0, kind: input, shape index: {}]
  %s1 = inlined_call_operand.vmem [shape: bf16[3,12,8], index: 1, kind: input, shape index: {}]
  %s2 = inlined_call_operand.vmem [shape: bf16[3,24,8], index: 2, kind: input, shape index: {}]
  %s3 = inlined_call_operand.vmem [shape: bf16[4,8], index: 3, kind: input, shape index: {}]
  %s4 = inlined_call_operand.vmem [shape: f32[2,16,16,8], index: 4, kind: output, shape index: {}]
  %s5 = sld [smem:[#allocation0]]
  $region49: #{tpu_custom_call.1} parent=0
    _
  %s7 = ssub.s32 1, %s5
  %s8 = scalar_select 0, %s7, %s5
  loop: start=0, step=1, limit=4
  $region2: #{tpu_custom_call.1} parent=0 // loop_pre_header
    _
  $region3: #{tpu_custom_call.1} parent=0 // loop_header
    %s10 = sphi 0, %s14
    %p11 = scmp.ge.s32.totalorder %s10, 4
    %s20 = sphi 0, %s22
    %s23 = sphi 0, %s20
    %s24 = sphi 0, %s23
    %s40 = sphi 0, %s24
    %s44 = sphi 0, %s44
    %s46 = sphi 0, %s44
    %s47 = sphi 0, %s46
    %s61 = sphi 0, %s47
    %s65 = sphi 0, %s65
    %s67 = sphi 0, %s65
    %s68 = sphi 0, %s67
    %s82 = sphi 0, %s68
    %s86 = sphi 0, %s86
    %s88 = sphi 0, %s86
    %s89 = sphi 0, %s88
    %s103 = sphi 0, %s89
    %s109 = sphi 0, %s111
    %s112 = sphi 0, %s109
    %s113 = sphi 0, %s112
    %s129 = sphi 0, %s113
  $region4: #{tpu_custom_call.1} parent=0 // loop_header_branch
    %13 = sbr.rel (%p11) target = $region8
  $region5: #{tpu_custom_call.1} parent=0 // loop_body
    %s15 = ssub.s32 %s10, 1
    %s16 = ssub.s32 %s10, 2
    %s17 = sadd.s32 %s10, 1
    %s18 = ssub.s32 %s10, %s17
    %p19 = scmp.eq.s32.totalorder %s18, 0
    %s21 = sadd.s32 %s20, 1
    %s22 = scalar_select %p19, %s20, %s21
    %p25 = pneg %p19
    %p26 = scmp.eq.s32.totalorder %s10, 1
    %p27 = por %p25, %p26
    %p28 = scmp.ne.s32.totalorder %s20, %s23
    %p29 = scmp.eq.s32.totalorder %s10, 0
    %p30 = por %p28, %p29
    %p31 = scmp.ne.s32.totalorder %s20, %s23
    %p32 = scmp.eq.s32.totalorder %s15, 1
    %p33 = por %p31, %p32
    %p34 = scmp.ne.s32.totalorder %s23, %s24
    %p35 = scmp.eq.s32.totalorder %s15, 0
    %p36 = por %p34, %p35
    %p37 = scmp.ne.s32.totalorder %s23, %s24
    %p38 = scmp.eq.s32.totalorder %s16, 1
    %p39 = por %p37, %p38
    %p41 = scmp.ne.s32.totalorder %s24, %s40
    %p42 = scmp.eq.s32.totalorder %s16, 0
    %p43 = por %p41, %p42
    %s45 = sadd.s32 %s44, 1
    %p48 = scmp.eq.s32.totalorder %s10, 1
    %p49 = scmp.ne.s32.totalorder %s44, %s46
    %p50 = scmp.eq.s32.totalorder %s10, 0
    %p51 = por %p49, %p50
    %p52 = scmp.ne.s32.totalorder %s44, %s46
    %p53 = scmp.eq.s32.totalorder %s15, 1
    %p54 = por %p52, %p53
    %p55 = scmp.ne.s32.totalorder %s46, %s47
    %p56 = scmp.eq.s32.totalorder %s15, 0
    %p57 = por %p55, %p56
    %p58 = scmp.ne.s32.totalorder %s46, %s47
    %p59 = scmp.eq.s32.totalorder %s16, 1
    %p60 = por %p58, %p59
    %p62 = scmp.ne.s32.totalorder %s47, %s61
    %p63 = scmp.eq.s32.totalorder %s16, 0
    %p64 = por %p62, %p63
    %s66 = sadd.s32 %s65, 1
    %p69 = scmp.eq.s32.totalorder %s10, 1
    %p70 = scmp.ne.s32.totalorder %s65, %s67
    %p71 = scmp.eq.s32.totalorder %s10, 0
    %p72 = por %p70, %p71
    %p73 = scmp.ne.s32.totalorder %s65, %s67
    %p74 = scmp.eq.s32.totalorder %s15, 1
    %p75 = por %p73, %p74
    %p76 = scmp.ne.s32.totalorder %s67, %s68
    %p77 = scmp.eq.s32.totalorder %s15, 0
    %p78 = por %p76, %p77
    %p79 = scmp.ne.s32.totalorder %s67, %s68
    %p80 = scmp.eq.s32.totalorder %s16, 1
    %p81 = por %p79, %p80
    %p83 = scmp.ne.s32.totalorder %s68, %s82
    %p84 = scmp.eq.s32.totalorder %s16, 0
    %p85 = por %p83, %p84
    %s87 = sadd.s32 %s86, 1
    %p90 = scmp.eq.s32.totalorder %s10, 1
    %p91 = scmp.ne.s32.totalorder %s86, %s88
    %p92 = scmp.eq.s32.totalorder %s10, 0
    %p93 = por %p91, %p92
    %p94 = scmp.ne.s32.totalorder %s86, %s88
    %p95 = scmp.eq.s32.totalorder %s15, 1
    %p96 = por %p94, %p95
    %p97 = scmp.ne.s32.totalorder %s88, %s89
    %p98 = scmp.eq.s32.totalorder %s15, 0
    %p99 = por %p97, %p98
    %p100 = scmp.ne.s32.totalorder %s88, %s89
    %p101 = scmp.eq.s32.totalorder %s16, 1
    %p102 = por %p100, %p101
    %p104 = scmp.ne.s32.totalorder %s89, %s103
    %p105 = scmp.eq.s32.totalorder %s16, 0
    %p106 = por %p104, %p105
    %s107 = ssub.s32 %s10, %s17
    %p108 = scmp.eq.s32.totalorder %s107, 0
    %s110 = sadd.s32 %s109, 1
    %s111 = scalar_select %p108, %s109, %s110
    %p114 = pneg %p108
    %p115 = scmp.eq.s32.totalorder %s10, 1
    %p116 = por %p114, %p115
    %p117 = scmp.ne.s32.totalorder %s109, %s112
    %p118 = scmp.eq.s32.totalorder %s10, 0
    %p119 = por %p117, %p118
    %p120 = scmp.ne.s32.totalorder %s109, %s112
    %p121 = scmp.eq.s32.totalorder %s15, 1
    %p122 = por %p120, %p121
    %p123 = scmp.ne.s32.totalorder %s112, %s113
    %p124 = scmp.eq.s32.totalorder %s15, 0
    %p125 = por %p123, %p124
    %p126 = scmp.ne.s32.totalorder %s112, %s113
    %p127 = scmp.eq.s32.totalorder %s16, 1
    %p128 = por %p126, %p127
    %p130 = scmp.ne.s32.totalorder %s113, %s129
    %p131 = scmp.eq.s32.totalorder %s16, 0
    %p132 = por %p130, %p131
    %p133 = scmp.le.s32.totalorder 1, %s10
    %p134 = scmp.lt.s32.totalorder %s10, 3
    %p135 = pnand %p133, %p134
    %p136 = pneg %p135
    // Predicated region
    $region9: #{tpu_custom_call.1} parent=5 // pred_check
      _
    $region10: #{tpu_custom_call.1} parent=5 // pred_check_branch
      %138 = sbr.rel (%p135) target = $region12
    $region11: #{tpu_custom_call.1} parent=5 // pred_region
      %s139 = ssub.s32 %s10, 1
      // Predicated region
      $region13: #{tpu_custom_call.1} parent=11 // pred_check
        %p140 = pneg %p57
      $region14: #{tpu_custom_call.1} parent=11 // pred_check_branch
        %142 = sbr.rel (%p140) target = $region16
      $region15: #{tpu_custom_call.1} parent=11 // pred_region
        _
      $region16: #{tpu_custom_call.1} parent=11 // pred_fallthru
        _
      // Predicated region
      $region17: #{tpu_custom_call.1} parent=11 // pred_check
        %p143 = pneg %p78
      $region18: #{tpu_custom_call.1} parent=11 // pred_check_branch
        %145 = sbr.rel (%p143) target = $region20
      $region19: #{tpu_custom_call.1} parent=11 // pred_region
        _
      $region20: #{tpu_custom_call.1} parent=11 // pred_fallthru
        _
      // Predicated region
      $region21: #{tpu_custom_call.1} parent=11 // pred_check
        %p146 = pneg %p99
      $region22: #{tpu_custom_call.1} parent=11 // pred_check_branch
        %148 = sbr.rel (%p146) target = $region24
      $region23: #{tpu_custom_call.1} parent=11 // pred_region
        _
      $region24: #{tpu_custom_call.1} parent=11 // pred_fallthru
        _
    $region12: #{tpu_custom_call.1} parent=5 // pred_fallthru
      _
    %p149 = scmp.lt.s32.totalorder %s10, 2
    // Predicated region
    $region25: #{tpu_custom_call.1} parent=5 // pred_check
      %p150 = pneg %p149
    $region26: #{tpu_custom_call.1} parent=5 // pred_check_branch
      %152 = sbr.rel (%p150) target = $region28
    $region27: #{tpu_custom_call.1} parent=5 // pred_region
      // Predicated region
      $region29: #{tpu_custom_call.1} parent=27 // pred_check
        %p153 = pneg %p30
      $region30: #{tpu_custom_call.1} parent=27 // pred_check_branch
        %155 = sbr.rel (%p153) target = $region32
      $region31: #{tpu_custom_call.1} parent=27 // pred_region
        %p156 = scmp.lt.s32.totalorder %s10, 1
        %s157 = scalar_select %p156, %s10, 1
        %s158 = smul.addr %s157, 32
        %s159 = smul.addr %s158, 8
        %s160 = scalar_lea.vmem %s0, %s159
      $region32: #{tpu_custom_call.1} parent=27 // pred_fallthru
        _
    $region28: #{tpu_custom_call.1} parent=5 // pred_fallthru
      _
    %p161 = scmp.le.s32.totalorder 1, %s10
    %p162 = scmp.lt.s32.totalorder %s10, 3
    %p163 = pnand %p161, %p162
    %p164 = pneg %p163
    // Predicated region
    $region33: #{tpu_custom_call.1} parent=5 // pred_check
      _
    $region34: #{tpu_custom_call.1} parent=5 // pred_check_branch
      %166 = sbr.rel (%p163) target = $region36
    $region35: #{tpu_custom_call.1} parent=5 // pred_region
      %s167 = ssub.s32 %s10, 1
      %p168 = scmp.lt.s32.totalorder %s15, 1
      %s169 = scalar_select %p168, %s15, 1
      %s170 = smul.addr %s169, 32
      %s171 = smul.addr %s170, 8
      %s172 = scalar_lea.vmem %s0, %s171
      %p173 = pneg %p36
      %p174 = pneg %p33
      %p175 = pneg %p57
      %p176 = pneg %p54
      %p177 = pneg %p78
      %p178 = pneg %p75
      %p179 = pneg %p99
      %p180 = pneg %p96
      %p181 = pneg %p125
      %p182 = pneg %p122
      %p183 = scmp.lt.s32.totalorder %s15, 1
      %s184 = scalar_select %p183, %s15, 1
      %s185 = smul.addr %s184, 32
      %s186 = smul.addr %s185, 8
      %s187 = scalar_lea.vmem %s4, %s186
      %p188 = scmp.lt.s32.totalorder %s15, 1
      %s189 = scalar_select %p188, %s15, 1
      %s190 = smul.addr %s189, 32
      %s191 = smul.addr %s190, 8
      %s192 = scalar_lea.vmem %s0, %s191
      %p193 = scmp.lt.s32.totalorder %s15, 1
      %s194 = scalar_select %p193, %s15, 1
      %s195 = smul.addr %s194, 32
      %s196 = smul.addr %s195, 8
      %s197 = scalar_lea.vmem %s4, %s196
      %v199 = vld [vmem:[%s192] sm:$0xff]
      %v200 = vld [vmem:[%s192 + $0x8] sm:$0xff]
      %v201 = vld [vmem:[%s192 + $0x10] sm:$0xff]
      %v202 = vld [vmem:[%s192 + $0x18] sm:$0xff]
      %v203 = vld [vmem:[%s192 + $0x20] sm:$0xff]
      %v204 = vld [vmem:[%s192 + $0x28] sm:$0xff]
      %v205 = vld [vmem:[%s192 + $0x30] sm:$0xff]
      %v206 = vld [vmem:[%s192 + $0x38] sm:$0xff]
      %v207 = vld [vmem:[%s192 + $0x40] sm:$0xff]
      %v208 = vld [vmem:[%s192 + $0x48] sm:$0xff]
      %v209 = vld [vmem:[%s192 + $0x50] sm:$0xff]
      %v210 = vld [vmem:[%s192 + $0x58] sm:$0xff]
      %v211 = vld [vmem:[%s192 + $0x60] sm:$0xff]
      %v212 = vld [vmem:[%s192 + $0x68] sm:$0xff]
      %v213 = vld [vmem:[%s192 + $0x70] sm:$0xff]
      %v214 = vld [vmem:[%s192 + $0x78] sm:$0xff]
      %v215 = vld [vmem:[%s192 + $0x80] sm:$0xff]
      %v216 = vld [vmem:[%s192 + $0x88] sm:$0xff]
      %v217 = vld [vmem:[%s192 + $0x90] sm:$0xff]
      %v218 = vld [vmem:[%s192 + $0x98] sm:$0xff]
      %v219 = vld [vmem:[%s192 + $0xa0] sm:$0xff]
      %v220 = vld [vmem:[%s192 + $0xa8] sm:$0xff]
      %v221 = vld [vmem:[%s192 + $0xb0] sm:$0xff]
      %v222 = vld [vmem:[%s192 + $0xb8] sm:$0xff]
      %v223 = vld [vmem:[%s192 + $0xc0] sm:$0xff]
      %v224 = vld [vmem:[%s192 + $0xc8] sm:$0xff]
      %v225 = vld [vmem:[%s192 + $0xd0] sm:$0xff]
      %v226 = vld [vmem:[%s192 + $0xd8] sm:$0xff]
      %v227 = vld [vmem:[%s192 + $0xe0] sm:$0xff]
      %v228 = vld [vmem:[%s192 + $0xe8] sm:$0xff]
      %v229 = vld [vmem:[%s192 + $0xf0] sm:$0xff]
      %v230 = vld [vmem:[%s192 + $0xf8] sm:$0xff]
      %v231 = vadd.f32 %v199, 0.1
      %v232 = vadd.f32 %v200, 0.1
      %v233 = vadd.f32 %v201, 0.1
      %v234 = vadd.f32 %v202, 0.1
      %v235 = vadd.f32 %v203, 0.1
      %v236 = vadd.f32 %v204, 0.1
      %v237 = vadd.f32 %v205, 0.1
      %v238 = vadd.f32 %v206, 0.1
      %v239 = vadd.f32 %v207, 0.1
      %v240 = vadd.f32 %v208, 0.1
      %v241 = vadd.f32 %v209, 0.1
      %v242 = vadd.f32 %v210, 0.1
      %v243 = vadd.f32 %v211, 0.1
      %v244 = vadd.f32 %v212, 0.1
      %v245 = vadd.f32 %v213, 0.1
      %v246 = vadd.f32 %v214, 0.1
      %v247 = vadd.f32 %v215, 0.1
      %v248 = vadd.f32 %v216, 0.1
      %v249 = vadd.f32 %v217, 0.1
      %v250 = vadd.f32 %v218, 0.1
      %v251 = vadd.f32 %v219, 0.1
      %v252 = vadd.f32 %v220, 0.1
      %v253 = vadd.f32 %v221, 0.1
      %v254 = vadd.f32 %v222, 0.1
      %v255 = vadd.f32 %v223, 0.1
      %v256 = vadd.f32 %v224, 0.1
      %v257 = vadd.f32 %v225, 0.1
      %v258 = vadd.f32 %v226, 0.1
      %v259 = vadd.f32 %v227, 0.1
      %v260 = vadd.f32 %v228, 0.1
      %v261 = vadd.f32 %v229, 0.1
      %v262 = vadd.f32 %v230, 0.1
      %v263 = vmax.f32 %v231, 0.0
      %v264 = vmax.f32 %v232, 0.0
      %v265 = vmax.f32 %v233, 0.0
      %v266 = vmax.f32 %v234, 0.0
      %v267 = vmax.f32 %v235, 0.0
      %v268 = vmax.f32 %v236, 0.0
      %v269 = vmax.f32 %v237, 0.0
      %v270 = vmax.f32 %v238, 0.0
      %v271 = vmax.f32 %v239, 0.0
      %v272 = vmax.f32 %v240, 0.0
      %v273 = vmax.f32 %v241, 0.0
      %v274 = vmax.f32 %v242, 0.0
      %v275 = vmax.f32 %v243, 0.0
      %v276 = vmax.f32 %v244, 0.0
      %v277 = vmax.f32 %v245, 0.0
      %v278 = vmax.f32 %v246, 0.0
      %v279 = vmax.f32 %v247, 0.0
      %v280 = vmax.f32 %v248, 0.0
      %v281 = vmax.f32 %v249, 0.0
      %v282 = vmax.f32 %v250, 0.0
      %v283 = vmax.f32 %v251, 0.0
      %v284 = vmax.f32 %v252, 0.0
      %v285 = vmax.f32 %v253, 0.0
      %v286 = vmax.f32 %v254, 0.0
      %v287 = vmax.f32 %v255, 0.0
      %v288 = vmax.f32 %v256, 0.0
      %v289 = vmax.f32 %v257, 0.0
      %v290 = vmax.f32 %v258, 0.0
      %v291 = vmax.f32 %v259, 0.0
      %v292 = vmax.f32 %v260, 0.0
      %v293 = vmax.f32 %v261, 0.0
      %v294 = vmax.f32 %v262, 0.0
      %v295 = vpack.c.bf16 %v264, %v263
      %v296 = vpack.c.bf16 %v266, %v265
      %v297 = vpack.c.bf16 %v268, %v267
      %v298 = vpack.c.bf16 %v270, %v269
      %v299 = vpack.c.bf16 %v272, %v271
      %v300 = vpack.c.bf16 %v274, %v273
      %v301 = vpack.c.bf16 %v276, %v275
      %v302 = vpack.c.bf16 %v278, %v277
      %v303 = vpack.c.bf16 %v280, %v279
      %v304 = vpack.c.bf16 %v282, %v281
      %v305 = vpack.c.bf16 %v284, %v283
      %v306 = vpack.c.bf16 %v286, %v285
      %v307 = vpack.c.bf16 %v288, %v287
      %v308 = vpack.c.bf16 %v290, %v289
      %v309 = vpack.c.bf16 %v292, %v291
      %v310 = vpack.c.bf16 %v294, %v293
      %vm311 = vcmask 27648
      %312 = vst.msk [vmem:[#allocation2] sm:$0xf] %vm311, 0
      %313 = vst.msk [vmem:[#allocation2 + $0x4] sm:$0xf] %vm311, 0
      %314 = vst.msk [vmem:[#allocation2 + $0x8] sm:$0xf] %vm311, 0
      %s315 = scalar_lea.vmem [#allocation2], 204
      %316 = vst.msk [vmem:[%s315] sm:$0xf] %vm311, 0
      %317 = vst.msk [vmem:[%s315 + $0x4] sm:$0xf] %vm311, 0
      %318 = vst.msk [vmem:[%s315 + $0x8] sm:$0xf] %vm311, 0
      %319 = vst.msk [vmem:[%s315 + $0xc] sm:$0xf] %vm311, 0
      %320 = vst.msk [vmem:[%s315 + $0x10] sm:$0xf] %vm311, 0
      %321 = vst.msk [vmem:[%s315 + $0x14] sm:$0xf] %vm311, 0
      %s322 = scalar_lea.vmem [#allocation2], 12
      %vm323 = vcmask 24576
      %vm324 = vsmask.f32 256
      %vm325 = vmand %vm323, %vm324
      %v326 = vld [vmem:[%s322] sm:$0x1]
      %v327 = vsel %vm325, 0, %v326
      %328 = vst [vmem:[%s322] sm:$0x1] %v327
      %v329 = vld [vmem:[%s322 + $0xc] sm:$0x1]
      %v330 = vsel %vm325, 0, %v329
      %331 = vst [vmem:[%s322 + $0xc] sm:$0x1] %v330
      %v332 = vld [vmem:[%s322 + $0x18] sm:$0x1]
      %v333 = vsel %vm325, 0, %v332
      %334 = vst [vmem:[%s322 + $0x18] sm:$0x1] %v333
      %v335 = vld [vmem:[%s322 + $0x24] sm:$0x1]
      %v336 = vsel %vm325, 0, %v335
      %337 = vst [vmem:[%s322 + $0x24] sm:$0x1] %v336
      %v338 = vld [vmem:[%s322 + $0x30] sm:$0x1]
      %v339 = vsel %vm325, 0, %v338
      %340 = vst [vmem:[%s322 + $0x30] sm:$0x1] %v339
      %v341 = vld [vmem:[%s322 + $0x3c] sm:$0x1]
      %v342 = vsel %vm325, 0, %v341
      %343 = vst [vmem:[%s322 + $0x3c] sm:$0x1] %v342
      %v344 = vld [vmem:[%s322 + $0x48] sm:$0x1]
      %v345 = vsel %vm325, 0, %v344
      %346 = vst [vmem:[%s322 + $0x48] sm:$0x1] %v345
      %v347 = vld [vmem:[%s322 + $0x54] sm:$0x1]
      %v348 = vsel %vm325, 0, %v347
      %349 = vst [vmem:[%s322 + $0x54] sm:$0x1] %v348
      %v350 = vld [vmem:[%s322 + $0x60] sm:$0x1]
      %v351 = vsel %vm325, 0, %v350
      %352 = vst [vmem:[%s322 + $0x60] sm:$0x1] %v351
      %v353 = vld [vmem:[%s322 + $0x6c] sm:$0x1]
      %v354 = vsel %vm325, 0, %v353
      %355 = vst [vmem:[%s322 + $0x6c] sm:$0x1] %v354
      %v356 = vld [vmem:[%s322 + $0x78] sm:$0x1]
      %v357 = vsel %vm325, 0, %v356
      %358 = vst [vmem:[%s322 + $0x78] sm:$0x1] %v357
      %v359 = vld [vmem:[%s322 + $0x84] sm:$0x1]
      %v360 = vsel %vm325, 0, %v359
      %361 = vst [vmem:[%s322 + $0x84] sm:$0x1] %v360
      %v362 = vld [vmem:[%s322 + $0x90] sm:$0x1]
      %v363 = vsel %vm325, 0, %v362
      %364 = vst [vmem:[%s322 + $0x90] sm:$0x1] %v363
      %v365 = vld [vmem:[%s322 + $0x9c] sm:$0x1]
      %v366 = vsel %vm325, 0, %v365
      %367 = vst [vmem:[%s322 + $0x9c] sm:$0x1] %v366
      %v368 = vld [vmem:[%s322 + $0xa8] sm:$0x1]
      %v369 = vsel %vm325, 0, %v368
      %370 = vst [vmem:[%s322 + $0xa8] sm:$0x1] %v369
      %v371 = vld [vmem:[%s322 + $0xb4] sm:$0x1]
      %v372 = vsel %vm325, 0, %v371
      %373 = vst [vmem:[%s322 + $0xb4] sm:$0x1] %v372
      %vm374 = vcmask 27648
      %vm375 = vsmask.f32 7938
      %vm376 = vmand %vm374, %vm375
      %v377 = vld [vmem:[%s322 + $0x8] sm:$0xf]
      %v378 = vsel %vm376, 0, %v377
      %379 = vst [vmem:[%s322 + $0x8] sm:$0xf] %v378
      %v380 = vld [vmem:[%s322 + $0x14] sm:$0xf]
      %v381 = vsel %vm376, 0, %v380
      %382 = vst [vmem:[%s322 + $0x14] sm:$0xf] %v381
      %v383 = vld [vmem:[%s322 + $0x20] sm:$0xf]
      %v384 = vsel %vm376, 0, %v383
      %385 = vst [vmem:[%s322 + $0x20] sm:$0xf] %v384
      %v386 = vld [vmem:[%s322 + $0x2c] sm:$0xf]
      %v387 = vsel %vm376, 0, %v386
      %388 = vst [vmem:[%s322 + $0x2c] sm:$0xf] %v387
      %v389 = vld [vmem:[%s322 + $0x38] sm:$0xf]
      %v390 = vsel %vm376, 0, %v389
      %391 = vst [vmem:[%s322 + $0x38] sm:$0xf] %v390
      %v392 = vld [vmem:[%s322 + $0x44] sm:$0xf]
      %v393 = vsel %vm376, 0, %v392
      %394 = vst [vmem:[%s322 + $0x44] sm:$0xf] %v393
      %v395 = vld [vmem:[%s322 + $0x50] sm:$0xf]
      %v396 = vsel %vm376, 0, %v395
      %397 = vst [vmem:[%s322 + $0x50] sm:$0xf] %v396
      %v398 = vld [vmem:[%s322 + $0x5c] sm:$0xf]
      %v399 = vsel %vm376, 0, %v398
      %400 = vst [vmem:[%s322 + $0x5c] sm:$0xf] %v399
      %v401 = vld [vmem:[%s322 + $0x68] sm:$0xf]
      %v402 = vsel %vm376, 0, %v401
      %403 = vst [vmem:[%s322 + $0x68] sm:$0xf] %v402
      %v404 = vld [vmem:[%s322 + $0x74] sm:$0xf]
      %v405 = vsel %vm376, 0, %v404
      %406 = vst [vmem:[%s322 + $0x74] sm:$0xf] %v405
      %v407 = vld [vmem:[%s322 + $0x80] sm:$0xf]
      %v408 = vsel %vm376, 0, %v407
      %409 = vst [vmem:[%s322 + $0x80] sm:$0xf] %v408
      %v410 = vld [vmem:[%s322 + $0x8c] sm:$0xf]
      %v411 = vsel %vm376, 0, %v410
      %412 = vst [vmem:[%s322 + $0x8c] sm:$0xf] %v411
      %v413 = vld [vmem:[%s322 + $0x98] sm:$0xf]
      %v414 = vsel %vm376, 0, %v413
      %415 = vst [vmem:[%s322 + $0x98] sm:$0xf] %v414
      %v416 = vld [vmem:[%s322 + $0xa4] sm:$0xf]
      %v417 = vsel %vm376, 0, %v416
      %418 = vst [vmem:[%s322 + $0xa4] sm:$0xf] %v417
      %v419 = vld [vmem:[%s322 + $0xb0] sm:$0xf]
      %v420 = vsel %vm376, 0, %v419
      %421 = vst [vmem:[%s322 + $0xb0] sm:$0xf] %v420
      %v422 = vld [vmem:[%s322 + $0xbc] sm:$0xf]
      %v423 = vsel %vm376, 0, %v422
      %424 = vst [vmem:[%s322 + $0xbc] sm:$0xf] %v423
      %v441 = vunpack.c.l.b16 %v295
      %v442 = vunpack.c.h.b16 %v295
      %v443 = vunpack.c.l.b16 %v296
      %v444 = vunpack.c.h.b16 %v296
      %v445 = vunpack.c.l.b16 %v297
      %v446 = vunpack.c.h.b16 %v297
      %v447 = vunpack.c.l.b16 %v298
      %v448 = vunpack.c.h.b16 %v298
      %v449 = vunpack.c.l.b16 %v299
      %v450 = vunpack.c.h.b16 %v299
      %v451 = vunpack.c.l.b16 %v300
      %v452 = vunpack.c.h.b16 %v300
      %v453 = vunpack.c.l.b16 %v301
      %v454 = vunpack.c.h.b16 %v301
      %v455 = vunpack.c.l.b16 %v302
      %v456 = vunpack.c.h.b16 %v302
      %v457 = vunpack.c.l.b16 %v303
      %v458 = vunpack.c.h.b16 %v303
      %v459 = vunpack.c.l.b16 %v304
      %v460 = vunpack.c.h.b16 %v304
      %v461 = vunpack.c.l.b16 %v305
      %v462 = vunpack.c.h.b16 %v305
      %v463 = vunpack.c.l.b16 %v306
      %v464 = vunpack.c.h.b16 %v306
      %v465 = vunpack.c.l.b16 %v307
      %v466 = vunpack.c.h.b16 %v307
      %v467 = vunpack.c.l.b16 %v308
      %v468 = vunpack.c.h.b16 %v308
      %v469 = vunpack.c.l.b16 %v309
      %v470 = vunpack.c.h.b16 %v309
      %v471 = vunpack.c.l.b16 %v310
      %v472 = vunpack.c.h.b16 %v310
      %v473 = vpack.c.b16 %v441, %v441
      %v474 = vpack.c.b16 %v442, %v442
      %v475 = vpack.c.b16 %v443, %v443
      %v476 = vpack.c.b16 %v444, %v444
      %v477 = vpack.c.b16 %v445, %v445
      %v478 = vpack.c.b16 %v446, %v446
      %v479 = vpack.c.b16 %v447, %v447
      %v480 = vpack.c.b16 %v448, %v448
      %v481 = vpack.c.b16 %v449, %v449
      %v482 = vpack.c.b16 %v450, %v450
      %v483 = vpack.c.b16 %v451, %v451
      %v484 = vpack.c.b16 %v452, %v452
      %v485 = vpack.c.b16 %v453, %v453
      %v486 = vpack.c.b16 %v454, %v454
      %v487 = vpack.c.b16 %v455, %v455
      %v488 = vpack.c.b16 %v456, %v456
      %v489 = vpack.c.b16 %v457, %v457
      %v490 = vpack.c.b16 %v458, %v458
      %v491 = vpack.c.b16 %v459, %v459
      %v492 = vpack.c.b16 %v460, %v460
      %v493 = vpack.c.b16 %v461, %v461
      %v494 = vpack.c.b16 %v462, %v462
      %v495 = vpack.c.b16 %v463, %v463
      %v496 = vpack.c.b16 %v464, %v464
      %v497 = vpack.c.b16 %v465, %v465
      %v498 = vpack.c.b16 %v466, %v466
      %v499 = vpack.c.b16 %v467, %v467
      %v500 = vpack.c.b16 %v468, %v468
      %v501 = vpack.c.b16 %v469, %v469
      %v502 = vpack.c.b16 %v470, %v470
      %v503 = vpack.c.b16 %v471, %v471
      %v504 = vpack.c.b16 %v472, %v472
      %vm505 = vsmask.f32 4368
      %vm506 = vmor %vm324, %vm505
      %v508 = vshrl.u32 %v473, 16
      %v510 = vrot.slane %v508, 7
      %v511 = vshll.u32 %v473, 16
      %v513 = vor.u32 %v510, %v511
      %v514 = vrot.slane %v510, 4
      %v516 = vshrl.u32 %v474, 16
      %v518 = vrot.slane %v516, 7
      %v519 = vshll.u32 %v474, 16
      %v521 = vor.u32 %v518, %v519
      %v522 = vsel %vm506, %v514, %v521
      %v523 = vrot.slane %v518, 4
      %v525 = vshrl.u32 %v475, 16
      %v527 = vrot.slane %v525, 7
      %v528 = vshll.u32 %v475, 16
      %v530 = vor.u32 %v527, %v528
      %v531 = vrot.slane %v527, 4
      %v533 = vshrl.u32 %v476, 16
      %v535 = vrot.slane %v533, 7
      %v536 = vshll.u32 %v476, 16
      %v538 = vor.u32 %v535, %v536
      %v539 = vsel %vm506, %v531, %v538
      %v540 = vrot.slane %v535, 4
      %v542 = vshrl.u32 %v477, 16
      %v544 = vrot.slane %v542, 7
      %v545 = vshll.u32 %v477, 16
      %v547 = vor.u32 %v544, %v545
      %v548 = vrot.slane %v544, 4
      %v550 = vshrl.u32 %v478, 16
      %v552 = vrot.slane %v550, 7
      %v553 = vshll.u32 %v478, 16
      %v555 = vor.u32 %v552, %v553
      %v556 = vsel %vm506, %v548, %v555
      %v557 = vrot.slane %v552, 4
      %v559 = vshrl.u32 %v479, 16
      %v561 = vrot.slane %v559, 7
      %v562 = vshll.u32 %v479, 16
      %v564 = vor.u32 %v561, %v562
      %v565 = vrot.slane %v561, 4
      %v567 = vshrl.u32 %v480, 16
      %v569 = vrot.slane %v567, 7
      %v570 = vshll.u32 %v480, 16
      %v572 = vor.u32 %v569, %v570
      %v573 = vsel %vm506, %v565, %v572
      %v574 = vrot.slane %v569, 4
      %v576 = vshrl.u32 %v481, 16
      %v578 = vrot.slane %v576, 7
      %v579 = vshll.u32 %v481, 16
      %v581 = vor.u32 %v578, %v579
      %v582 = vrot.slane %v578, 4
      %v584 = vshrl.u32 %v482, 16
      %v586 = vrot.slane %v584, 7
      %v587 = vshll.u32 %v482, 16
      %v589 = vor.u32 %v586, %v587
      %v590 = vsel %vm506, %v582, %v589
      %v591 = vrot.slane %v586, 4
      %v593 = vshrl.u32 %v483, 16
      %v595 = vrot.slane %v593, 7
      %v596 = vshll.u32 %v483, 16
      %v598 = vor.u32 %v595, %v596
      %v599 = vrot.slane %v595, 4
      %v601 = vshrl.u32 %v484, 16
      %v603 = vrot.slane %v601, 7
      %v604 = vshll.u32 %v484, 16
      %v606 = vor.u32 %v603, %v604
      %v607 = vsel %vm506, %v599, %v606
      %v608 = vrot.slane %v603, 4
      %v610 = vshrl.u32 %v485, 16
      %v612 = vrot.slane %v610, 7
      %v613 = vshll.u32 %v485, 16
      %v615 = vor.u32 %v612, %v613
      %v616 = vrot.slane %v612, 4
      %v618 = vshrl.u32 %v486, 16
      %v620 = vrot.slane %v618, 7
      %v621 = vshll.u32 %v486, 16
      %v623 = vor.u32 %v620, %v621
      %v624 = vsel %vm506, %v616, %v623
      %v625 = vrot.slane %v620, 4
      %v627 = vshrl.u32 %v487, 16
      %v629 = vrot.slane %v627, 7
      %v630 = vshll.u32 %v487, 16
      %v632 = vor.u32 %v629, %v630
      %v633 = vrot.slane %v629, 4
      %v635 = vshrl.u32 %v488, 16
      %v637 = vrot.slane %v635, 7
      %v638 = vshll.u32 %v488, 16
      %v640 = vor.u32 %v637, %v638
      %v641 = vsel %vm506, %v633, %v640
      %v642 = vrot.slane %v637, 4
      %v644 = vshrl.u32 %v489, 16
      %v646 = vrot.slane %v644, 7
      %v647 = vshll.u32 %v489, 16
      %v649 = vor.u32 %v646, %v647
      %v650 = vrot.slane %v646, 4
      %v652 = vshrl.u32 %v490, 16
      %v654 = vrot.slane %v652, 7
      %v655 = vshll.u32 %v490, 16
      %v657 = vor.u32 %v654, %v655
      %v658 = vsel %vm506, %v650, %v657
      %v659 = vrot.slane %v654, 4
      %v661 = vshrl.u32 %v491, 16
      %v663 = vrot.slane %v661, 7
      %v664 = vshll.u32 %v491, 16
      %v666 = vor.u32 %v663, %v664
      %v667 = vrot.slane %v663, 4
      %v669 = vshrl.u32 %v492, 16
      %v671 = vrot.slane %v669, 7
      %v672 = vshll.u32 %v492, 16
      %v674 = vor.u32 %v671, %v672
      %v675 = vsel %vm506, %v667, %v674
      %v676 = vrot.slane %v671, 4
      %v678 = vshrl.u32 %v493, 16
      %v680 = vrot.slane %v678, 7
      %v681 = vshll.u32 %v493, 16
      %v683 = vor.u32 %v680, %v681
      %v684 = vrot.slane %v680, 4
      %v686 = vshrl.u32 %v494, 16
      %v688 = vrot.slane %v686, 7
      %v689 = vshll.u32 %v494, 16
      %v691 = vor.u32 %v688, %v689
      %v692 = vsel %vm506, %v684, %v691
      %v693 = vrot.slane %v688, 4
      %v695 = vshrl.u32 %v495, 16
      %v697 = vrot.slane %v695, 7
      %v698 = vshll.u32 %v495, 16
      %v700 = vor.u32 %v697, %v698
      %v701 = vrot.slane %v697, 4
      %v703 = vshrl.u32 %v496, 16
      %v705 = vrot.slane %v703, 7
      %v706 = vshll.u32 %v496, 16
      %v708 = vor.u32 %v705, %v706
      %v709 = vsel %vm506, %v701, %v708
      %v710 = vrot.slane %v705, 4
      %v712 = vshrl.u32 %v497, 16
      %v714 = vrot.slane %v712, 7
      %v715 = vshll.u32 %v497, 16
      %v717 = vor.u32 %v714, %v715
      %v718 = vrot.slane %v714, 4
      %v720 = vshrl.u32 %v498, 16
      %v722 = vrot.slane %v720, 7
      %v723 = vshll.u32 %v498, 16
      %v725 = vor.u32 %v722, %v723
      %v726 = vsel %vm506, %v718, %v725
      %v727 = vrot.slane %v722, 4
      %v729 = vshrl.u32 %v499, 16
      %v731 = vrot.slane %v729, 7
      %v732 = vshll.u32 %v499, 16
      %v734 = vor.u32 %v731, %v732
      %v735 = vrot.slane %v731, 4
      %v737 = vshrl.u32 %v500, 16
      %v739 = vrot.slane %v737, 7
      %v740 = vshll.u32 %v500, 16
      %v742 = vor.u32 %v739, %v740
      %v743 = vsel %vm506, %v735, %v742
      %v744 = vrot.slane %v739, 4
      %v746 = vshrl.u32 %v501, 16
      %v748 = vrot.slane %v746, 7
      %v749 = vshll.u32 %v501, 16
      %v751 = vor.u32 %v748, %v749
      %v752 = vrot.slane %v748, 4
      %v754 = vshrl.u32 %v502, 16
      %v756 = vrot.slane %v754, 7
      %v757 = vshll.u32 %v502, 16
      %v759 = vor.u32 %v756, %v757
      %v760 = vsel %vm506, %v752, %v759
      %v761 = vrot.slane %v756, 4
      %v763 = vshrl.u32 %v503, 16
      %v765 = vrot.slane %v763, 7
      %v766 = vshll.u32 %v503, 16
      %v768 = vor.u32 %v765, %v766
      %v769 = vrot.slane %v765, 4
      %v771 = vshrl.u32 %v504, 16
      %v773 = vrot.slane %v771, 7
      %v774 = vshll.u32 %v504, 16
      %v776 = vor.u32 %v773, %v774
      %v777 = vsel %vm506, %v769, %v776
      %v778 = vrot.slane %v773, 4
      %v827 = vld [vmem:[%s322] sm:$0xf]
      %v828 = vsel %vm376, %v513, %v827
      %829 = vst [vmem:[%s322] sm:$0xf] %v828
      %830 = vst.msk [vmem:[%s322 + $0x4] sm:$0xf] %vm311, %v522
      %v831 = vld [vmem:[%s322 + $0x8] sm:$0x1]
      %v832 = vsel %vm325, %v523, %v831
      %833 = vst [vmem:[%s322 + $0x8] sm:$0x1] %v832
      %v834 = vld [vmem:[%s322 + $0xc] sm:$0xf]
      %v835 = vsel %vm376, %v530, %v834
      %836 = vst [vmem:[%s322 + $0xc] sm:$0xf] %v835
      %837 = vst.msk [vmem:[%s322 + $0x10] sm:$0xf] %vm311, %v539
      %v838 = vld [vmem:[%s322 + $0x14] sm:$0x1]
      %v839 = vsel %vm325, %v540, %v838
      %840 = vst [vmem:[%s322 + $0x14] sm:$0x1] %v839
      %v841 = vld [vmem:[%s322 + $0x18] sm:$0xf]
      %v842 = vsel %vm376, %v547, %v841
      %843 = vst [vmem:[%s322 + $0x18] sm:$0xf] %v842
      %844 = vst.msk [vmem:[%s322 + $0x1c] sm:$0xf] %vm311, %v556
      %v845 = vld [vmem:[%s322 + $0x20] sm:$0x1]
      %v846 = vsel %vm325, %v557, %v845
      %847 = vst [vmem:[%s322 + $0x20] sm:$0x1] %v846
      %v848 = vld [vmem:[%s322 + $0x24] sm:$0xf]
      %v849 = vsel %vm376, %v564, %v848
      %850 = vst [vmem:[%s322 + $0x24] sm:$0xf] %v849
      %851 = vst.msk [vmem:[%s322 + $0x28] sm:$0xf] %vm311, %v573
      %v852 = vld [vmem:[%s322 + $0x2c] sm:$0x1]
      %v853 = vsel %vm325, %v574, %v852
      %854 = vst [vmem:[%s322 + $0x2c] sm:$0x1] %v853
      %v855 = vld [vmem:[%s322 + $0x30] sm:$0xf]
      %v856 = vsel %vm376, %v581, %v855
      %857 = vst [vmem:[%s322 + $0x30] sm:$0xf] %v856
      %858 = vst.msk [vmem:[%s322 + $0x34] sm:$0xf] %vm311, %v590
      %v859 = vld [vmem:[%s322 + $0x38] sm:$0x1]
      %v860 = vsel %vm325, %v591, %v859
      %861 = vst [vmem:[%s322 + $0x38] sm:$0x1] %v860
      %v862 = vld [vmem:[%s322 + $0x3c] sm:$0xf]
      %v863 = vsel %vm376, %v598, %v862
      %864 = vst [vmem:[%s322 + $0x3c] sm:$0xf] %v863
      %865 = vst.msk [vmem:[%s322 + $0x40] sm:$0xf] %vm311, %v607
      %v866 = vld [vmem:[%s322 + $0x44] sm:$0x1]
      %v867 = vsel %vm325, %v608, %v866
      %868 = vst [vmem:[%s322 + $0x44] sm:$0x1] %v867
      %v869 = vld [vmem:[%s322 + $0x48] sm:$0xf]
      %v870 = vsel %vm376, %v615, %v869
      %871 = vst [vmem:[%s322 + $0x48] sm:$0xf] %v870
      %872 = vst.msk [vmem:[%s322 + $0x4c] sm:$0xf] %vm311, %v624
      %v873 = vld [vmem:[%s322 + $0x50] sm:$0x1]
      %v874 = vsel %vm325, %v625, %v873
      %875 = vst [vmem:[%s322 + $0x50] sm:$0x1] %v874
      %v876 = vld [vmem:[%s322 + $0x54] sm:$0xf]
      %v877 = vsel %vm376, %v632, %v876
      %878 = vst [vmem:[%s322 + $0x54] sm:$0xf] %v877
      %879 = vst.msk [vmem:[%s322 + $0x58] sm:$0xf] %vm311, %v641
      %v880 = vld [vmem:[%s322 + $0x5c] sm:$0x1]
      %v881 = vsel %vm325, %v642, %v880
      %882 = vst [vmem:[%s322 + $0x5c] sm:$0x1] %v881
      %v883 = vld [vmem:[%s322 + $0x60] sm:$0xf]
      %v884 = vsel %vm376, %v649, %v883
      %885 = vst [vmem:[%s322 + $0x60] sm:$0xf] %v884
      %886 = vst.msk [vmem:[%s322 + $0x64] sm:$0xf] %vm311, %v658
      %v887 = vld [vmem:[%s322 + $0x68] sm:$0x1]
      %v888 = vsel %vm325, %v659, %v887
      %889 = vst [vmem:[%s322 + $0x68] sm:$0x1] %v888
      %v890 = vld [vmem:[%s322 + $0x6c] sm:$0xf]
      %v891 = vsel %vm376, %v666, %v890
      %892 = vst [vmem:[%s322 + $0x6c] sm:$0xf] %v891
      %893 = vst.msk [vmem:[%s322 + $0x70] sm:$0xf] %vm311, %v675
      %v894 = vld [vmem:[%s322 + $0x74] sm:$0x1]
      %v895 = vsel %vm325, %v676, %v894
      %896 = vst [vmem:[%s322 + $0x74] sm:$0x1] %v895
      %v897 = vld [vmem:[%s322 + $0x78] sm:$0xf]
      %v898 = vsel %vm376, %v683, %v897
      %899 = vst [vmem:[%s322 + $0x78] sm:$0xf] %v898
      %900 = vst.msk [vmem:[%s322 + $0x7c] sm:$0xf] %vm311, %v692
      %v901 = vld [vmem:[%s322 + $0x80] sm:$0x1]
      %v902 = vsel %vm325, %v693, %v901
      %903 = vst [vmem:[%s322 + $0x80] sm:$0x1] %v902
      %v904 = vld [vmem:[%s322 + $0x84] sm:$0xf]
      %v905 = vsel %vm376, %v700, %v904
      %906 = vst [vmem:[%s322 + $0x84] sm:$0xf] %v905
      %907 = vst.msk [vmem:[%s322 + $0x88] sm:$0xf] %vm311, %v709
      %v908 = vld [vmem:[%s322 + $0x8c] sm:$0x1]
      %v909 = vsel %vm325, %v710, %v908
      %910 = vst [vmem:[%s322 + $0x8c] sm:$0x1] %v909
      %v911 = vld [vmem:[%s322 + $0x90] sm:$0xf]
      %v912 = vsel %vm376, %v717, %v911
      %913 = vst [vmem:[%s322 + $0x90] sm:$0xf] %v912
      %914 = vst.msk [vmem:[%s322 + $0x94] sm:$0xf] %vm311, %v726
      %v915 = vld [vmem:[%s322 + $0x98] sm:$0x1]
      %v916 = vsel %vm325, %v727, %v915
      %917 = vst [vmem:[%s322 + $0x98] sm:$0x1] %v916
      %v918 = vld [vmem:[%s322 + $0x9c] sm:$0xf]
      %v919 = vsel %vm376, %v734, %v918
      %920 = vst [vmem:[%s322 + $0x9c] sm:$0xf] %v919
      %921 = vst.msk [vmem:[%s322 + $0xa0] sm:$0xf] %vm311, %v743
      %v922 = vld [vmem:[%s322 + $0xa4] sm:$0x1]
      %v923 = vsel %vm325, %v744, %v922
      %924 = vst [vmem:[%s322 + $0xa4] sm:$0x1] %v923
      %v925 = vld [vmem:[%s322 + $0xa8] sm:$0xf]
      %v926 = vsel %vm376, %v751, %v925
      %927 = vst [vmem:[%s322 + $0xa8] sm:$0xf] %v926
      %928 = vst.msk [vmem:[%s322 + $0xac] sm:$0xf] %vm311, %v760
      %v929 = vld [vmem:[%s322 + $0xb0] sm:$0x1]
      %v930 = vsel %vm325, %v761, %v929
      %931 = vst [vmem:[%s322 + $0xb0] sm:$0x1] %v930
      %v932 = vld [vmem:[%s322 + $0xb4] sm:$0xf]
      %v933 = vsel %vm376, %v768, %v932
      %934 = vst [vmem:[%s322 + $0xb4] sm:$0xf] %v933
      %935 = vst.msk [vmem:[%s322 + $0xb8] sm:$0xf] %vm311, %v777
      %v936 = vld [vmem:[%s322 + $0xbc] sm:$0x1]
      %v937 = vsel %vm325, %v778, %v936
      %938 = vst [vmem:[%s322 + $0xbc] sm:$0x1] %v937
      %v939 = vld [vmem:[#allocation2] sm:$0xf]
      %v940 = vld [vmem:[#allocation2 + $0x4] sm:$0xf]
      %v941 = vld [vmem:[#allocation2 + $0x8] sm:$0xf]
      %v942 = vld [vmem:[#allocation2 + $0xc] sm:$0xf]
      %v943 = vld [vmem:[#allocation2 + $0x10] sm:$0xf]
      %v944 = vld [vmem:[#allocation2 + $0x14] sm:$0xf]
      %v945 = vld [vmem:[#allocation2 + $0x18] sm:$0xf]
      %v946 = vld [vmem:[#allocation2 + $0x1c] sm:$0xf]
      %v947 = vld [vmem:[#allocation2 + $0x20] sm:$0xf]
      %v948 = vld [vmem:[#allocation2 + $0x24] sm:$0xf]
      %v949 = vld [vmem:[#allocation2 + $0x28] sm:$0xf]
      %v950 = vld [vmem:[#allocation2 + $0x2c] sm:$0xf]
      %v951 = vld [vmem:[#allocation2 + $0x30] sm:$0xf]
      %v952 = vld [vmem:[#allocation2 + $0x34] sm:$0xf]
      %v953 = vld [vmem:[#allocation2 + $0x38] sm:$0xf]
      %v954 = vld [vmem:[#allocation2 + $0x3c] sm:$0xf]
      %v955 = vld [vmem:[#allocation2 + $0x40] sm:$0xf]
      %v956 = vld [vmem:[#allocation2 + $0x44] sm:$0xf]
      %v957 = vld [vmem:[#allocation2 + $0x48] sm:$0xf]
      %v958 = vld [vmem:[#allocation2 + $0x4c] sm:$0xf]
      %v959 = vld [vmem:[#allocation2 + $0x50] sm:$0xf]
      %v960 = vld [vmem:[#allocation2 + $0x54] sm:$0xf]
      %v961 = vld [vmem:[#allocation2 + $0x58] sm:$0xf]
      %v962 = vld [vmem:[#allocation2 + $0x5c] sm:$0xf]
      %v963 = vld [vmem:[#allocation2 + $0x60] sm:$0xf]
      %v964 = vld [vmem:[#allocation2 + $0x64] sm:$0xf]
      %v965 = vld [vmem:[#allocation2 + $0x68] sm:$0xf]
      %v966 = vld [vmem:[#allocation2 + $0x6c] sm:$0xf]
      %v967 = vld [vmem:[#allocation2 + $0x70] sm:$0xf]
      %v968 = vld [vmem:[#allocation2 + $0x74] sm:$0xf]
      %v969 = vld [vmem:[#allocation2 + $0x78] sm:$0xf]
      %v970 = vld [vmem:[#allocation2 + $0x7c] sm:$0xf]
      %v971 = vld [vmem:[#allocation2 + $0x80] sm:$0xf]
      %v972 = vld [vmem:[#allocation2 + $0x84] sm:$0xf]
      %v973 = vld [vmem:[#allocation2 + $0x88] sm:$0xf]
      %v974 = vld [vmem:[#allocation2 + $0x8c] sm:$0xf]
      %v975 = vld [vmem:[#allocation2 + $0x90] sm:$0xf]
      %v976 = vld [vmem:[#allocation2 + $0x94] sm:$0xf]
      %v977 = vld [vmem:[#allocation2 + $0x98] sm:$0xf]
      %v978 = vld [vmem:[#allocation2 + $0x9c] sm:$0xf]
      %v979 = vld [vmem:[#allocation2 + $0xa0] sm:$0xf]
      %v980 = vld [vmem:[#allocation2 + $0xa4] sm:$0xf]
      %v981 = vld [vmem:[#allocation2 + $0xa8] sm:$0xf]
      %v982 = vld [vmem:[#allocation2 + $0xac] sm:$0xf]
      %v983 = vld [vmem:[#allocation2 + $0xb0] sm:$0xf]
      %v984 = vld [vmem:[#allocation2 + $0xb4] sm:$0xf]
      %v985 = vld [vmem:[#allocation2 + $0xb8] sm:$0xf]
      %v986 = vld [vmem:[#allocation2 + $0xbc] sm:$0xf]
      %v987 = vld [vmem:[#allocation2 + $0xc0] sm:$0xf]
      %v988 = vld [vmem:[#allocation2 + $0xc4] sm:$0xf]
      %v989 = vld [vmem:[#allocation2 + $0xc8] sm:$0xf]
      %v990 = vld [vmem:[#allocation2 + $0xcc] sm:$0xf]
      %v991 = vld [vmem:[#allocation2 + $0xd0] sm:$0xf]
      %v992 = vld [vmem:[#allocation2 + $0xd4] sm:$0xf]
      %v993 = vld [vmem:[#allocation2 + $0xd8] sm:$0xf]
      %v1048 = vunpack.c.l.b16 %v939
      %v1049 = vunpack.c.l.b16 %v940
      %v1050 = vunpack.c.l.b16 %v941
      %v1051 = vunpack.c.l.b16 %v942
      %v1052 = vunpack.c.l.b16 %v943
      %v1053 = vunpack.c.l.b16 %v944
      %v1054 = vunpack.c.l.b16 %v945
      %v1055 = vunpack.c.l.b16 %v946
      %v1056 = vunpack.c.l.b16 %v947
      %v1057 = vunpack.c.l.b16 %v948
      %v1058 = vunpack.c.l.b16 %v949
      %v1059 = vunpack.c.l.b16 %v950
      %v1060 = vunpack.c.l.b16 %v951
      %v1061 = vunpack.c.l.b16 %v952
      %v1062 = vunpack.c.l.b16 %v953
      %v1063 = vunpack.c.l.b16 %v954
      %v1064 = vunpack.c.l.b16 %v955
      %v1065 = vunpack.c.l.b16 %v956
      %v1066 = vunpack.c.l.b16 %v957
      %v1067 = vunpack.c.l.b16 %v958
      %v1068 = vunpack.c.l.b16 %v959
      %v1069 = vunpack.c.l.b16 %v960
      %v1070 = vunpack.c.l.b16 %v961
      %v1071 = vunpack.c.l.b16 %v962
      %v1072 = vunpack.c.l.b16 %v963
      %v1073 = vunpack.c.l.b16 %v964
      %v1074 = vunpack.c.l.b16 %v965
      %v1075 = vunpack.c.l.b16 %v966
      %v1076 = vunpack.c.l.b16 %v967
      %v1077 = vunpack.c.l.b16 %v968
      %v1078 = vunpack.c.l.b16 %v969
      %v1079 = vunpack.c.l.b16 %v970
      %v1080 = vunpack.c.l.b16 %v971
      %v1081 = vunpack.c.l.b16 %v972
      %v1082 = vunpack.c.l.b16 %v973
      %v1083 = vunpack.c.l.b16 %v974
      %v1084 = vunpack.c.l.b16 %v975
      %v1085 = vunpack.c.l.b16 %v976
      %v1086 = vunpack.c.l.b16 %v977
      %v1087 = vunpack.c.l.b16 %v978
      %v1088 = vunpack.c.l.b16 %v979
      %v1089 = vunpack.c.l.b16 %v980
      %v1090 = vunpack.c.l.b16 %v981
      %v1091 = vunpack.c.l.b16 %v982
      %v1092 = vunpack.c.l.b16 %v983
      %v1093 = vunpack.c.l.b16 %v984
      %v1094 = vunpack.c.l.b16 %v985
      %v1095 = vunpack.c.l.b16 %v986
      %v1096 = vunpack.c.l.b16 %v987
      %v1097 = vunpack.c.l.b16 %v988
      %v1098 = vunpack.c.l.b16 %v989
      %v1099 = vunpack.c.l.b16 %v990
      %v1100 = vunpack.c.l.b16 %v991
      %v1101 = vunpack.c.l.b16 %v992
      %v1102 = vpack.c.b16 %v1049, %v1048
      %v1103 = vpack.c.b16 %v1051, %v1050
      %v1104 = vpack.c.b16 %v1053, %v1052
      %v1105 = vpack.c.b16 %v1055, %v1054
      %v1106 = vpack.c.b16 %v1057, %v1056
      %v1107 = vpack.c.b16 %v1059, %v1058
      %v1108 = vpack.c.b16 %v1061, %v1060
      %v1109 = vpack.c.b16 %v1063, %v1062
      %v1110 = vpack.c.b16 %v1065, %v1064
      %v1111 = vpack.c.b16 %v1067, %v1066
      %v1112 = vpack.c.b16 %v1069, %v1068
      %v1113 = vpack.c.b16 %v1071, %v1070
      %v1114 = vpack.c.b16 %v1073, %v1072
      %v1115 = vpack.c.b16 %v1075, %v1074
      %v1116 = vpack.c.b16 %v1077, %v1076
      %v1117 = vpack.c.b16 %v1079, %v1078
      %v1118 = vpack.c.b16 %v1081, %v1080
      %v1119 = vpack.c.b16 %v1083, %v1082
      %v1120 = vpack.c.b16 %v1085, %v1084
      %v1121 = vpack.c.b16 %v1087, %v1086
      %v1122 = vpack.c.b16 %v1089, %v1088
      %v1123 = vpack.c.b16 %v1091, %v1090
      %v1124 = vpack.c.b16 %v1093, %v1092
      %v1125 = vpack.c.b16 %v1095, %v1094
      %v1126 = vpack.c.b16 %v1097, %v1096
      %v1127 = vpack.c.b16 %v1099, %v1098
      %v1128 = vpack.c.b16 %v1101, %v1100
      %v1130 = vunpack.c.l.b16 %v993
      %v1131 = vpack.c.b16 %v1130, %v1130
      %vm1132 = vsmask.f32 7424
      %v1134 = vshrl.u32 %v1102, 16
      %v1136 = vshll.u32 %v1102, 16
      %v1138 = vrot.slane %v1136, 1
      %v1139 = vor.u32 %v1134, %v1138
      %v1141 = vshll.u32 %v1103, 16
      %v1143 = vrot.slane %v1141, 1
      %v1144 = vsel %vm1132, %v1139, %v1143
      %v1145 = vshrl.u32 %v1103, 16
      %v1147 = vor.u32 %v1145, %v1143
      %v1149 = vshll.u32 %v1104, 16
      %v1151 = vrot.slane %v1149, 1
      %v1152 = vsel %vm1132, %v1147, %v1151
      %v1153 = vshrl.u32 %v1104, 16
      %v1155 = vor.u32 %v1153, %v1151
      %v1157 = vshll.u32 %v1105, 16
      %v1159 = vrot.slane %v1157, 1
      %v1160 = vsel %vm1132, %v1155, %v1159
      %v1161 = vshrl.u32 %v1105, 16
      %v1163 = vor.u32 %v1161, %v1159
      %v1165 = vshll.u32 %v1106, 16
      %v1167 = vrot.slane %v1165, 1
      %v1168 = vsel %vm1132, %v1163, %v1167
      %v1169 = vshrl.u32 %v1106, 16
      %v1171 = vor.u32 %v1169, %v1167
      %v1173 = vshll.u32 %v1107, 16
      %v1175 = vrot.slane %v1173, 1
      %v1176 = vsel %vm1132, %v1171, %v1175
      %v1177 = vshrl.u32 %v1107, 16
      %v1179 = vor.u32 %v1177, %v1175
      %v1181 = vshll.u32 %v1108, 16
      %v1183 = vrot.slane %v1181, 1
      %v1184 = vsel %vm1132, %v1179, %v1183
      %v1185 = vshrl.u32 %v1108, 16
      %v1187 = vor.u32 %v1185, %v1183
      %v1189 = vshll.u32 %v1109, 16
      %v1191 = vrot.slane %v1189, 1
      %v1192 = vsel %vm1132, %v1187, %v1191
      %v1193 = vshrl.u32 %v1109, 16
      %v1195 = vor.u32 %v1193, %v1191
      %v1197 = vshll.u32 %v1110, 16
      %v1199 = vrot.slane %v1197, 1
      %v1200 = vsel %vm1132, %v1195, %v1199
      %v1201 = vshrl.u32 %v1110, 16
      %v1203 = vor.u32 %v1201, %v1199
      %v1205 = vshll.u32 %v1111, 16
      %v1207 = vrot.slane %v1205, 1
      %v1208 = vsel %vm1132, %v1203, %v1207
      %v1209 = vshrl.u32 %v1111, 16
      %v1211 = vor.u32 %v1209, %v1207
      %v1213 = vshll.u32 %v1112, 16
      %v1215 = vrot.slane %v1213, 1
      %v1216 = vsel %vm1132, %v1211, %v1215
      %v1217 = vshrl.u32 %v1112, 16
      %v1219 = vor.u32 %v1217, %v1215
      %v1221 = vshll.u32 %v1113, 16
      %v1223 = vrot.slane %v1221, 1
      %v1224 = vsel %vm1132, %v1219, %v1223
      %v1225 = vshrl.u32 %v1113, 16
      %v1227 = vor.u32 %v1225, %v1223
      %v1229 = vshll.u32 %v1114, 16
      %v1231 = vrot.slane %v1229, 1
      %v1232 = vsel %vm1132, %v1227, %v1231
      %v1233 = vshrl.u32 %v1114, 16
      %v1235 = vor.u32 %v1233, %v1231
      %v1237 = vshll.u32 %v1115, 16
      %v1239 = vrot.slane %v1237, 1
      %v1240 = vsel %vm1132, %v1235, %v1239
      %v1241 = vshrl.u32 %v1115, 16
      %v1243 = vor.u32 %v1241, %v1239
      %v1245 = vshll.u32 %v1116, 16
      %v1247 = vrot.slane %v1245, 1
      %v1248 = vsel %vm1132, %v1243, %v1247
      %v1249 = vshrl.u32 %v1116, 16
      %v1251 = vor.u32 %v1249, %v1247
      %v1253 = vshll.u32 %v1117, 16
      %v1255 = vrot.slane %v1253, 1
      %v1256 = vsel %vm1132, %v1251, %v1255
      %v1257 = vshrl.u32 %v1117, 16
      %v1259 = vor.u32 %v1257, %v1255
      %v1261 = vshll.u32 %v1118, 16
      %v1263 = vrot.slane %v1261, 1
      %v1264 = vsel %vm1132, %v1259, %v1263
      %v1265 = vshrl.u32 %v1118, 16
      %v1267 = vor.u32 %v1265, %v1263
      %v1269 = vshll.u32 %v1119, 16
      %v1271 = vrot.slane %v1269, 1
      %v1272 = vsel %vm1132, %v1267, %v1271
      %v1273 = vshrl.u32 %v1119, 16
      %v1275 = vor.u32 %v1273, %v1271
      %v1277 = vshll.u32 %v1120, 16
      %v1279 = vrot.slane %v1277, 1
      %v1280 = vsel %vm1132, %v1275, %v1279
      %v1281 = vshrl.u32 %v1120, 16
      %v1283 = vor.u32 %v1281, %v1279
      %v1285 = vshll.u32 %v1121, 16
      %v1287 = vrot.slane %v1285, 1
      %v1288 = vsel %vm1132, %v1283, %v1287
      %v1289 = vshrl.u32 %v1121, 16
      %v1291 = vor.u32 %v1289, %v1287
      %v1293 = vshll.u32 %v1122, 16
      %v1295 = vrot.slane %v1293, 1
      %v1296 = vsel %vm1132, %v1291, %v1295
      %v1297 = vshrl.u32 %v1122, 16
      %v1299 = vor.u32 %v1297, %v1295
      %v1301 = vshll.u32 %v1123, 16
      %v1303 = vrot.slane %v1301, 1
      %v1304 = vsel %vm1132, %v1299, %v1303
      %v1305 = vshrl.u32 %v1123, 16
      %v1307 = vor.u32 %v1305, %v1303
      %v1309 = vshll.u32 %v1124, 16
      %v1311 = vrot.slane %v1309, 1
      %v1312 = vsel %vm1132, %v1307, %v1311
      %v1313 = vshrl.u32 %v1124, 16
      %v1315 = vor.u32 %v1313, %v1311
      %v1317 = vshll.u32 %v1125, 16
      %v1319 = vrot.slane %v1317, 1
      %v1320 = vsel %vm1132, %v1315, %v1319
      %v1321 = vshrl.u32 %v1125, 16
      %v1323 = vor.u32 %v1321, %v1319
      %v1325 = vshll.u32 %v1126, 16
      %v1327 = vrot.slane %v1325, 1
      %v1328 = vsel %vm1132, %v1323, %v1327
      %v1329 = vshrl.u32 %v1126, 16
      %v1331 = vor.u32 %v1329, %v1327
      %v1333 = vshll.u32 %v1127, 16
      %v1335 = vrot.slane %v1333, 1
      %v1336 = vsel %vm1132, %v1331, %v1335
      %v1337 = vshrl.u32 %v1127, 16
      %v1339 = vor.u32 %v1337, %v1335
      %v1341 = vshll.u32 %v1128, 16
      %v1343 = vrot.slane %v1341, 1
      %v1344 = vsel %vm1132, %v1339, %v1343
      %v1345 = vshrl.u32 %v1128, 16
      %v1347 = vor.u32 %v1345, %v1343
      %v1349 = vshll.u32 %v1131, 16
      %v1351 = vrot.slane %v1349, 1
      %v1352 = vsel %vm1132, %v1347, %v1351
      %1353 = vrot.lane.b32.xlu0 %v1144, 4
      %v1354 = vpop.permute.xlu0 %1353
      %1355 = vrot.lane.b32.xlu0 %v1152, 4
      %v1356 = vpop.permute.xlu0 %1355
      %1357 = vrot.lane.b32.xlu0 %v1160, 4
      %v1358 = vpop.permute.xlu0 %1357
      %1359 = vrot.lane.b32.xlu0 %v1168, 4
      %v1360 = vpop.permute.xlu0 %1359
      %1361 = vrot.lane.b32.xlu0 %v1176, 4
      %v1362 = vpop.permute.xlu0 %1361
      %1363 = vrot.lane.b32.xlu0 %v1184, 4
      %v1364 = vpop.permute.xlu0 %1363
      %1365 = vrot.lane.b32.xlu0 %v1192, 4
      %v1366 = vpop.permute.xlu0 %1365
      %1367 = vrot.lane.b32.xlu0 %v1200, 4
      %v1368 = vpop.permute.xlu0 %1367
      %1369 = vrot.lane.b32.xlu0 %v1208, 4
      %v1370 = vpop.permute.xlu0 %1369
      %1371 = vrot.lane.b32.xlu0 %v1216, 4
      %v1372 = vpop.permute.xlu0 %1371
      %1373 = vrot.lane.b32.xlu0 %v1224, 4
      %v1374 = vpop.permute.xlu0 %1373
      %1375 = vrot.lane.b32.xlu0 %v1232, 4
      %v1376 = vpop.permute.xlu0 %1375
      %1377 = vrot.lane.b32.xlu0 %v1240, 4
      %v1378 = vpop.permute.xlu0 %1377
      %1379 = vrot.lane.b32.xlu0 %v1248, 4
      %v1380 = vpop.permute.xlu0 %1379
      %1381 = vrot.lane.b32.xlu0 %v1256, 4
      %v1382 = vpop.permute.xlu0 %1381
      %1383 = vrot.lane.b32.xlu0 %v1264, 4
      %v1384 = vpop.permute.xlu0 %1383
      %1385 = vrot.lane.b32.xlu0 %v1272, 4
      %v1386 = vpop.permute.xlu0 %1385
      %1387 = vrot.lane.b32.xlu0 %v1280, 4
      %v1388 = vpop.permute.xlu0 %1387
      %1389 = vrot.lane.b32.xlu0 %v1288, 4
      %v1390 = vpop.permute.xlu0 %1389
      %1391 = vrot.lane.b32.xlu0 %v1296, 4
      %v1392 = vpop.permute.xlu0 %1391
      %1393 = vrot.lane.b32.xlu0 %v1304, 4
      %v1394 = vpop.permute.xlu0 %1393
      %1395 = vrot.lane.b32.xlu0 %v1312, 4
      %v1396 = vpop.permute.xlu0 %1395
      %1397 = vrot.lane.b32.xlu0 %v1320, 4
      %v1398 = vpop.permute.xlu0 %1397
      %1399 = vrot.lane.b32.xlu0 %v1328, 4
      %v1400 = vpop.permute.xlu0 %1399
      %1401 = vrot.lane.b32.xlu0 %v1336, 4
      %v1402 = vpop.permute.xlu0 %1401
      %1403 = vrot.lane.b32.xlu0 %v1344, 4
      %v1404 = vpop.permute.xlu0 %1403
      %1405 = vrot.lane.b32.xlu0 %v1352, 4
      %v1406 = vpop.permute.xlu0 %1405
      %vm1407 = vcmask 1046528
      %v1408 = vrot.slane %v1102, 1
      %v1409 = vrot.slane %v1103, 1
      %v1410 = vsel %vm1407, %v1408, %v1409
      %v1411 = vrot.slane %v1104, 1
      %v1412 = vsel %vm1407, %v1409, %v1411
      %v1413 = vrot.slane %v1105, 1
      %v1414 = vsel %vm1407, %v1411, %v1413
      %v1415 = vrot.slane %v1106, 1
      %v1416 = vsel %vm1407, %v1413, %v1415
      %v1417 = vrot.slane %v1107, 1
      %v1418 = vsel %vm1407, %v1415, %v1417
      %v1419 = vrot.slane %v1108, 1
      %v1420 = vsel %vm1407, %v1417, %v1419
      %v1421 = vrot.slane %v1109, 1
      %v1422 = vsel %vm1407, %v1419, %v1421
      %v1423 = vrot.slane %v1110, 1
      %v1424 = vsel %vm1407, %v1421, %v1423
      %v1425 = vrot.slane %v1111, 1
      %v1426 = vsel %vm1407, %v1423, %v1425
      %v1427 = vrot.slane %v1112, 1
      %v1428 = vsel %vm1407, %v1425, %v1427
      %v1429 = vrot.slane %v1113, 1
      %v1430 = vsel %vm1407, %v1427, %v1429
      %v1431 = vrot.slane %v1114, 1
      %v1432 = vsel %vm1407, %v1429, %v1431
      %v1433 = vrot.slane %v1115, 1
      %v1434 = vsel %vm1407, %v1431, %v1433
      %v1435 = vrot.slane %v1116, 1
      %v1436 = vsel %vm1407, %v1433, %v1435
      %v1437 = vrot.slane %v1117, 1
      %v1438 = vsel %vm1407, %v1435, %v1437
      %v1439 = vrot.slane %v1118, 1
      %v1440 = vsel %vm1407, %v1437, %v1439
      %v1441 = vrot.slane %v1119, 1
      %v1442 = vsel %vm1407, %v1439, %v1441
      %v1443 = vrot.slane %v1120, 1
      %v1444 = vsel %vm1407, %v1441, %v1443
      %v1445 = vrot.slane %v1121, 1
      %v1446 = vsel %vm1407, %v1443, %v1445
      %v1447 = vrot.slane %v1122, 1
      %v1448 = vsel %vm1407, %v1445, %v1447
      %v1449 = vrot.slane %v1123, 1
      %v1450 = vsel %vm1407, %v1447, %v1449
      %v1451 = vrot.slane %v1124, 1
      %v1452 = vsel %vm1407, %v1449, %v1451
      %v1453 = vrot.slane %v1125, 1
      %v1454 = vsel %vm1407, %v1451, %v1453
      %v1455 = vrot.slane %v1126, 1
      %v1456 = vsel %vm1407, %v1453, %v1455
      %v1457 = vrot.slane %v1127, 1
      %v1458 = vsel %vm1407, %v1455, %v1457
      %v1459 = vrot.slane %v1128, 1
      %v1460 = vsel %vm1407, %v1457, %v1459
      %v1461 = vrot.slane %v1131, 1
      %v1462 = vsel %vm1407, %v1459, %v1461
      %1463 = vrot.lane.b32.xlu0 %v1410, 8
      %v1464 = vpop.permute.xlu0 %1463
      %1465 = vrot.lane.b32.xlu0 %v1412, 8
      %v1466 = vpop.permute.xlu0 %1465
      %1467 = vrot.lane.b32.xlu0 %v1414, 8
      %v1468 = vpop.permute.xlu0 %1467
      %1469 = vrot.lane.b32.xlu0 %v1416, 8
      %v1470 = vpop.permute.xlu0 %1469
      %1471 = vrot.lane.b32.xlu0 %v1418, 8
      %v1472 = vpop.permute.xlu0 %1471
      %1473 = vrot.lane.b32.xlu0 %v1420, 8
      %v1474 = vpop.permute.xlu0 %1473
      %1475 = vrot.lane.b32.xlu0 %v1422, 8
      %v1476 = vpop.permute.xlu0 %1475
      %1477 = vrot.lane.b32.xlu0 %v1424, 8
      %v1478 = vpop.permute.xlu0 %1477
      %1479 = vrot.lane.b32.xlu0 %v1426, 8
      %v1480 = vpop.permute.xlu0 %1479
      %1481 = vrot.lane.b32.xlu0 %v1428, 8
      %v1482 = vpop.permute.xlu0 %1481
      %1483 = vrot.lane.b32.xlu0 %v1430, 8
      %v1484 = vpop.permute.xlu0 %1483
      %1485 = vrot.lane.b32.xlu0 %v1432, 8
      %v1486 = vpop.permute.xlu0 %1485
      %1487 = vrot.lane.b32.xlu0 %v1434, 8
      %v1488 = vpop.permute.xlu0 %1487
      %1489 = vrot.lane.b32.xlu0 %v1436, 8
      %v1490 = vpop.permute.xlu0 %1489
      %1491 = vrot.lane.b32.xlu0 %v1438, 8
      %v1492 = vpop.permute.xlu0 %1491
      %1493 = vrot.lane.b32.xlu0 %v1440, 8
      %v1494 = vpop.permute.xlu0 %1493
      %1495 = vrot.lane.b32.xlu0 %v1442, 8
      %v1496 = vpop.permute.xlu0 %1495
      %1497 = vrot.lane.b32.xlu0 %v1444, 8
      %v1498 = vpop.permute.xlu0 %1497
      %1499 = vrot.lane.b32.xlu0 %v1446, 8
      %v1500 = vpop.permute.xlu0 %1499
      %1501 = vrot.lane.b32.xlu0 %v1448, 8
      %v1502 = vpop.permute.xlu0 %1501
      %1503 = vrot.lane.b32.xlu0 %v1450, 8
      %v1504 = vpop.permute.xlu0 %1503
      %1505 = vrot.lane.b32.xlu0 %v1452, 8
      %v1506 = vpop.permute.xlu0 %1505
      %1507 = vrot.lane.b32.xlu0 %v1454, 8
      %v1508 = vpop.permute.xlu0 %1507
      %1509 = vrot.lane.b32.xlu0 %v1456, 8
      %v1510 = vpop.permute.xlu0 %1509
      %1511 = vrot.lane.b32.xlu0 %v1458, 8
      %v1512 = vpop.permute.xlu0 %1511
      %1513 = vrot.lane.b32.xlu0 %v1460, 8
      %v1514 = vpop.permute.xlu0 %1513
      %1515 = vrot.lane.b32.xlu0 %v1462, 8
      %v1516 = vpop.permute.xlu0 %1515
      %vm1517 = vcmask 31744
      %v1519 = vsel %vm1517, %v1102, %v1354
      %v1521 = vsel %vm1517, %v1103, %v1356
      %v1523 = vsel %vm1517, %v1104, %v1358
      %v1525 = vsel %vm1517, %v1105, %v1360
      %v1527 = vsel %vm1517, %v1106, %v1362
      %v1529 = vsel %vm1517, %v1107, %v1364
      %v1531 = vsel %vm1517, %v1108, %v1366
      %v1533 = vsel %vm1517, %v1109, %v1368
      %v1535 = vsel %vm1517, %v1110, %v1370
      %v1537 = vsel %vm1517, %v1111, %v1372
      %v1539 = vsel %vm1517, %v1112, %v1374
      %v1541 = vsel %vm1517, %v1113, %v1376
      %v1543 = vsel %vm1517, %v1114, %v1378
      %v1545 = vsel %vm1517, %v1115, %v1380
      %v1547 = vsel %vm1517, %v1116, %v1382
      %v1549 = vsel %vm1517, %v1117, %v1384
      %v1551 = vsel %vm1517, %v1118, %v1386
      %v1553 = vsel %vm1517, %v1119, %v1388
      %v1555 = vsel %vm1517, %v1120, %v1390
      %v1557 = vsel %vm1517, %v1121, %v1392
      %v1559 = vsel %vm1517, %v1122, %v1394
      %v1561 = vsel %vm1517, %v1123, %v1396
      %v1563 = vsel %vm1517, %v1124, %v1398
      %v1565 = vsel %vm1517, %v1125, %v1400
      %v1567 = vsel %vm1517, %v1126, %v1402
      %v1569 = vsel %vm1517, %v1127, %v1404
      %v1571 = vsel %vm1517, %v1128, %v1406
      %vm1572 = vcmask 64512
      %v1574 = vsel %vm1572, %v1519, %v1464
      %v1576 = vsel %vm1572, %v1521, %v1466
      %v1578 = vsel %vm1572, %v1523, %v1468
      %v1580 = vsel %vm1572, %v1525, %v1470
      %v1582 = vsel %vm1572, %v1527, %v1472
      %v1584 = vsel %vm1572, %v1529, %v1474
      %v1586 = vsel %vm1572, %v1531, %v1476
      %v1588 = vsel %vm1572, %v1533, %v1478
      %v1590 = vsel %vm1572, %v1535, %v1480
      %v1592 = vsel %vm1572, %v1537, %v1482
      %v1594 = vsel %vm1572, %v1539, %v1484
      %v1596 = vsel %vm1572, %v1541, %v1486
      %v1598 = vsel %vm1572, %v1543, %v1488
      %v1600 = vsel %vm1572, %v1545, %v1490
      %v1602 = vsel %vm1572, %v1547, %v1492
      %v1604 = vsel %vm1572, %v1549, %v1494
      %v1606 = vsel %vm1572, %v1551, %v1496
      %v1608 = vsel %vm1572, %v1553, %v1498
      %v1610 = vsel %vm1572, %v1555, %v1500
      %v1612 = vsel %vm1572, %v1557, %v1502
      %v1614 = vsel %vm1572, %v1559, %v1504
      %v1616 = vsel %vm1572, %v1561, %v1506
      %v1618 = vsel %vm1572, %v1563, %v1508
      %v1620 = vsel %vm1572, %v1565, %v1510
      %v1622 = vsel %vm1572, %v1567, %v1512
      %v1624 = vsel %vm1572, %v1569, %v1514
      %v1626 = vsel %vm1572, %v1571, %v1516
      %v1627 = vld [vmem:[%s1] sm:$0xf]
      %v1628 = vld [vmem:[%s1 + $0x4] sm:$0x3]
      %s1629 = scalar_lea.vmem %s1, 8
      %v1630 = vld [vmem:[%s1629] sm:$0xf]
      %v1631 = vld [vmem:[%s1629 + $0x4] sm:$0x3]
      %vm1657 = vcmask 1043456
      %v1658 = vrot.slane %v1576, 4
      %v1659 = vrot.slane %v1578, 4
      %v1660 = vsel %vm1657, %v1658, %v1659
      %v1661 = vrot.slane %v1580, 4
      %v1662 = vsel %vm1657, %v1659, %v1661
      %v1663 = vrot.slane %v1582, 4
      %v1664 = vsel %vm1657, %v1661, %v1663
      %v1665 = vrot.slane %v1584, 4
      %v1666 = vsel %vm1657, %v1663, %v1665
      %v1667 = vrot.slane %v1586, 4
      %v1668 = vsel %vm1657, %v1665, %v1667
      %v1669 = vrot.slane %v1588, 4
      %v1670 = vsel %vm1657, %v1667, %v1669
      %v1671 = vrot.slane %v1590, 4
      %v1672 = vsel %vm1657, %v1669, %v1671
      %v1673 = vrot.slane %v1592, 4
      %v1674 = vsel %vm1657, %v1671, %v1673
      %v1675 = vrot.slane %v1594, 4
      %v1676 = vsel %vm1657, %v1673, %v1675
      %v1677 = vrot.slane %v1596, 4
      %v1678 = vsel %vm1657, %v1675, %v1677
      %v1679 = vrot.slane %v1598, 4
      %v1680 = vsel %vm1657, %v1677, %v1679
      %v1681 = vrot.slane %v1600, 4
      %v1682 = vsel %vm1657, %v1679, %v1681
      %v1683 = vrot.slane %v1602, 4
      %v1684 = vsel %vm1657, %v1681, %v1683
      %v1685 = vrot.slane %v1604, 4
      %v1686 = vsel %vm1657, %v1683, %v1685
      %v1687 = vrot.slane %v1606, 4
      %v1688 = vsel %vm1657, %v1685, %v1687
      %v1689 = vrot.slane %v1608, 4
      %v1690 = vsel %vm1657, %v1687, %v1689
      %v1691 = vrot.slane %v1610, 4
      %v1692 = vsel %vm1657, %v1689, %v1691
      %v1693 = vrot.slane %v1612, 4
      %v1694 = vsel %vm1657, %v1691, %v1693
      %v1695 = vrot.slane %v1614, 4
      %v1696 = vsel %vm1657, %v1693, %v1695
      %v1697 = vrot.slane %v1616, 4
      %v1698 = vsel %vm1657, %v1695, %v1697
      %v1699 = vrot.slane %v1618, 4
      %v1700 = vsel %vm1657, %v1697, %v1699
      %v1701 = vrot.slane %v1620, 4
      %v1702 = vsel %vm1657, %v1699, %v1701
      %v1703 = vrot.slane %v1622, 4
      %v1704 = vsel %vm1657, %v1701, %v1703
      %v1705 = vrot.slane %v1624, 4
      %v1706 = vsel %vm1657, %v1703, %v1705
      %v1709 = vunpack.c.l.b16 %v1630
      %v1710 = vunpack.c.l.b16 %v1631
      %v1711 = vpack.c.b16 %v1710, %v1709
      %vm1712 = vcmask 97280
      %v1714 = vsel %vm1712, %v1660, 0
      %v1717 = vsel %vm1712, %v1662, 0
      %v1720 = vsel %vm1712, %v1664, 0
      %v1723 = vsel %vm1712, %v1666, 0
      %v1726 = vsel %vm1712, %v1668, 0
      %v1729 = vsel %vm1712, %v1670, 0
      %v1732 = vsel %vm1712, %v1672, 0
      %v1735 = vsel %vm1712, %v1674, 0
      %v1738 = vsel %vm1712, %v1676, 0
      %v1741 = vsel %vm1712, %v1678, 0
      %v1744 = vsel %vm1712, %v1680, 0
      %v1747 = vsel %vm1712, %v1682, 0
      %v1750 = vsel %vm1712, %v1684, 0
      %v1753 = vsel %vm1712, %v1686, 0
      %v1756 = vsel %vm1712, %v1688, 0
      %v1759 = vsel %vm1712, %v1690, 0
      %v1762 = vsel %vm1712, %v1692, 0
      %v1765 = vsel %vm1712, %v1694, 0
      %v1768 = vsel %vm1712, %v1696, 0
      %v1771 = vsel %vm1712, %v1698, 0
      %v1774 = vsel %vm1712, %v1700, 0
      %v1777 = vsel %vm1712, %v1702, 0
      %v1780 = vsel %vm1712, %v1704, 0
      %v1783 = vsel %vm1712, %v1706, 0
      %vm1785 = vcmask 1045504
      %v1787 = vsel %vm1785, %v1711, 0
      %1789 = vmatprep.subr.bf16.mxu0 0
      %1790 = vmatpush1.bf16.msra.mxu0 0
      %1791 = vmatprep.subr.bf16.mxu0 0
      %1792 = vmatpush1.bf16.msra.mxu0 0
      %1793 = vmatprep.subr.bf16.mxu0 0
      %1794 = vmatpush1.bf16.msra.mxu0 0
      %1795 = vmatprep.subr.bf16.mxu0 0
      %1796 = vmatpush1.bf16.msra.mxu0 0
      %1797 = vmatprep.subr.bf16.mxu0 0
      %1798 = vmatpush1.bf16.msra.mxu0 0
      %1799 = vmatprep.subr.bf16.mxu0 0
      %1800 = vmatpush1.bf16.msra.mxu0 0
      %1801 = vmatprep.subr.bf16.mxu0 0
      %1802 = vmatpush1.bf16.msra.mxu0 0
      %1803 = vmatprep.subr.bf16.mxu0 0
      %1804 = vmatpush1.bf16.msra.mxu0 %v1787
      %1805 = vmatprep.subr.bf16.mxu0 0
      %1806 = vmatpush2.bf16.msra.mxu0 0
      %1807 = vmatprep.subr.bf16.mxu0 0
      %1808 = vmatpush2.bf16.msra.mxu0 0
      %1809 = vmatprep.subr.bf16.mxu0 0
      %1810 = vmatpush2.bf16.msra.mxu0 0
      %1811 = vmatprep.subr.bf16.mxu0 0
      %1812 = vmatpush2.bf16.msra.mxu0 0
      %1813 = vmatprep.subr.bf16.mxu0 0
      %1814 = vmatpush2.bf16.msra.mxu0 0
      %1815 = vmatprep.subr.bf16.mxu0 0
      %1816 = vmatpush2.bf16.msra.mxu0 0
      %1817 = vmatprep.subr.bf16.mxu0 0
      %1818 = vmatpush2.bf16.msra.mxu0 0
      %1819 = vmatprep.subr.bf16.mxu0 0
      %1820 = vmatpush2.bf16.msra.mxu0 0
      %1821 = vmatprep.mubr.bf16.mxu0 0
      %1822 = vmatmul.mubr.bf16.gmra.mxu0 %v1714
      %v1823 = vpop.f32.mrf.mxu0
      %v1824 = vadd.f32 0.0, %v1823
      %v1825 = vpop.f32.mrf.mxu0
      %v1826 = vpop.f32.mrf.mxu0
      %v1827 = vadd.f32 0.0, %v1826
      %v1828 = vpop.f32.mrf.mxu0
      %1829 = vmatprep.mubr.bf16.mxu0 0
      %1830 = vmatmul.mubr.bf16.gmra.mxu0 %v1717
      %v1831 = vpop.f32.mrf.mxu0
      %v1832 = vadd.f32 0.0, %v1831
      %v1833 = vpop.f32.mrf.mxu0
      %v1834 = vpop.f32.mrf.mxu0
      %v1835 = vadd.f32 0.0, %v1834
      %v1836 = vpop.f32.mrf.mxu0
      %1837 = vmatprep.mubr.bf16.mxu0 0
      %1838 = vmatmul.mubr.bf16.gmra.mxu0 %v1720
      %v1839 = vpop.f32.mrf.mxu0
      %v1840 = vadd.f32 0.0, %v1839
      %v1841 = vpop.f32.mrf.mxu0
      %v1842 = vpop.f32.mrf.mxu0
      %v1843 = vadd.f32 0.0, %v1842
      %v1844 = vpop.f32.mrf.mxu0
      %1845 = vmatprep.mubr.bf16.mxu0 0
      %1846 = vmatmul.mubr.bf16.gmra.mxu0 %v1723
      %v1847 = vpop.f32.mrf.mxu0
      %v1848 = vadd.f32 0.0, %v1847
      %v1849 = vpop.f32.mrf.mxu0
      %v1850 = vpop.f32.mrf.mxu0
      %v1851 = vadd.f32 0.0, %v1850
      %v1852 = vpop.f32.mrf.mxu0
      %1853 = vmatprep.mubr.bf16.mxu0 0
      %1854 = vmatmul.mubr.bf16.gmra.mxu0 %v1726
      %v1855 = vpop.f32.mrf.mxu0
      %v1856 = vadd.f32 0.0, %v1855
      %v1857 = vpop.f32.mrf.mxu0
      %v1858 = vpop.f32.mrf.mxu0
      %v1859 = vadd.f32 0.0, %v1858
      %v1860 = vpop.f32.mrf.mxu0
      %1861 = vmatprep.mubr.bf16.mxu0 0
      %1862 = vmatmul.mubr.bf16.gmra.mxu0 %v1729
      %v1863 = vpop.f32.mrf.mxu0
      %v1864 = vadd.f32 0.0, %v1863
      %v1865 = vpop.f32.mrf.mxu0
      %v1866 = vpop.f32.mrf.mxu0
      %v1867 = vadd.f32 0.0, %v1866
      %v1868 = vpop.f32.mrf.mxu0
      %1869 = vmatprep.mubr.bf16.mxu0 0
      %1870 = vmatmul.mubr.bf16.gmra.mxu0 %v1732
      %v1871 = vpop.f32.mrf.mxu0
      %v1872 = vadd.f32 0.0, %v1871
      %v1873 = vpop.f32.mrf.mxu0
      %v1874 = vpop.f32.mrf.mxu0
      %v1875 = vadd.f32 0.0, %v1874
      %v1876 = vpop.f32.mrf.mxu0
      %1877 = vmatprep.mubr.bf16.mxu0 0
      %1878 = vmatmul.mubr.bf16.gmra.mxu0 %v1735
      %v1879 = vpop.f32.mrf.mxu0
      %v1880 = vadd.f32 0.0, %v1879
      %v1881 = vpop.f32.mrf.mxu0
      %v1882 = vpop.f32.mrf.mxu0
      %v1883 = vadd.f32 0.0, %v1882
      %v1884 = vpop.f32.mrf.mxu0
      %1885 = vmatprep.mubr.bf16.mxu0 0
      %1886 = vmatmul.mubr.bf16.gmra.mxu0 %v1738
      %v1887 = vpop.f32.mrf.mxu0
      %v1888 = vadd.f32 0.0, %v1887
      %v1889 = vpop.f32.mrf.mxu0
      %v1890 = vpop.f32.mrf.mxu0
      %v1891 = vadd.f32 0.0, %v1890
      %v1892 = vpop.f32.mrf.mxu0
      %1893 = vmatprep.mubr.bf16.mxu0 0
      %1894 = vmatmul.mubr.bf16.gmra.mxu0 %v1741
      %v1895 = vpop.f32.mrf.mxu0
      %v1896 = vadd.f32 0.0, %v1895
      %v1897 = vpop.f32.mrf.mxu0
      %v1898 = vpop.f32.mrf.mxu0
      %v1899 = vadd.f32 0.0, %v1898
      %v1900 = vpop.f32.mrf.mxu0
      %1901 = vmatprep.mubr.bf16.mxu0 0
      %1902 = vmatmul.mubr.bf16.gmra.mxu0 %v1744
      %v1903 = vpop.f32.mrf.mxu0
      %v1904 = vadd.f32 0.0, %v1903
      %v1905 = vpop.f32.mrf.mxu0
      %v1906 = vpop.f32.mrf.mxu0
      %v1907 = vadd.f32 0.0, %v1906
      %v1908 = vpop.f32.mrf.mxu0
      %1909 = vmatprep.mubr.bf16.mxu0 0
      %1910 = vmatmul.mubr.bf16.gmra.mxu0 %v1747
      %v1911 = vpop.f32.mrf.mxu0
      %v1912 = vadd.f32 0.0, %v1911
      %v1913 = vpop.f32.mrf.mxu0
      %v1914 = vpop.f32.mrf.mxu0
      %v1915 = vadd.f32 0.0, %v1914
      %v1916 = vpop.f32.mrf.mxu0
      %1917 = vmatprep.mubr.bf16.mxu0 0
      %1918 = vmatmul.mubr.bf16.gmra.mxu0 %v1750
      %v1919 = vpop.f32.mrf.mxu0
      %v1920 = vadd.f32 0.0, %v1919
      %v1921 = vpop.f32.mrf.mxu0
      %v1922 = vpop.f32.mrf.mxu0
      %v1923 = vadd.f32 0.0, %v1922
      %v1924 = vpop.f32.mrf.mxu0
      %1925 = vmatprep.mubr.bf16.mxu0 0
      %1926 = vmatmul.mubr.bf16.gmra.mxu0 %v1753
      %v1927 = vpop.f32.mrf.mxu0
      %v1928 = vadd.f32 0.0, %v1927
      %v1929 = vpop.f32.mrf.mxu0
      %v1930 = vpop.f32.mrf.mxu0
      %v1931 = vadd.f32 0.0, %v1930
      %v1932 = vpop.f32.mrf.mxu0
      %1933 = vmatprep.mubr.bf16.mxu0 0
      %1934 = vmatmul.mubr.bf16.gmra.mxu0 %v1756
      %v1935 = vpop.f32.mrf.mxu0
      %v1936 = vadd.f32 0.0, %v1935
      %v1937 = vpop.f32.mrf.mxu0
      %v1938 = vpop.f32.mrf.mxu0
      %v1939 = vadd.f32 0.0, %v1938
      %v1940 = vpop.f32.mrf.mxu0
      %1941 = vmatprep.mubr.bf16.mxu0 0
      %1942 = vmatmul.mubr.bf16.gmra.mxu0 %v1759
      %v1943 = vpop.f32.mrf.mxu0
      %v1944 = vadd.f32 0.0, %v1943
      %v1945 = vpop.f32.mrf.mxu0
      %v1946 = vpop.f32.mrf.mxu0
      %v1947 = vadd.f32 0.0, %v1946
      %v1948 = vpop.f32.mrf.mxu0
      %1949 = vmatprep.mubr.bf16.mxu0 0
      %1950 = vmatmul.mubr.bf16.gmra.mxu0 %v1762
      %v1951 = vpop.f32.mrf.mxu0
      %v1952 = vadd.f32 0.0, %v1951
      %v1953 = vpop.f32.mrf.mxu0
      %v1954 = vpop.f32.mrf.mxu0
      %v1955 = vadd.f32 0.0, %v1954
      %v1956 = vpop.f32.mrf.mxu0
      %1957 = vmatprep.mubr.bf16.mxu0 0
      %1958 = vmatmul.mubr.bf16.gmra.mxu0 %v1765
      %v1959 = vpop.f32.mrf.mxu0
      %v1960 = vadd.f32 0.0, %v1959
      %v1961 = vpop.f32.mrf.mxu0
      %v1962 = vpop.f32.mrf.mxu0
      %v1963 = vadd.f32 0.0, %v1962
      %v1964 = vpop.f32.mrf.mxu0
      %1965 = vmatprep.mubr.bf16.mxu0 0
      %1966 = vmatmul.mubr.bf16.gmra.mxu0 %v1768
      %v1967 = vpop.f32.mrf.mxu0
      %v1968 = vadd.f32 0.0, %v1967
      %v1969 = vpop.f32.mrf.mxu0
      %v1970 = vpop.f32.mrf.mxu0
      %v1971 = vadd.f32 0.0, %v1970
      %v1972 = vpop.f32.mrf.mxu0
      %1973 = vmatprep.mubr.bf16.mxu0 0
      %1974 = vmatmul.mubr.bf16.gmra.mxu0 %v1771
      %v1975 = vpop.f32.mrf.mxu0
      %v1976 = vadd.f32 0.0, %v1975
      %v1977 = vpop.f32.mrf.mxu0
      %v1978 = vpop.f32.mrf.mxu0
      %v1979 = vadd.f32 0.0, %v1978
      %v1980 = vpop.f32.mrf.mxu0
      %1981 = vmatprep.mubr.bf16.mxu0 0
      %1982 = vmatmul.mubr.bf16.gmra.mxu0 %v1774
      %v1983 = vpop.f32.mrf.mxu0
      %v1984 = vadd.f32 0.0, %v1983
      %v1985 = vpop.f32.mrf.mxu0
      %v1986 = vpop.f32.mrf.mxu0
      %v1987 = vadd.f32 0.0, %v1986
      %v1988 = vpop.f32.mrf.mxu0
      %1989 = vmatprep.mubr.bf16.mxu0 0
      %1990 = vmatmul.mubr.bf16.gmra.mxu0 %v1777
      %v1991 = vpop.f32.mrf.mxu0
      %v1992 = vadd.f32 0.0, %v1991
      %v1993 = vpop.f32.mrf.mxu0
      %v1994 = vpop.f32.mrf.mxu0
      %v1995 = vadd.f32 0.0, %v1994
      %v1996 = vpop.f32.mrf.mxu0
      %1997 = vmatprep.mubr.bf16.mxu0 0
      %1998 = vmatmul.mubr.bf16.gmra.mxu0 %v1780
      %v1999 = vpop.f32.mrf.mxu0
      %v2000 = vadd.f32 0.0, %v1999
      %v2001 = vpop.f32.mrf.mxu0
      %v2002 = vpop.f32.mrf.mxu0
      %v2003 = vadd.f32 0.0, %v2002
      %v2004 = vpop.f32.mrf.mxu0
      %2005 = vmatprep.mubr.bf16.mxu0 0
      %2006 = vmatmul.mubr.bf16.gmra.mxu0 %v1783
      %v2007 = vpop.f32.mrf.mxu0
      %v2008 = vadd.f32 0.0, %v2007
      %v2009 = vpop.f32.mrf.mxu0
      %v2010 = vpop.f32.mrf.mxu0
      %v2011 = vadd.f32 0.0, %v2010
      %v2012 = vpop.f32.mrf.mxu0
      %2013 = vdwg.mxu0
      %v2016 = vunpack.c.l.b16 %v1627
      %v2017 = vunpack.c.l.b16 %v1628
      %v2018 = vpack.c.b16 %v2017, %v2016
      %v2019 = vsel %vm1712, %v1574, 0
      %v2021 = vsel %vm1712, %v1576, 0
      %v2023 = vsel %vm1712, %v1578, 0
      %v2025 = vsel %vm1712, %v1580, 0
      %v2027 = vsel %vm1712, %v1582, 0
      %v2029 = vsel %vm1712, %v1584, 0
      %v2031 = vsel %vm1712, %v1586, 0
      %v2033 = vsel %vm1712, %v1588, 0
      %v2035 = vsel %vm1712, %v1590, 0
      %v2037 = vsel %vm1712, %v1592, 0
      %v2039 = vsel %vm1712, %v1594, 0
      %v2041 = vsel %vm1712, %v1596, 0
      %v2043 = vsel %vm1712, %v1598, 0
      %v2045 = vsel %vm1712, %v1600, 0
      %v2047 = vsel %vm1712, %v1602, 0
      %v2049 = vsel %vm1712, %v1604, 0
      %v2051 = vsel %vm1712, %v1606, 0
      %v2053 = vsel %vm1712, %v1608, 0
      %v2055 = vsel %vm1712, %v1610, 0
      %v2057 = vsel %vm1712, %v1612, 0
      %v2059 = vsel %vm1712, %v1614, 0
      %v2061 = vsel %vm1712, %v1616, 0
      %v2063 = vsel %vm1712, %v1618, 0
      %v2065 = vsel %vm1712, %v1620, 0
      %v2068 = vsel %vm1785, %v2018, 0
      %2070 = vmatprep.subr.bf16.mxu0 0
      %2071 = vmatpush1.bf16.msra.mxu0 0
      %2072 = vmatprep.subr.bf16.mxu0 0
      %2073 = vmatpush1.bf16.msra.mxu0 0
      %2074 = vmatprep.subr.bf16.mxu0 0
      %2075 = vmatpush1.bf16.msra.mxu0 0
      %2076 = vmatprep.subr.bf16.mxu0 0
      %2077 = vmatpush1.bf16.msra.mxu0 0
      %2078 = vmatprep.subr.bf16.mxu0 0
      %2079 = vmatpush1.bf16.msra.mxu0 0
      %2080 = vmatprep.subr.bf16.mxu0 0
      %2081 = vmatpush1.bf16.msra.mxu0 0
      %2082 = vmatprep.subr.bf16.mxu0 0
      %2083 = vmatpush1.bf16.msra.mxu0 0
      %2084 = vmatprep.subr.bf16.mxu0 0
      %2085 = vmatpush1.bf16.msra.mxu0 %v2068
      %2086 = vmatprep.subr.bf16.mxu0 0
      %2087 = vmatpush2.bf16.msra.mxu0 0
      %2088 = vmatprep.subr.bf16.mxu0 0
      %2089 = vmatpush2.bf16.msra.mxu0 0
      %2090 = vmatprep.subr.bf16.mxu0 0
      %2091 = vmatpush2.bf16.msra.mxu0 0
      %2092 = vmatprep.subr.bf16.mxu0 0
      %2093 = vmatpush2.bf16.msra.mxu0 0
      %2094 = vmatprep.subr.bf16.mxu0 0
      %2095 = vmatpush2.bf16.msra.mxu0 0
      %2096 = vmatprep.subr.bf16.mxu0 0
      %2097 = vmatpush2.bf16.msra.mxu0 0
      %2098 = vmatprep.subr.bf16.mxu0 0
      %2099 = vmatpush2.bf16.msra.mxu0 0
      %2100 = vmatprep.subr.bf16.mxu0 0
      %2101 = vmatpush2.bf16.msra.mxu0 0
      %2102 = vmatprep.mubr.bf16.mxu0 0
      %2103 = vmatmul.mubr.bf16.gmra.mxu0 %v2019
      %v2104 = vpop.f32.mrf.mxu0
      %v2105 = vadd.f32 %v1824, %v2104
      %v2106 = vpop.f32.mrf.mxu0
      %v2107 = vpop.f32.mrf.mxu0
      %v2108 = vadd.f32 %v1827, %v2107
      %v2109 = vpop.f32.mrf.mxu0
      %2110 = vmatprep.mubr.bf16.mxu0 0
      %2111 = vmatmul.mubr.bf16.gmra.mxu0 %v2021
      %v2112 = vpop.f32.mrf.mxu0
      %v2113 = vadd.f32 %v1832, %v2112
      %v2114 = vpop.f32.mrf.mxu0
      %v2115 = vpop.f32.mrf.mxu0
      %v2116 = vadd.f32 %v1835, %v2115
      %v2117 = vpop.f32.mrf.mxu0
      %2118 = vmatprep.mubr.bf16.mxu0 0
      %2119 = vmatmul.mubr.bf16.gmra.mxu0 %v2023
      %v2120 = vpop.f32.mrf.mxu0
      %v2121 = vadd.f32 %v1840, %v2120
      %v2122 = vpop.f32.mrf.mxu0
      %v2123 = vpop.f32.mrf.mxu0
      %v2124 = vadd.f32 %v1843, %v2123
      %v2125 = vpop.f32.mrf.mxu0
      %2126 = vmatprep.mubr.bf16.mxu0 0
      %2127 = vmatmul.mubr.bf16.gmra.mxu0 %v2025
      %v2128 = vpop.f32.mrf.mxu0
      %v2129 = vadd.f32 %v1848, %v2128
      %v2130 = vpop.f32.mrf.mxu0
      %v2131 = vpop.f32.mrf.mxu0
      %v2132 = vadd.f32 %v1851, %v2131
      %v2133 = vpop.f32.mrf.mxu0
      %2134 = vmatprep.mubr.bf16.mxu0 0
      %2135 = vmatmul.mubr.bf16.gmra.mxu0 %v2027
      %v2136 = vpop.f32.mrf.mxu0
      %v2137 = vadd.f32 %v1856, %v2136
      %v2138 = vpop.f32.mrf.mxu0
      %v2139 = vpop.f32.mrf.mxu0
      %v2140 = vadd.f32 %v1859, %v2139
      %v2141 = vpop.f32.mrf.mxu0
      %2142 = vmatprep.mubr.bf16.mxu0 0
      %2143 = vmatmul.mubr.bf16.gmra.mxu0 %v2029
      %v2144 = vpop.f32.mrf.mxu0
      %v2145 = vadd.f32 %v1864, %v2144
      %v2146 = vpop.f32.mrf.mxu0
      %v2147 = vpop.f32.mrf.mxu0
      %v2148 = vadd.f32 %v1867, %v2147
      %v2149 = vpop.f32.mrf.mxu0
      %2150 = vmatprep.mubr.bf16.mxu0 0
      %2151 = vmatmul.mubr.bf16.gmra.mxu0 %v2031
      %v2152 = vpop.f32.mrf.mxu0
      %v2153 = vadd.f32 %v1872, %v2152
      %v2154 = vpop.f32.mrf.mxu0
      %v2155 = vpop.f32.mrf.mxu0
      %v2156 = vadd.f32 %v1875, %v2155
      %v2157 = vpop.f32.mrf.mxu0
      %2158 = vmatprep.mubr.bf16.mxu0 0
      %2159 = vmatmul.mubr.bf16.gmra.mxu0 %v2033
      %v2160 = vpop.f32.mrf.mxu0
      %v2161 = vadd.f32 %v1880, %v2160
      %v2162 = vpop.f32.mrf.mxu0
      %v2163 = vpop.f32.mrf.mxu0
      %v2164 = vadd.f32 %v1883, %v2163
      %v2165 = vpop.f32.mrf.mxu0
      %2166 = vmatprep.mubr.bf16.mxu0 0
      %2167 = vmatmul.mubr.bf16.gmra.mxu0 %v2035
      %v2168 = vpop.f32.mrf.mxu0
      %v2169 = vadd.f32 %v1888, %v2168
      %v2170 = vpop.f32.mrf.mxu0
      %v2171 = vpop.f32.mrf.mxu0
      %v2172 = vadd.f32 %v1891, %v2171
      %v2173 = vpop.f32.mrf.mxu0
      %2174 = vmatprep.mubr.bf16.mxu0 0
      %2175 = vmatmul.mubr.bf16.gmra.mxu0 %v2037
      %v2176 = vpop.f32.mrf.mxu0
      %v2177 = vadd.f32 %v1896, %v2176
      %v2178 = vpop.f32.mrf.mxu0
      %v2179 = vpop.f32.mrf.mxu0
      %v2180 = vadd.f32 %v1899, %v2179
      %v2181 = vpop.f32.mrf.mxu0
      %2182 = vmatprep.mubr.bf16.mxu0 0
      %2183 = vmatmul.mubr.bf16.gmra.mxu0 %v2039
      %v2184 = vpop.f32.mrf.mxu0
      %v2185 = vadd.f32 %v1904, %v2184
      %v2186 = vpop.f32.mrf.mxu0
      %v2187 = vpop.f32.mrf.mxu0
      %v2188 = vadd.f32 %v1907, %v2187
      %v2189 = vpop.f32.mrf.mxu0
      %2190 = vmatprep.mubr.bf16.mxu0 0
      %2191 = vmatmul.mubr.bf16.gmra.mxu0 %v2041
      %v2192 = vpop.f32.mrf.mxu0
      %v2193 = vadd.f32 %v1912, %v2192
      %v2194 = vpop.f32.mrf.mxu0
      %v2195 = vpop.f32.mrf.mxu0
      %v2196 = vadd.f32 %v1915, %v2195
      %v2197 = vpop.f32.mrf.mxu0
      %2198 = vmatprep.mubr.bf16.mxu0 0
      %2199 = vmatmul.mubr.bf16.gmra.mxu0 %v2043
      %v2200 = vpop.f32.mrf.mxu0
      %v2201 = vadd.f32 %v1920, %v2200
      %v2202 = vpop.f32.mrf.mxu0
      %v2203 = vpop.f32.mrf.mxu0
      %v2204 = vadd.f32 %v1923, %v2203
      %v2205 = vpop.f32.mrf.mxu0
      %2206 = vmatprep.mubr.bf16.mxu0 0
      %2207 = vmatmul.mubr.bf16.gmra.mxu0 %v2045
      %v2208 = vpop.f32.mrf.mxu0
      %v2209 = vadd.f32 %v1928, %v2208
      %v2210 = vpop.f32.mrf.mxu0
      %v2211 = vpop.f32.mrf.mxu0
      %v2212 = vadd.f32 %v1931, %v2211
      %v2213 = vpop.f32.mrf.mxu0
      %2214 = vmatprep.mubr.bf16.mxu0 0
      %2215 = vmatmul.mubr.bf16.gmra.mxu0 %v2047
      %v2216 = vpop.f32.mrf.mxu0
      %v2217 = vadd.f32 %v1936, %v2216
      %v2218 = vpop.f32.mrf.mxu0
      %v2219 = vpop.f32.mrf.mxu0
      %v2220 = vadd.f32 %v1939, %v2219
      %v2221 = vpop.f32.mrf.mxu0
      %2222 = vmatprep.mubr.bf16.mxu0 0
      %2223 = vmatmul.mubr.bf16.gmra.mxu0 %v2049
      %v2224 = vpop.f32.mrf.mxu0
      %v2225 = vadd.f32 %v1944, %v2224
      %v2226 = vpop.f32.mrf.mxu0
      %v2227 = vpop.f32.mrf.mxu0
      %v2228 = vadd.f32 %v1947, %v2227
      %v2229 = vpop.f32.mrf.mxu0
      %2230 = vmatprep.mubr.bf16.mxu0 0
      %2231 = vmatmul.mubr.bf16.gmra.mxu0 %v2051
      %v2232 = vpop.f32.mrf.mxu0
      %v2233 = vadd.f32 %v1952, %v2232
      %v2234 = vpop.f32.mrf.mxu0
      %v2235 = vpop.f32.mrf.mxu0
      %v2236 = vadd.f32 %v1955, %v2235
      %v2237 = vpop.f32.mrf.mxu0
      %2238 = vmatprep.mubr.bf16.mxu0 0
      %2239 = vmatmul.mubr.bf16.gmra.mxu0 %v2053
      %v2240 = vpop.f32.mrf.mxu0
      %v2241 = vadd.f32 %v1960, %v2240
      %v2242 = vpop.f32.mrf.mxu0
      %v2243 = vpop.f32.mrf.mxu0
      %v2244 = vadd.f32 %v1963, %v2243
      %v2245 = vpop.f32.mrf.mxu0
      %2246 = vmatprep.mubr.bf16.mxu0 0
      %2247 = vmatmul.mubr.bf16.gmra.mxu0 %v2055
      %v2248 = vpop.f32.mrf.mxu0
      %v2249 = vadd.f32 %v1968, %v2248
      %v2250 = vpop.f32.mrf.mxu0
      %v2251 = vpop.f32.mrf.mxu0
      %v2252 = vadd.f32 %v1971, %v2251
      %v2253 = vpop.f32.mrf.mxu0
      %2254 = vmatprep.mubr.bf16.mxu0 0
      %2255 = vmatmul.mubr.bf16.gmra.mxu0 %v2057
      %v2256 = vpop.f32.mrf.mxu0
      %v2257 = vadd.f32 %v1976, %v2256
      %v2258 = vpop.f32.mrf.mxu0
      %v2259 = vpop.f32.mrf.mxu0
      %v2260 = vadd.f32 %v1979, %v2259
      %v2261 = vpop.f32.mrf.mxu0
      %2262 = vmatprep.mubr.bf16.mxu0 0
      %2263 = vmatmul.mubr.bf16.gmra.mxu0 %v2059
      %v2264 = vpop.f32.mrf.mxu0
      %v2265 = vadd.f32 %v1984, %v2264
      %v2266 = vpop.f32.mrf.mxu0
      %v2267 = vpop.f32.mrf.mxu0
      %v2268 = vadd.f32 %v1987, %v2267
      %v2269 = vpop.f32.mrf.mxu0
      %2270 = vmatprep.mubr.bf16.mxu0 0
      %2271 = vmatmul.mubr.bf16.gmra.mxu0 %v2061
      %v2272 = vpop.f32.mrf.mxu0
      %v2273 = vadd.f32 %v1992, %v2272
      %v2274 = vpop.f32.mrf.mxu0
      %v2275 = vpop.f32.mrf.mxu0
      %v2276 = vadd.f32 %v1995, %v2275
      %v2277 = vpop.f32.mrf.mxu0
      %2278 = vmatprep.mubr.bf16.mxu0 0
      %2279 = vmatmul.mubr.bf16.gmra.mxu0 %v2063
      %v2280 = vpop.f32.mrf.mxu0
      %v2281 = vadd.f32 %v2000, %v2280
      %v2282 = vpop.f32.mrf.mxu0
      %v2283 = vpop.f32.mrf.mxu0
      %v2284 = vadd.f32 %v2003, %v2283
      %v2285 = vpop.f32.mrf.mxu0
      %2286 = vmatprep.mubr.bf16.mxu0 0
      %2287 = vmatmul.mubr.bf16.gmra.mxu0 %v2065
      %v2288 = vpop.f32.mrf.mxu0
      %v2289 = vadd.f32 %v2008, %v2288
      %v2290 = vpop.f32.mrf.mxu0
      %v2291 = vpop.f32.mrf.mxu0
      %v2292 = vadd.f32 %v2011, %v2291
      %v2293 = vpop.f32.mrf.mxu0
      %2294 = vdwg.mxu0
      %s2295 = scalar_lea.vmem %s1, 16
      %v2296 = vld [vmem:[%s2295] sm:$0xf]
      %v2297 = vld [vmem:[%s2295 + $0x4] sm:$0x3]
      %v2300 = vunpack.c.l.b16 %v2296
      %v2301 = vunpack.c.l.b16 %v2297
      %v2302 = vpack.c.b16 %v2301, %v2300
      %v2303 = vsel %vm1712, %v1622, 0
      %v2305 = vsel %vm1712, %v1624, 0
      %v2307 = vsel %vm1712, %v1626, 0
      %v2310 = vsel %vm1785, %v2302, 0
      %2312 = vmatprep.subr.bf16.mxu0 0
      %2313 = vmatpush1.bf16.msra.mxu0 0
      %2314 = vmatprep.subr.bf16.mxu0 0
      %2315 = vmatpush1.bf16.msra.mxu0 0
      %2316 = vmatprep.subr.bf16.mxu0 0
      %2317 = vmatpush1.bf16.msra.mxu0 0
      %2318 = vmatprep.subr.bf16.mxu0 0
      %2319 = vmatpush1.bf16.msra.mxu0 0
      %2320 = vmatprep.subr.bf16.mxu0 0
      %2321 = vmatpush1.bf16.msra.mxu0 0
      %2322 = vmatprep.subr.bf16.mxu0 0
      %2323 = vmatpush1.bf16.msra.mxu0 0
      %2324 = vmatprep.subr.bf16.mxu0 0
      %2325 = vmatpush1.bf16.msra.mxu0 0
      %2326 = vmatprep.subr.bf16.mxu0 0
      %2327 = vmatpush1.bf16.msra.mxu0 %v2310
      %2328 = vmatprep.subr.bf16.mxu0 0
      %2329 = vmatpush2.bf16.msra.mxu0 0
      %2330 = vmatprep.subr.bf16.mxu0 0
      %2331 = vmatpush2.bf16.msra.mxu0 0
      %2332 = vmatprep.subr.bf16.mxu0 0
      %2333 = vmatpush2.bf16.msra.mxu0 0
      %2334 = vmatprep.subr.bf16.mxu0 0
      %2335 = vmatpush2.bf16.msra.mxu0 0
      %2336 = vmatprep.subr.bf16.mxu0 0
      %2337 = vmatpush2.bf16.msra.mxu0 0
      %2338 = vmatprep.subr.bf16.mxu0 0
      %2339 = vmatpush2.bf16.msra.mxu0 0
      %2340 = vmatprep.subr.bf16.mxu0 0
      %2341 = vmatpush2.bf16.msra.mxu0 0
      %2342 = vmatprep.subr.bf16.mxu0 0
      %2343 = vmatpush2.bf16.msra.mxu0 0
      %2344 = vmatprep.mubr.bf16.mxu0 0
      %2345 = vmatmul.mubr.bf16.gmra.mxu0 %v2025
      %v2346 = vpop.f32.mrf.mxu0
      %v2347 = vadd.f32 0.0, %v2346
      %v2348 = vpop.f32.mrf.mxu0
      %v2349 = vpop.f32.mrf.mxu0
      %v2350 = vadd.f32 0.0, %v2349
      %v2351 = vpop.f32.mrf.mxu0
      %2352 = vmatprep.mubr.bf16.mxu0 0
      %2353 = vmatmul.mubr.bf16.gmra.mxu0 %v2027
      %v2354 = vpop.f32.mrf.mxu0
      %v2355 = vadd.f32 0.0, %v2354
      %v2356 = vpop.f32.mrf.mxu0
      %v2357 = vpop.f32.mrf.mxu0
      %v2358 = vadd.f32 0.0, %v2357
      %v2359 = vpop.f32.mrf.mxu0
      %2360 = vmatprep.mubr.bf16.mxu0 0
      %2361 = vmatmul.mubr.bf16.gmra.mxu0 %v2029
      %v2362 = vpop.f32.mrf.mxu0
      %v2363 = vadd.f32 0.0, %v2362
      %v2364 = vpop.f32.mrf.mxu0
      %v2365 = vpop.f32.mrf.mxu0
      %v2366 = vadd.f32 0.0, %v2365
      %v2367 = vpop.f32.mrf.mxu0
      %2368 = vmatprep.mubr.bf16.mxu0 0
      %2369 = vmatmul.mubr.bf16.gmra.mxu0 %v2031
      %v2370 = vpop.f32.mrf.mxu0
      %v2371 = vadd.f32 0.0, %v2370
      %v2372 = vpop.f32.mrf.mxu0
      %v2373 = vpop.f32.mrf.mxu0
      %v2374 = vadd.f32 0.0, %v2373
      %v2375 = vpop.f32.mrf.mxu0
      %2376 = vmatprep.mubr.bf16.mxu0 0
      %2377 = vmatmul.mubr.bf16.gmra.mxu0 %v2033
      %v2378 = vpop.f32.mrf.mxu0
      %v2379 = vadd.f32 0.0, %v2378
      %v2380 = vpop.f32.mrf.mxu0
      %v2381 = vpop.f32.mrf.mxu0
      %v2382 = vadd.f32 0.0, %v2381
      %v2383 = vpop.f32.mrf.mxu0
      %2384 = vmatprep.mubr.bf16.mxu0 0
      %2385 = vmatmul.mubr.bf16.gmra.mxu0 %v2035
      %v2386 = vpop.f32.mrf.mxu0
      %v2387 = vadd.f32 0.0, %v2386
      %v2388 = vpop.f32.mrf.mxu0
      %v2389 = vpop.f32.mrf.mxu0
      %v2390 = vadd.f32 0.0, %v2389
      %v2391 = vpop.f32.mrf.mxu0
      %2392 = vmatprep.mubr.bf16.mxu0 0
      %2393 = vmatmul.mubr.bf16.gmra.mxu0 %v2037
      %v2394 = vpop.f32.mrf.mxu0
      %v2395 = vadd.f32 0.0, %v2394
      %v2396 = vpop.f32.mrf.mxu0
      %v2397 = vpop.f32.mrf.mxu0
      %v2398 = vadd.f32 0.0, %v2397
      %v2399 = vpop.f32.mrf.mxu0
      %2400 = vmatprep.mubr.bf16.mxu0 0
      %2401 = vmatmul.mubr.bf16.gmra.mxu0 %v2039
      %v2402 = vpop.f32.mrf.mxu0
      %v2403 = vadd.f32 0.0, %v2402
      %v2404 = vpop.f32.mrf.mxu0
      %v2405 = vpop.f32.mrf.mxu0
      %v2406 = vadd.f32 0.0, %v2405
      %v2407 = vpop.f32.mrf.mxu0
      %2408 = vmatprep.mubr.bf16.mxu0 0
      %2409 = vmatmul.mubr.bf16.gmra.mxu0 %v2041
      %v2410 = vpop.f32.mrf.mxu0
      %v2411 = vadd.f32 0.0, %v2410
      %v2412 = vpop.f32.mrf.mxu0
      %v2413 = vpop.f32.mrf.mxu0
      %v2414 = vadd.f32 0.0, %v2413
      %v2415 = vpop.f32.mrf.mxu0
      %2416 = vmatprep.mubr.bf16.mxu0 0
      %2417 = vmatmul.mubr.bf16.gmra.mxu0 %v2043
      %v2418 = vpop.f32.mrf.mxu0
      %v2419 = vadd.f32 0.0, %v2418
      %v2420 = vpop.f32.mrf.mxu0
      %v2421 = vpop.f32.mrf.mxu0
      %v2422 = vadd.f32 0.0, %v2421
      %v2423 = vpop.f32.mrf.mxu0
      %2424 = vmatprep.mubr.bf16.mxu0 0
      %2425 = vmatmul.mubr.bf16.gmra.mxu0 %v2045
      %v2426 = vpop.f32.mrf.mxu0
      %v2427 = vadd.f32 0.0, %v2426
      %v2428 = vpop.f32.mrf.mxu0
      %v2429 = vpop.f32.mrf.mxu0
      %v2430 = vadd.f32 0.0, %v2429
      %v2431 = vpop.f32.mrf.mxu0
      %2432 = vmatprep.mubr.bf16.mxu0 0
      %2433 = vmatmul.mubr.bf16.gmra.mxu0 %v2047
      %v2434 = vpop.f32.mrf.mxu0
      %v2435 = vadd.f32 0.0, %v2434
      %v2436 = vpop.f32.mrf.mxu0
      %v2437 = vpop.f32.mrf.mxu0
      %v2438 = vadd.f32 0.0, %v2437
      %v2439 = vpop.f32.mrf.mxu0
      %2440 = vmatprep.mubr.bf16.mxu0 0
      %2441 = vmatmul.mubr.bf16.gmra.mxu0 %v2049
      %v2442 = vpop.f32.mrf.mxu0
      %v2443 = vadd.f32 0.0, %v2442
      %v2444 = vpop.f32.mrf.mxu0
      %v2445 = vpop.f32.mrf.mxu0
      %v2446 = vadd.f32 0.0, %v2445
      %v2447 = vpop.f32.mrf.mxu0
      %2448 = vmatprep.mubr.bf16.mxu0 0
      %2449 = vmatmul.mubr.bf16.gmra.mxu0 %v2051
      %v2450 = vpop.f32.mrf.mxu0
      %v2451 = vadd.f32 0.0, %v2450
      %v2452 = vpop.f32.mrf.mxu0
      %v2453 = vpop.f32.mrf.mxu0
      %v2454 = vadd.f32 0.0, %v2453
      %v2455 = vpop.f32.mrf.mxu0
      %2456 = vmatprep.mubr.bf16.mxu0 0
      %2457 = vmatmul.mubr.bf16.gmra.mxu0 %v2053
      %v2458 = vpop.f32.mrf.mxu0
      %v2459 = vadd.f32 0.0, %v2458
      %v2460 = vpop.f32.mrf.mxu0
      %v2461 = vpop.f32.mrf.mxu0
      %v2462 = vadd.f32 0.0, %v2461
      %v2463 = vpop.f32.mrf.mxu0
      %2464 = vmatprep.mubr.bf16.mxu0 0
      %2465 = vmatmul.mubr.bf16.gmra.mxu0 %v2055
      %v2466 = vpop.f32.mrf.mxu0
      %v2467 = vadd.f32 0.0, %v2466
      %v2468 = vpop.f32.mrf.mxu0
      %v2469 = vpop.f32.mrf.mxu0
      %v2470 = vadd.f32 0.0, %v2469
      %v2471 = vpop.f32.mrf.mxu0
      %2472 = vmatprep.mubr.bf16.mxu0 0
      %2473 = vmatmul.mubr.bf16.gmra.mxu0 %v2057
      %v2474 = vpop.f32.mrf.mxu0
      %v2475 = vadd.f32 0.0, %v2474
      %v2476 = vpop.f32.mrf.mxu0
      %v2477 = vpop.f32.mrf.mxu0
      %v2478 = vadd.f32 0.0, %v2477
      %v2479 = vpop.f32.mrf.mxu0
      %2480 = vmatprep.mubr.bf16.mxu0 0
      %2481 = vmatmul.mubr.bf16.gmra.mxu0 %v2059
      %v2482 = vpop.f32.mrf.mxu0
      %v2483 = vadd.f32 0.0, %v2482
      %v2484 = vpop.f32.mrf.mxu0
      %v2485 = vpop.f32.mrf.mxu0
      %v2486 = vadd.f32 0.0, %v2485
      %v2487 = vpop.f32.mrf.mxu0
      %2488 = vmatprep.mubr.bf16.mxu0 0
      %2489 = vmatmul.mubr.bf16.gmra.mxu0 %v2061
      %v2490 = vpop.f32.mrf.mxu0
      %v2491 = vadd.f32 0.0, %v2490
      %v2492 = vpop.f32.mrf.mxu0
      %v2493 = vpop.f32.mrf.mxu0
      %v2494 = vadd.f32 0.0, %v2493
      %v2495 = vpop.f32.mrf.mxu0
      %2496 = vmatprep.mubr.bf16.mxu0 0
      %2497 = vmatmul.mubr.bf16.gmra.mxu0 %v2063
      %v2498 = vpop.f32.mrf.mxu0
      %v2499 = vadd.f32 0.0, %v2498
      %v2500 = vpop.f32.mrf.mxu0
      %v2501 = vpop.f32.mrf.mxu0
      %v2502 = vadd.f32 0.0, %v2501
      %v2503 = vpop.f32.mrf.mxu0
      %2504 = vmatprep.mubr.bf16.mxu0 0
      %2505 = vmatmul.mubr.bf16.gmra.mxu0 %v2065
      %v2506 = vpop.f32.mrf.mxu0
      %v2507 = vadd.f32 0.0, %v2506
      %v2508 = vpop.f32.mrf.mxu0
      %v2509 = vpop.f32.mrf.mxu0
      %v2510 = vadd.f32 0.0, %v2509
      %v2511 = vpop.f32.mrf.mxu0
      %2512 = vmatprep.mubr.bf16.mxu0 0
      %2513 = vmatmul.mubr.bf16.gmra.mxu0 %v2303
      %v2514 = vpop.f32.mrf.mxu0
      %v2515 = vadd.f32 0.0, %v2514
      %v2516 = vpop.f32.mrf.mxu0
      %v2517 = vpop.f32.mrf.mxu0
      %v2518 = vadd.f32 0.0, %v2517
      %v2519 = vpop.f32.mrf.mxu0
      %2520 = vmatprep.mubr.bf16.mxu0 0
      %2521 = vmatmul.mubr.bf16.gmra.mxu0 %v2305
      %v2522 = vpop.f32.mrf.mxu0
      %v2523 = vadd.f32 0.0, %v2522
      %v2524 = vpop.f32.mrf.mxu0
      %v2525 = vpop.f32.mrf.mxu0
      %v2526 = vadd.f32 0.0, %v2525
      %v2527 = vpop.f32.mrf.mxu0
      %2528 = vmatprep.mubr.bf16.mxu0 0
      %2529 = vmatmul.mubr.bf16.gmra.mxu0 %v2307
      %v2530 = vpop.f32.mrf.mxu0
      %v2531 = vadd.f32 0.0, %v2530
      %v2532 = vpop.f32.mrf.mxu0
      %v2533 = vpop.f32.mrf.mxu0
      %v2534 = vadd.f32 0.0, %v2533
      %v2535 = vpop.f32.mrf.mxu0
      %2536 = vdwg.mxu0
      %v2537 = vadd.f32 %v2105, %v2347
      %v2538 = vadd.f32 %v2108, %v2350
      %v2539 = vadd.f32 %v2113, %v2355
      %v2540 = vadd.f32 %v2116, %v2358
      %v2541 = vadd.f32 %v2121, %v2363
      %v2542 = vadd.f32 %v2124, %v2366
      %v2543 = vadd.f32 %v2129, %v2371
      %v2544 = vadd.f32 %v2132, %v2374
      %v2545 = vadd.f32 %v2137, %v2379
      %v2546 = vadd.f32 %v2140, %v2382
      %v2547 = vadd.f32 %v2145, %v2387
      %v2548 = vadd.f32 %v2148, %v2390
      %v2549 = vadd.f32 %v2153, %v2395
      %v2550 = vadd.f32 %v2156, %v2398
      %v2551 = vadd.f32 %v2161, %v2403
      %v2552 = vadd.f32 %v2164, %v2406
      %v2553 = vadd.f32 %v2169, %v2411
      %v2554 = vadd.f32 %v2172, %v2414
      %v2555 = vadd.f32 %v2177, %v2419
      %v2556 = vadd.f32 %v2180, %v2422
      %v2557 = vadd.f32 %v2185, %v2427
      %v2558 = vadd.f32 %v2188, %v2430
      %v2559 = vadd.f32 %v2193, %v2435
      %v2560 = vadd.f32 %v2196, %v2438
      %v2561 = vadd.f32 %v2201, %v2443
      %v2562 = vadd.f32 %v2204, %v2446
      %v2563 = vadd.f32 %v2209, %v2451
      %v2564 = vadd.f32 %v2212, %v2454
      %v2565 = vadd.f32 %v2217, %v2459
      %v2566 = vadd.f32 %v2220, %v2462
      %v2567 = vadd.f32 %v2225, %v2467
      %v2568 = vadd.f32 %v2228, %v2470
      %v2569 = vadd.f32 %v2233, %v2475
      %v2570 = vadd.f32 %v2236, %v2478
      %v2571 = vadd.f32 %v2241, %v2483
      %v2572 = vadd.f32 %v2244, %v2486
      %v2573 = vadd.f32 %v2249, %v2491
      %v2574 = vadd.f32 %v2252, %v2494
      %v2575 = vadd.f32 %v2257, %v2499
      %v2576 = vadd.f32 %v2260, %v2502
      %v2577 = vadd.f32 %v2265, %v2507
      %v2578 = vadd.f32 %v2268, %v2510
      %v2579 = vadd.f32 %v2273, %v2515
      %v2580 = vadd.f32 %v2276, %v2518
      %v2581 = vadd.f32 %v2281, %v2523
      %v2582 = vadd.f32 %v2284, %v2526
      %v2583 = vadd.f32 %v2289, %v2531
      %v2584 = vadd.f32 %v2292, %v2534
      %v2585 = vadd.f32 %v2537, -0.05
      %v2586 = vadd.f32 %v2538, -0.05
      %v2587 = vadd.f32 %v2539, -0.05
      %v2588 = vadd.f32 %v2540, -0.05
      %v2589 = vadd.f32 %v2541, -0.05
      %v2590 = vadd.f32 %v2542, -0.05
      %v2591 = vadd.f32 %v2543, -0.05
      %v2592 = vadd.f32 %v2544, -0.05
      %v2593 = vadd.f32 %v2545, -0.05
      %v2594 = vadd.f32 %v2546, -0.05
      %v2595 = vadd.f32 %v2547, -0.05
      %v2596 = vadd.f32 %v2548, -0.05
      %v2597 = vadd.f32 %v2549, -0.05
      %v2598 = vadd.f32 %v2550, -0.05
      %v2599 = vadd.f32 %v2551, -0.05
      %v2600 = vadd.f32 %v2552, -0.05
      %v2601 = vadd.f32 %v2553, -0.05
      %v2602 = vadd.f32 %v2554, -0.05
      %v2603 = vadd.f32 %v2555, -0.05
      %v2604 = vadd.f32 %v2556, -0.05
      %v2605 = vadd.f32 %v2557, -0.05
      %v2606 = vadd.f32 %v2558, -0.05
      %v2607 = vadd.f32 %v2559, -0.05
      %v2608 = vadd.f32 %v2560, -0.05
      %v2609 = vadd.f32 %v2561, -0.05
      %v2610 = vadd.f32 %v2562, -0.05
      %v2611 = vadd.f32 %v2563, -0.05
      %v2612 = vadd.f32 %v2564, -0.05
      %v2613 = vadd.f32 %v2565, -0.05
      %v2614 = vadd.f32 %v2566, -0.05
      %v2615 = vadd.f32 %v2567, -0.05
      %v2616 = vadd.f32 %v2568, -0.05
      %v2617 = vadd.f32 %v2569, -0.05
      %v2618 = vadd.f32 %v2570, -0.05
      %v2619 = vadd.f32 %v2571, -0.05
      %v2620 = vadd.f32 %v2572, -0.05
      %v2621 = vadd.f32 %v2573, -0.05
      %v2622 = vadd.f32 %v2574, -0.05
      %v2623 = vadd.f32 %v2575, -0.05
      %v2624 = vadd.f32 %v2576, -0.05
      %v2625 = vadd.f32 %v2577, -0.05
      %v2626 = vadd.f32 %v2578, -0.05
      %v2627 = vadd.f32 %v2579, -0.05
      %v2628 = vadd.f32 %v2580, -0.05
      %v2629 = vadd.f32 %v2581, -0.05
      %v2630 = vadd.f32 %v2582, -0.05
      %v2631 = vadd.f32 %v2583, -0.05
      %v2632 = vadd.f32 %v2584, -0.05
      %v2633 = vmax.f32 %v2585, 0.0
      %v2634 = vmax.f32 %v2586, 0.0
      %v2635 = vmax.f32 %v2587, 0.0
      %v2636 = vmax.f32 %v2588, 0.0
      %v2637 = vmax.f32 %v2589, 0.0
      %v2638 = vmax.f32 %v2590, 0.0
      %v2639 = vmax.f32 %v2591, 0.0
      %v2640 = vmax.f32 %v2592, 0.0
      %v2641 = vmax.f32 %v2593, 0.0
      %v2642 = vmax.f32 %v2594, 0.0
      %v2643 = vmax.f32 %v2595, 0.0
      %v2644 = vmax.f32 %v2596, 0.0
      %v2645 = vmax.f32 %v2597, 0.0
      %v2646 = vmax.f32 %v2598, 0.0
      %v2647 = vmax.f32 %v2599, 0.0
      %v2648 = vmax.f32 %v2600, 0.0
      %v2649 = vmax.f32 %v2601, 0.0
      %v2650 = vmax.f32 %v2602, 0.0
      %v2651 = vmax.f32 %v2603, 0.0
      %v2652 = vmax.f32 %v2604, 0.0
      %v2653 = vmax.f32 %v2605, 0.0
      %v2654 = vmax.f32 %v2606, 0.0
      %v2655 = vmax.f32 %v2607, 0.0
      %v2656 = vmax.f32 %v2608, 0.0
      %v2657 = vmax.f32 %v2609, 0.0
      %v2658 = vmax.f32 %v2610, 0.0
      %v2659 = vmax.f32 %v2611, 0.0
      %v2660 = vmax.f32 %v2612, 0.0
      %v2661 = vmax.f32 %v2613, 0.0
      %v2662 = vmax.f32 %v2614, 0.0
      %v2663 = vmax.f32 %v2615, 0.0
      %v2664 = vmax.f32 %v2616, 0.0
      %v2665 = vmax.f32 %v2617, 0.0
      %v2666 = vmax.f32 %v2618, 0.0
      %v2667 = vmax.f32 %v2619, 0.0
      %v2668 = vmax.f32 %v2620, 0.0
      %v2669 = vmax.f32 %v2621, 0.0
      %v2670 = vmax.f32 %v2622, 0.0
      %v2671 = vmax.f32 %v2623, 0.0
      %v2672 = vmax.f32 %v2624, 0.0
      %v2673 = vmax.f32 %v2625, 0.0
      %v2674 = vmax.f32 %v2626, 0.0
      %v2675 = vmax.f32 %v2627, 0.0
      %v2676 = vmax.f32 %v2628, 0.0
      %v2677 = vmax.f32 %v2629, 0.0
      %v2678 = vmax.f32 %v2630, 0.0
      %v2679 = vmax.f32 %v2631, 0.0
      %v2680 = vmax.f32 %v2632, 0.0
      %v2681 = vadd.f32 %v2633, 0.02
      %v2682 = vadd.f32 %v2634, 0.02
      %v2683 = vadd.f32 %v2635, 0.02
      %v2684 = vadd.f32 %v2636, 0.02
      %v2685 = vadd.f32 %v2637, 0.02
      %v2686 = vadd.f32 %v2638, 0.02
      %v2687 = vadd.f32 %v2639, 0.02
      %v2688 = vadd.f32 %v2640, 0.02
      %v2689 = vadd.f32 %v2641, 0.02
      %v2690 = vadd.f32 %v2642, 0.02
      %v2691 = vadd.f32 %v2643, 0.02
      %v2692 = vadd.f32 %v2644, 0.02
      %v2693 = vadd.f32 %v2645, 0.02
      %v2694 = vadd.f32 %v2646, 0.02
      %v2695 = vadd.f32 %v2647, 0.02
      %v2696 = vadd.f32 %v2648, 0.02
      %v2697 = vadd.f32 %v2649, 0.02
      %v2698 = vadd.f32 %v2650, 0.02
      %v2699 = vadd.f32 %v2651, 0.02
      %v2700 = vadd.f32 %v2652, 0.02
      %v2701 = vadd.f32 %v2653, 0.02
      %v2702 = vadd.f32 %v2654, 0.02
      %v2703 = vadd.f32 %v2655, 0.02
      %v2704 = vadd.f32 %v2656, 0.02
      %v2705 = vadd.f32 %v2657, 0.02
      %v2706 = vadd.f32 %v2658, 0.02
      %v2707 = vadd.f32 %v2659, 0.02
      %v2708 = vadd.f32 %v2660, 0.02
      %v2709 = vadd.f32 %v2661, 0.02
      %v2710 = vadd.f32 %v2662, 0.02
      %v2711 = vadd.f32 %v2663, 0.02
      %v2712 = vadd.f32 %v2664, 0.02
      %v2713 = vadd.f32 %v2665, 0.02
      %v2714 = vadd.f32 %v2666, 0.02
      %v2715 = vadd.f32 %v2667, 0.02
      %v2716 = vadd.f32 %v2668, 0.02
      %v2717 = vadd.f32 %v2669, 0.02
      %v2718 = vadd.f32 %v2670, 0.02
      %v2719 = vadd.f32 %v2671, 0.02
      %v2720 = vadd.f32 %v2672, 0.02
      %v2721 = vadd.f32 %v2673, 0.02
      %v2722 = vadd.f32 %v2674, 0.02
      %v2723 = vadd.f32 %v2675, 0.02
      %v2724 = vadd.f32 %v2676, 0.02
      %v2725 = vadd.f32 %v2677, 0.02
      %v2726 = vadd.f32 %v2678, 0.02
      %v2727 = vadd.f32 %v2679, 0.02
      %v2728 = vadd.f32 %v2680, 0.02
      %v2729 = vpack.c.bf16 %v2682, %v2681
      %v2730 = vpack.c.bf16 %v2684, %v2683
      %v2731 = vpack.c.bf16 %v2686, %v2685
      %v2732 = vpack.c.bf16 %v2688, %v2687
      %v2733 = vpack.c.bf16 %v2690, %v2689
      %v2734 = vpack.c.bf16 %v2692, %v2691
      %v2735 = vpack.c.bf16 %v2694, %v2693
      %v2736 = vpack.c.bf16 %v2696, %v2695
      %v2737 = vpack.c.bf16 %v2698, %v2697
      %v2738 = vpack.c.bf16 %v2700, %v2699
      %v2739 = vpack.c.bf16 %v2702, %v2701
      %v2740 = vpack.c.bf16 %v2704, %v2703
      %v2741 = vpack.c.bf16 %v2706, %v2705
      %v2742 = vpack.c.bf16 %v2708, %v2707
      %v2743 = vpack.c.bf16 %v2710, %v2709
      %v2744 = vpack.c.bf16 %v2712, %v2711
      %v2745 = vpack.c.bf16 %v2714, %v2713
      %v2746 = vpack.c.bf16 %v2716, %v2715
      %v2747 = vpack.c.bf16 %v2718, %v2717
      %v2748 = vpack.c.bf16 %v2720, %v2719
      %v2749 = vpack.c.bf16 %v2722, %v2721
      %v2750 = vpack.c.bf16 %v2724, %v2723
      %v2751 = vpack.c.bf16 %v2726, %v2725
      %v2752 = vpack.c.bf16 %v2728, %v2727
      %v2777 = vunpack.c.l.b16 %v2729
      %v2778 = vunpack.c.h.b16 %v2729
      %v2779 = vunpack.c.h.b16 %v2730
      %v2780 = vunpack.c.l.b16 %v2731
      %v2781 = vunpack.c.l.b16 %v2732
      %v2782 = vunpack.c.h.b16 %v2732
      %v2783 = vunpack.c.h.b16 %v2733
      %v2784 = vunpack.c.l.b16 %v2734
      %v2785 = vunpack.c.l.b16 %v2735
      %v2786 = vunpack.c.h.b16 %v2735
      %v2787 = vunpack.c.h.b16 %v2736
      %v2788 = vunpack.c.l.b16 %v2737
      %v2789 = vunpack.c.l.b16 %v2738
      %v2790 = vunpack.c.h.b16 %v2738
      %v2791 = vunpack.c.h.b16 %v2739
      %v2792 = vunpack.c.l.b16 %v2740
      %v2793 = vunpack.c.l.b16 %v2741
      %v2794 = vunpack.c.h.b16 %v2741
      %v2795 = vunpack.c.h.b16 %v2742
      %v2796 = vunpack.c.l.b16 %v2743
      %v2797 = vunpack.c.l.b16 %v2744
      %v2798 = vunpack.c.h.b16 %v2744
      %v2799 = vunpack.c.h.b16 %v2745
      %v2800 = vunpack.c.l.b16 %v2746
      %v2801 = vunpack.c.l.b16 %v2747
      %v2802 = vunpack.c.h.b16 %v2747
      %v2803 = vunpack.c.h.b16 %v2748
      %v2804 = vunpack.c.l.b16 %v2749
      %v2805 = vunpack.c.l.b16 %v2750
      %v2806 = vunpack.c.h.b16 %v2750
      %v2807 = vunpack.c.h.b16 %v2751
      %v2808 = vunpack.c.l.b16 %v2752
      %v2809 = vpack.c.b16 %v2777, %v2777
      %v2810 = vpack.c.b16 %v2778, %v2778
      %v2811 = vpack.c.b16 %v2779, %v2779
      %v2812 = vpack.c.b16 %v2780, %v2780
      %v2813 = vpack.c.b16 %v2781, %v2781
      %v2814 = vpack.c.b16 %v2782, %v2782
      %v2815 = vpack.c.b16 %v2783, %v2783
      %v2816 = vpack.c.b16 %v2784, %v2784
      %v2817 = vpack.c.b16 %v2785, %v2785
      %v2818 = vpack.c.b16 %v2786, %v2786
      %v2819 = vpack.c.b16 %v2787, %v2787
      %v2820 = vpack.c.b16 %v2788, %v2788
      %v2821 = vpack.c.b16 %v2789, %v2789
      %v2822 = vpack.c.b16 %v2790, %v2790
      %v2823 = vpack.c.b16 %v2791, %v2791
      %v2824 = vpack.c.b16 %v2792, %v2792
      %v2825 = vpack.c.b16 %v2793, %v2793
      %v2826 = vpack.c.b16 %v2794, %v2794
      %v2827 = vpack.c.b16 %v2795, %v2795
      %v2828 = vpack.c.b16 %v2796, %v2796
      %v2829 = vpack.c.b16 %v2797, %v2797
      %v2830 = vpack.c.b16 %v2798, %v2798
      %v2831 = vpack.c.b16 %v2799, %v2799
      %v2832 = vpack.c.b16 %v2800, %v2800
      %v2833 = vpack.c.b16 %v2801, %v2801
      %v2834 = vpack.c.b16 %v2802, %v2802
      %v2835 = vpack.c.b16 %v2803, %v2803
      %v2836 = vpack.c.b16 %v2804, %v2804
      %v2837 = vpack.c.b16 %v2805, %v2805
      %v2838 = vpack.c.b16 %v2806, %v2806
      %v2839 = vpack.c.b16 %v2807, %v2807
      %v2840 = vpack.c.b16 %v2808, %v2808
      %vm2841 = vcmask 60416
      %2842 = vst.msk [vmem:[#allocation3] sm:$0xf] %vm2841, 0
      %2843 = vst.msk [vmem:[#allocation3 + $0x4] sm:$0xf] %vm2841, 0
      %2844 = vst.msk [vmem:[#allocation3 + $0x8] sm:$0xf] %vm2841, 0
      %s2845 = scalar_lea.vmem [#allocation3], 204
      %2846 = vst.msk [vmem:[%s2845] sm:$0xf] %vm2841, 0
      %2847 = vst.msk [vmem:[%s2845 + $0x4] sm:$0xf] %vm2841, 0
      %2848 = vst.msk [vmem:[%s2845 + $0x8] sm:$0xf] %vm2841, 0
      %2849 = vst.msk [vmem:[%s2845 + $0xc] sm:$0xf] %vm2841, 0
      %2850 = vst.msk [vmem:[%s2845 + $0x10] sm:$0xf] %vm2841, 0
      %2851 = vst.msk [vmem:[%s2845 + $0x14] sm:$0xf] %vm2841, 0
      %s2852 = scalar_lea.vmem [#allocation3], 12
      %vm2853 = vcmask 57344
      %vm2854 = vmand %vm2853, %vm324
      %v2855 = vld [vmem:[%s2852] sm:$0x1]
      %v2856 = vsel %vm2854, 0, %v2855
      %2857 = vst [vmem:[%s2852] sm:$0x1] %v2856
      %v2858 = vld [vmem:[%s2852 + $0xc] sm:$0x1]
      %v2859 = vsel %vm2854, 0, %v2858
      %2860 = vst [vmem:[%s2852 + $0xc] sm:$0x1] %v2859
      %v2861 = vld [vmem:[%s2852 + $0x18] sm:$0x1]
      %v2862 = vsel %vm2854, 0, %v2861
      %2863 = vst [vmem:[%s2852 + $0x18] sm:$0x1] %v2862
      %v2864 = vld [vmem:[%s2852 + $0x24] sm:$0x1]
      %v2865 = vsel %vm2854, 0, %v2864
      %2866 = vst [vmem:[%s2852 + $0x24] sm:$0x1] %v2865
      %v2867 = vld [vmem:[%s2852 + $0x30] sm:$0x1]
      %v2868 = vsel %vm2854, 0, %v2867
      %2869 = vst [vmem:[%s2852 + $0x30] sm:$0x1] %v2868
      %v2870 = vld [vmem:[%s2852 + $0x3c] sm:$0x1]
      %v2871 = vsel %vm2854, 0, %v2870
      %2872 = vst [vmem:[%s2852 + $0x3c] sm:$0x1] %v2871
      %v2873 = vld [vmem:[%s2852 + $0x48] sm:$0x1]
      %v2874 = vsel %vm2854, 0, %v2873
      %2875 = vst [vmem:[%s2852 + $0x48] sm:$0x1] %v2874
      %v2876 = vld [vmem:[%s2852 + $0x54] sm:$0x1]
      %v2877 = vsel %vm2854, 0, %v2876
      %2878 = vst [vmem:[%s2852 + $0x54] sm:$0x1] %v2877
      %v2879 = vld [vmem:[%s2852 + $0x60] sm:$0x1]
      %v2880 = vsel %vm2854, 0, %v2879
      %2881 = vst [vmem:[%s2852 + $0x60] sm:$0x1] %v2880
      %v2882 = vld [vmem:[%s2852 + $0x6c] sm:$0x1]
      %v2883 = vsel %vm2854, 0, %v2882
      %2884 = vst [vmem:[%s2852 + $0x6c] sm:$0x1] %v2883
      %v2885 = vld [vmem:[%s2852 + $0x78] sm:$0x1]
      %v2886 = vsel %vm2854, 0, %v2885
      %2887 = vst [vmem:[%s2852 + $0x78] sm:$0x1] %v2886
      %v2888 = vld [vmem:[%s2852 + $0x84] sm:$0x1]
      %v2889 = vsel %vm2854, 0, %v2888
      %2890 = vst [vmem:[%s2852 + $0x84] sm:$0x1] %v2889
      %v2891 = vld [vmem:[%s2852 + $0x90] sm:$0x1]
      %v2892 = vsel %vm2854, 0, %v2891
      %2893 = vst [vmem:[%s2852 + $0x90] sm:$0x1] %v2892
      %v2894 = vld [vmem:[%s2852 + $0x9c] sm:$0x1]
      %v2895 = vsel %vm2854, 0, %v2894
      %2896 = vst [vmem:[%s2852 + $0x9c] sm:$0x1] %v2895
      %v2897 = vld [vmem:[%s2852 + $0xa8] sm:$0x1]
      %v2898 = vsel %vm2854, 0, %v2897
      %2899 = vst [vmem:[%s2852 + $0xa8] sm:$0x1] %v2898
      %v2900 = vld [vmem:[%s2852 + $0xb4] sm:$0x1]
      %v2901 = vsel %vm2854, 0, %v2900
      %2902 = vst [vmem:[%s2852 + $0xb4] sm:$0x1] %v2901
      %vm2903 = vcmask 60416
      %vm2904 = vmand %vm2903, %vm375
      %v2905 = vld [vmem:[%s2852 + $0x8] sm:$0xf]
      %v2906 = vsel %vm2904, 0, %v2905
      %2907 = vst [vmem:[%s2852 + $0x8] sm:$0xf] %v2906
      %v2908 = vld [vmem:[%s2852 + $0x14] sm:$0xf]
      %v2909 = vsel %vm2904, 0, %v2908
      %2910 = vst [vmem:[%s2852 + $0x14] sm:$0xf] %v2909
      %v2911 = vld [vmem:[%s2852 + $0x20] sm:$0xf]
      %v2912 = vsel %vm2904, 0, %v2911
      %2913 = vst [vmem:[%s2852 + $0x20] sm:$0xf] %v2912
      %v2914 = vld [vmem:[%s2852 + $0x2c] sm:$0xf]
      %v2915 = vsel %vm2904, 0, %v2914
      %2916 = vst [vmem:[%s2852 + $0x2c] sm:$0xf] %v2915
      %v2917 = vld [vmem:[%s2852 + $0x38] sm:$0xf]
      %v2918 = vsel %vm2904, 0, %v2917
      %2919 = vst [vmem:[%s2852 + $0x38] sm:$0xf] %v2918
      %v2920 = vld [vmem:[%s2852 + $0x44] sm:$0xf]
      %v2921 = vsel %vm2904, 0, %v2920
      %2922 = vst [vmem:[%s2852 + $0x44] sm:$0xf] %v2921
      %v2923 = vld [vmem:[%s2852 + $0x50] sm:$0xf]
      %v2924 = vsel %vm2904, 0, %v2923
      %2925 = vst [vmem:[%s2852 + $0x50] sm:$0xf] %v2924
      %v2926 = vld [vmem:[%s2852 + $0x5c] sm:$0xf]
      %v2927 = vsel %vm2904, 0, %v2926
      %2928 = vst [vmem:[%s2852 + $0x5c] sm:$0xf] %v2927
      %v2929 = vld [vmem:[%s2852 + $0x68] sm:$0xf]
      %v2930 = vsel %vm2904, 0, %v2929
      %2931 = vst [vmem:[%s2852 + $0x68] sm:$0xf] %v2930
      %v2932 = vld [vmem:[%s2852 + $0x74] sm:$0xf]
      %v2933 = vsel %vm2904, 0, %v2932
      %2934 = vst [vmem:[%s2852 + $0x74] sm:$0xf] %v2933
      %v2935 = vld [vmem:[%s2852 + $0x80] sm:$0xf]
      %v2936 = vsel %vm2904, 0, %v2935
      %2937 = vst [vmem:[%s2852 + $0x80] sm:$0xf] %v2936
      %v2938 = vld [vmem:[%s2852 + $0x8c] sm:$0xf]
      %v2939 = vsel %vm2904, 0, %v2938
      %2940 = vst [vmem:[%s2852 + $0x8c] sm:$0xf] %v2939
      %v2941 = vld [vmem:[%s2852 + $0x98] sm:$0xf]
      %v2942 = vsel %vm2904, 0, %v2941
      %2943 = vst [vmem:[%s2852 + $0x98] sm:$0xf] %v2942
      %v2944 = vld [vmem:[%s2852 + $0xa4] sm:$0xf]
      %v2945 = vsel %vm2904, 0, %v2944
      %2946 = vst [vmem:[%s2852 + $0xa4] sm:$0xf] %v2945
      %v2947 = vld [vmem:[%s2852 + $0xb0] sm:$0xf]
      %v2948 = vsel %vm2904, 0, %v2947
      %2949 = vst [vmem:[%s2852 + $0xb0] sm:$0xf] %v2948
      %v2950 = vld [vmem:[%s2852 + $0xbc] sm:$0xf]
      %v2951 = vsel %vm2904, 0, %v2950
      %2952 = vst [vmem:[%s2852 + $0xbc] sm:$0xf] %v2951
      %v2954 = vshrl.u32 %v2809, 16
      %v2956 = vrot.slane %v2954, 7
      %v2957 = vshll.u32 %v2809, 16
      %v2959 = vor.u32 %v2956, %v2957
      %v2960 = vrot.slane %v2956, 4
      %v2962 = vshrl.u32 %v2810, 16
      %v2964 = vrot.slane %v2962, 7
      %v2965 = vshll.u32 %v2810, 16
      %v2967 = vor.u32 %v2964, %v2965
      %v2968 = vsel %vm506, %v2960, %v2967
      %v2969 = vrot.slane %v2964, 4
      %v2971 = vshrl.u32 %v2811, 16
      %v2973 = vrot.slane %v2971, 7
      %v2974 = vshll.u32 %v2811, 16
      %v2976 = vor.u32 %v2973, %v2974
      %v2977 = vrot.slane %v2973, 4
      %v2979 = vshrl.u32 %v2812, 16
      %v2981 = vrot.slane %v2979, 7
      %v2982 = vshll.u32 %v2812, 16
      %v2984 = vor.u32 %v2981, %v2982
      %v2985 = vsel %vm506, %v2977, %v2984
      %v2986 = vrot.slane %v2981, 4
      %v2988 = vshrl.u32 %v2813, 16
      %v2990 = vrot.slane %v2988, 7
      %v2991 = vshll.u32 %v2813, 16
      %v2993 = vor.u32 %v2990, %v2991
      %v2994 = vrot.slane %v2990, 4
      %v2996 = vshrl.u32 %v2814, 16
      %v2998 = vrot.slane %v2996, 7
      %v2999 = vshll.u32 %v2814, 16
      %v3001 = vor.u32 %v2998, %v2999
      %v3002 = vsel %vm506, %v2994, %v3001
      %v3003 = vrot.slane %v2998, 4
      %v3005 = vshrl.u32 %v2815, 16
      %v3007 = vrot.slane %v3005, 7
      %v3008 = vshll.u32 %v2815, 16
      %v3010 = vor.u32 %v3007, %v3008
      %v3011 = vrot.slane %v3007, 4
      %v3013 = vshrl.u32 %v2816, 16
      %v3015 = vrot.slane %v3013, 7
      %v3016 = vshll.u32 %v2816, 16
      %v3018 = vor.u32 %v3015, %v3016
      %v3019 = vsel %vm506, %v3011, %v3018
      %v3020 = vrot.slane %v3015, 4
      %v3022 = vshrl.u32 %v2817, 16
      %v3024 = vrot.slane %v3022, 7
      %v3025 = vshll.u32 %v2817, 16
      %v3027 = vor.u32 %v3024, %v3025
      %v3028 = vrot.slane %v3024, 4
      %v3030 = vshrl.u32 %v2818, 16
      %v3032 = vrot.slane %v3030, 7
      %v3033 = vshll.u32 %v2818, 16
      %v3035 = vor.u32 %v3032, %v3033
      %v3036 = vsel %vm506, %v3028, %v3035
      %v3037 = vrot.slane %v3032, 4
      %v3039 = vshrl.u32 %v2819, 16
      %v3041 = vrot.slane %v3039, 7
      %v3042 = vshll.u32 %v2819, 16
      %v3044 = vor.u32 %v3041, %v3042
      %v3045 = vrot.slane %v3041, 4
      %v3047 = vshrl.u32 %v2820, 16
      %v3049 = vrot.slane %v3047, 7
      %v3050 = vshll.u32 %v2820, 16
      %v3052 = vor.u32 %v3049, %v3050
      %v3053 = vsel %vm506, %v3045, %v3052
      %v3054 = vrot.slane %v3049, 4
      %v3056 = vshrl.u32 %v2821, 16
      %v3058 = vrot.slane %v3056, 7
      %v3059 = vshll.u32 %v2821, 16
      %v3061 = vor.u32 %v3058, %v3059
      %v3062 = vrot.slane %v3058, 4
      %v3064 = vshrl.u32 %v2822, 16
      %v3066 = vrot.slane %v3064, 7
      %v3067 = vshll.u32 %v2822, 16
      %v3069 = vor.u32 %v3066, %v3067
      %v3070 = vsel %vm506, %v3062, %v3069
      %v3071 = vrot.slane %v3066, 4
      %v3073 = vshrl.u32 %v2823, 16
      %v3075 = vrot.slane %v3073, 7
      %v3076 = vshll.u32 %v2823, 16
      %v3078 = vor.u32 %v3075, %v3076
      %v3079 = vrot.slane %v3075, 4
      %v3081 = vshrl.u32 %v2824, 16
      %v3083 = vrot.slane %v3081, 7
      %v3084 = vshll.u32 %v2824, 16
      %v3086 = vor.u32 %v3083, %v3084
      %v3087 = vsel %vm506, %v3079, %v3086
      %v3088 = vrot.slane %v3083, 4
      %v3090 = vshrl.u32 %v2825, 16
      %v3092 = vrot.slane %v3090, 7
      %v3093 = vshll.u32 %v2825, 16
      %v3095 = vor.u32 %v3092, %v3093
      %v3096 = vrot.slane %v3092, 4
      %v3098 = vshrl.u32 %v2826, 16
      %v3100 = vrot.slane %v3098, 7
      %v3101 = vshll.u32 %v2826, 16
      %v3103 = vor.u32 %v3100, %v3101
      %v3104 = vsel %vm506, %v3096, %v3103
      %v3105 = vrot.slane %v3100, 4
      %v3107 = vshrl.u32 %v2827, 16
      %v3109 = vrot.slane %v3107, 7
      %v3110 = vshll.u32 %v2827, 16
      %v3112 = vor.u32 %v3109, %v3110
      %v3113 = vrot.slane %v3109, 4
      %v3115 = vshrl.u32 %v2828, 16
      %v3117 = vrot.slane %v3115, 7
      %v3118 = vshll.u32 %v2828, 16
      %v3120 = vor.u32 %v3117, %v3118
      %v3121 = vsel %vm506, %v3113, %v3120
      %v3122 = vrot.slane %v3117, 4
      %v3124 = vshrl.u32 %v2829, 16
      %v3126 = vrot.slane %v3124, 7
      %v3127 = vshll.u32 %v2829, 16
      %v3129 = vor.u32 %v3126, %v3127
      %v3130 = vrot.slane %v3126, 4
      %v3132 = vshrl.u32 %v2830, 16
      %v3134 = vrot.slane %v3132, 7
      %v3135 = vshll.u32 %v2830, 16
      %v3137 = vor.u32 %v3134, %v3135
      %v3138 = vsel %vm506, %v3130, %v3137
      %v3139 = vrot.slane %v3134, 4
      %v3141 = vshrl.u32 %v2831, 16
      %v3143 = vrot.slane %v3141, 7
      %v3144 = vshll.u32 %v2831, 16
      %v3146 = vor.u32 %v3143, %v3144
      %v3147 = vrot.slane %v3143, 4
      %v3149 = vshrl.u32 %v2832, 16
      %v3151 = vrot.slane %v3149, 7
      %v3152 = vshll.u32 %v2832, 16
      %v3154 = vor.u32 %v3151, %v3152
      %v3155 = vsel %vm506, %v3147, %v3154
      %v3156 = vrot.slane %v3151, 4
      %v3158 = vshrl.u32 %v2833, 16
      %v3160 = vrot.slane %v3158, 7
      %v3161 = vshll.u32 %v2833, 16
      %v3163 = vor.u32 %v3160, %v3161
      %v3164 = vrot.slane %v3160, 4
      %v3166 = vshrl.u32 %v2834, 16
      %v3168 = vrot.slane %v3166, 7
      %v3169 = vshll.u32 %v2834, 16
      %v3171 = vor.u32 %v3168, %v3169
      %v3172 = vsel %vm506, %v3164, %v3171
      %v3173 = vrot.slane %v3168, 4
      %v3175 = vshrl.u32 %v2835, 16
      %v3177 = vrot.slane %v3175, 7
      %v3178 = vshll.u32 %v2835, 16
      %v3180 = vor.u32 %v3177, %v3178
      %v3181 = vrot.slane %v3177, 4
      %v3183 = vshrl.u32 %v2836, 16
      %v3185 = vrot.slane %v3183, 7
      %v3186 = vshll.u32 %v2836, 16
      %v3188 = vor.u32 %v3185, %v3186
      %v3189 = vsel %vm506, %v3181, %v3188
      %v3190 = vrot.slane %v3185, 4
      %v3192 = vshrl.u32 %v2837, 16
      %v3194 = vrot.slane %v3192, 7
      %v3195 = vshll.u32 %v2837, 16
      %v3197 = vor.u32 %v3194, %v3195
      %v3198 = vrot.slane %v3194, 4
      %v3200 = vshrl.u32 %v2838, 16
      %v3202 = vrot.slane %v3200, 7
      %v3203 = vshll.u32 %v2838, 16
      %v3205 = vor.u32 %v3202, %v3203
      %v3206 = vsel %vm506, %v3198, %v3205
      %v3207 = vrot.slane %v3202, 4
      %v3209 = vshrl.u32 %v2839, 16
      %v3211 = vrot.slane %v3209, 7
      %v3212 = vshll.u32 %v2839, 16
      %v3214 = vor.u32 %v3211, %v3212
      %v3215 = vrot.slane %v3211, 4
      %v3217 = vshrl.u32 %v2840, 16
      %v3219 = vrot.slane %v3217, 7
      %v3220 = vshll.u32 %v2840, 16
      %v3222 = vor.u32 %v3219, %v3220
      %v3223 = vsel %vm506, %v3215, %v3222
      %v3224 = vrot.slane %v3219, 4
      %v3273 = vld [vmem:[%s2852] sm:$0xf]
      %v3274 = vsel %vm2904, %v2959, %v3273
      %3275 = vst [vmem:[%s2852] sm:$0xf] %v3274
      %3276 = vst.msk [vmem:[%s2852 + $0x4] sm:$0xf] %vm2841, %v2968
      %v3277 = vld [vmem:[%s2852 + $0x8] sm:$0x1]
      %v3278 = vsel %vm2854, %v2969, %v3277
      %3279 = vst [vmem:[%s2852 + $0x8] sm:$0x1] %v3278
      %v3280 = vld [vmem:[%s2852 + $0xc] sm:$0xf]
      %v3281 = vsel %vm2904, %v2976, %v3280
      %3282 = vst [vmem:[%s2852 + $0xc] sm:$0xf] %v3281
      %3283 = vst.msk [vmem:[%s2852 + $0x10] sm:$0xf] %vm2841, %v2985
      %v3284 = vld [vmem:[%s2852 + $0x14] sm:$0x1]
      %v3285 = vsel %vm2854, %v2986, %v3284
      %3286 = vst [vmem:[%s2852 + $0x14] sm:$0x1] %v3285
      %v3287 = vld [vmem:[%s2852 + $0x18] sm:$0xf]
      %v3288 = vsel %vm2904, %v2993, %v3287
      %3289 = vst [vmem:[%s2852 + $0x18] sm:$0xf] %v3288
      %3290 = vst.msk [vmem:[%s2852 + $0x1c] sm:$0xf] %vm2841, %v3002
      %v3291 = vld [vmem:[%s2852 + $0x20] sm:$0x1]
      %v3292 = vsel %vm2854, %v3003, %v3291
      %3293 = vst [vmem:[%s2852 + $0x20] sm:$0x1] %v3292
      %v3294 = vld [vmem:[%s2852 + $0x24] sm:$0xf]
      %v3295 = vsel %vm2904, %v3010, %v3294
      %3296 = vst [vmem:[%s2852 + $0x24] sm:$0xf] %v3295
      %3297 = vst.msk [vmem:[%s2852 + $0x28] sm:$0xf] %vm2841, %v3019
      %v3298 = vld [vmem:[%s2852 + $0x2c] sm:$0x1]
      %v3299 = vsel %vm2854, %v3020, %v3298
      %3300 = vst [vmem:[%s2852 + $0x2c] sm:$0x1] %v3299
      %v3301 = vld [vmem:[%s2852 + $0x30] sm:$0xf]
      %v3302 = vsel %vm2904, %v3027, %v3301
      %3303 = vst [vmem:[%s2852 + $0x30] sm:$0xf] %v3302
      %3304 = vst.msk [vmem:[%s2852 + $0x34] sm:$0xf] %vm2841, %v3036
      %v3305 = vld [vmem:[%s2852 + $0x38] sm:$0x1]
      %v3306 = vsel %vm2854, %v3037, %v3305
      %3307 = vst [vmem:[%s2852 + $0x38] sm:$0x1] %v3306
      %v3308 = vld [vmem:[%s2852 + $0x3c] sm:$0xf]
      %v3309 = vsel %vm2904, %v3044, %v3308
      %3310 = vst [vmem:[%s2852 + $0x3c] sm:$0xf] %v3309
      %3311 = vst.msk [vmem:[%s2852 + $0x40] sm:$0xf] %vm2841, %v3053
      %v3312 = vld [vmem:[%s2852 + $0x44] sm:$0x1]
      %v3313 = vsel %vm2854, %v3054, %v3312
      %3314 = vst [vmem:[%s2852 + $0x44] sm:$0x1] %v3313
      %v3315 = vld [vmem:[%s2852 + $0x48] sm:$0xf]
      %v3316 = vsel %vm2904, %v3061, %v3315
      %3317 = vst [vmem:[%s2852 + $0x48] sm:$0xf] %v3316
      %3318 = vst.msk [vmem:[%s2852 + $0x4c] sm:$0xf] %vm2841, %v3070
      %v3319 = vld [vmem:[%s2852 + $0x50] sm:$0x1]
      %v3320 = vsel %vm2854, %v3071, %v3319
      %3321 = vst [vmem:[%s2852 + $0x50] sm:$0x1] %v3320
      %v3322 = vld [vmem:[%s2852 + $0x54] sm:$0xf]
      %v3323 = vsel %vm2904, %v3078, %v3322
      %3324 = vst [vmem:[%s2852 + $0x54] sm:$0xf] %v3323
      %3325 = vst.msk [vmem:[%s2852 + $0x58] sm:$0xf] %vm2841, %v3087
      %v3326 = vld [vmem:[%s2852 + $0x5c] sm:$0x1]
      %v3327 = vsel %vm2854, %v3088, %v3326
      %3328 = vst [vmem:[%s2852 + $0x5c] sm:$0x1] %v3327
      %v3329 = vld [vmem:[%s2852 + $0x60] sm:$0xf]
      %v3330 = vsel %vm2904, %v3095, %v3329
      %3331 = vst [vmem:[%s2852 + $0x60] sm:$0xf] %v3330
      %3332 = vst.msk [vmem:[%s2852 + $0x64] sm:$0xf] %vm2841, %v3104
      %v3333 = vld [vmem:[%s2852 + $0x68] sm:$0x1]
      %v3334 = vsel %vm2854, %v3105, %v3333
      %3335 = vst [vmem:[%s2852 + $0x68] sm:$0x1] %v3334
      %v3336 = vld [vmem:[%s2852 + $0x6c] sm:$0xf]
      %v3337 = vsel %vm2904, %v3112, %v3336
      %3338 = vst [vmem:[%s2852 + $0x6c] sm:$0xf] %v3337
      %3339 = vst.msk [vmem:[%s2852 + $0x70] sm:$0xf] %vm2841, %v3121
      %v3340 = vld [vmem:[%s2852 + $0x74] sm:$0x1]
      %v3341 = vsel %vm2854, %v3122, %v3340
      %3342 = vst [vmem:[%s2852 + $0x74] sm:$0x1] %v3341
      %v3343 = vld [vmem:[%s2852 + $0x78] sm:$0xf]
      %v3344 = vsel %vm2904, %v3129, %v3343
      %3345 = vst [vmem:[%s2852 + $0x78] sm:$0xf] %v3344
      %3346 = vst.msk [vmem:[%s2852 + $0x7c] sm:$0xf] %vm2841, %v3138
      %v3347 = vld [vmem:[%s2852 + $0x80] sm:$0x1]
      %v3348 = vsel %vm2854, %v3139, %v3347
      %3349 = vst [vmem:[%s2852 + $0x80] sm:$0x1] %v3348
      %v3350 = vld [vmem:[%s2852 + $0x84] sm:$0xf]
      %v3351 = vsel %vm2904, %v3146, %v3350
      %3352 = vst [vmem:[%s2852 + $0x84] sm:$0xf] %v3351
      %3353 = vst.msk [vmem:[%s2852 + $0x88] sm:$0xf] %vm2841, %v3155
      %v3354 = vld [vmem:[%s2852 + $0x8c] sm:$0x1]
      %v3355 = vsel %vm2854, %v3156, %v3354
      %3356 = vst [vmem:[%s2852 + $0x8c] sm:$0x1] %v3355
      %v3357 = vld [vmem:[%s2852 + $0x90] sm:$0xf]
      %v3358 = vsel %vm2904, %v3163, %v3357
      %3359 = vst [vmem:[%s2852 + $0x90] sm:$0xf] %v3358
      %3360 = vst.msk [vmem:[%s2852 + $0x94] sm:$0xf] %vm2841, %v3172
      %v3361 = vld [vmem:[%s2852 + $0x98] sm:$0x1]
      %v3362 = vsel %vm2854, %v3173, %v3361
      %3363 = vst [vmem:[%s2852 + $0x98] sm:$0x1] %v3362
      %v3364 = vld [vmem:[%s2852 + $0x9c] sm:$0xf]
      %v3365 = vsel %vm2904, %v3180, %v3364
      %3366 = vst [vmem:[%s2852 + $0x9c] sm:$0xf] %v3365
      %3367 = vst.msk [vmem:[%s2852 + $0xa0] sm:$0xf] %vm2841, %v3189
      %v3368 = vld [vmem:[%s2852 + $0xa4] sm:$0x1]
      %v3369 = vsel %vm2854, %v3190, %v3368
      %3370 = vst [vmem:[%s2852 + $0xa4] sm:$0x1] %v3369
      %v3371 = vld [vmem:[%s2852 + $0xa8] sm:$0xf]
      %v3372 = vsel %vm2904, %v3197, %v3371
      %3373 = vst [vmem:[%s2852 + $0xa8] sm:$0xf] %v3372
      %3374 = vst.msk [vmem:[%s2852 + $0xac] sm:$0xf] %vm2841, %v3206
      %v3375 = vld [vmem:[%s2852 + $0xb0] sm:$0x1]
      %v3376 = vsel %vm2854, %v3207, %v3375
      %3377 = vst [vmem:[%s2852 + $0xb0] sm:$0x1] %v3376
      %v3378 = vld [vmem:[%s2852 + $0xb4] sm:$0xf]
      %v3379 = vsel %vm2904, %v3214, %v3378
      %3380 = vst [vmem:[%s2852 + $0xb4] sm:$0xf] %v3379
      %3381 = vst.msk [vmem:[%s2852 + $0xb8] sm:$0xf] %vm2841, %v3223
      %v3382 = vld [vmem:[%s2852 + $0xbc] sm:$0x1]
      %v3383 = vsel %vm2854, %v3224, %v3382
      %3384 = vst [vmem:[%s2852 + $0xbc] sm:$0x1] %v3383
      %v3385 = vld [vmem:[#allocation3] sm:$0xf]
      %v3386 = vld [vmem:[#allocation3 + $0x4] sm:$0xf]
      %v3387 = vld [vmem:[#allocation3 + $0x8] sm:$0xf]
      %v3388 = vld [vmem:[#allocation3 + $0xc] sm:$0xf]
      %v3389 = vld [vmem:[#allocation3 + $0x10] sm:$0xf]
      %v3390 = vld [vmem:[#allocation3 + $0x14] sm:$0xf]
      %v3391 = vld [vmem:[#allocation3 + $0x18] sm:$0xf]
      %v3392 = vld [vmem:[#allocation3 + $0x1c] sm:$0xf]
      %v3393 = vld [vmem:[#allocation3 + $0x20] sm:$0xf]
      %v3394 = vld [vmem:[#allocation3 + $0x24] sm:$0xf]
      %v3395 = vld [vmem:[#allocation3 + $0x28] sm:$0xf]
      %v3396 = vld [vmem:[#allocation3 + $0x2c] sm:$0xf]
      %v3397 = vld [vmem:[#allocation3 + $0x30] sm:$0xf]
      %v3398 = vld [vmem:[#allocation3 + $0x34] sm:$0xf]
      %v3399 = vld [vmem:[#allocation3 + $0x38] sm:$0xf]
      %v3400 = vld [vmem:[#allocation3 + $0x3c] sm:$0xf]
      %v3401 = vld [vmem:[#allocation3 + $0x40] sm:$0xf]
      %v3402 = vld [vmem:[#allocation3 + $0x44] sm:$0xf]
      %v3403 = vld [vmem:[#allocation3 + $0x48] sm:$0xf]
      %v3404 = vld [vmem:[#allocation3 + $0x4c] sm:$0xf]
      %v3405 = vld [vmem:[#allocation3 + $0x50] sm:$0xf]
      %v3406 = vld [vmem:[#allocation3 + $0x54] sm:$0xf]
      %v3407 = vld [vmem:[#allocation3 + $0x58] sm:$0xf]
      %v3408 = vld [vmem:[#allocation3 + $0x5c] sm:$0xf]
      %v3409 = vld [vmem:[#allocation3 + $0x60] sm:$0xf]
      %v3410 = vld [vmem:[#allocation3 + $0x64] sm:$0xf]
      %v3411 = vld [vmem:[#allocation3 + $0x68] sm:$0xf]
      %v3412 = vld [vmem:[#allocation3 + $0x6c] sm:$0xf]
      %v3413 = vld [vmem:[#allocation3 + $0x70] sm:$0xf]
      %v3414 = vld [vmem:[#allocation3 + $0x74] sm:$0xf]
      %v3415 = vld [vmem:[#allocation3 + $0x78] sm:$0xf]
      %v3416 = vld [vmem:[#allocation3 + $0x7c] sm:$0xf]
      %v3417 = vld [vmem:[#allocation3 + $0x80] sm:$0xf]
      %v3418 = vld [vmem:[#allocation3 + $0x84] sm:$0xf]
      %v3419 = vld [vmem:[#allocation3 + $0x88] sm:$0xf]
      %v3420 = vld [vmem:[#allocation3 + $0x8c] sm:$0xf]
      %v3421 = vld [vmem:[#allocation3 + $0x90] sm:$0xf]
      %v3422 = vld [vmem:[#allocation3 + $0x94] sm:$0xf]
      %v3423 = vld [vmem:[#allocation3 + $0x98] sm:$0xf]
      %v3424 = vld [vmem:[#allocation3 + $0x9c] sm:$0xf]
      %v3425 = vld [vmem:[#allocation3 + $0xa0] sm:$0xf]
      %v3426 = vld [vmem:[#allocation3 + $0xa4] sm:$0xf]
      %v3427 = vld [vmem:[#allocation3 + $0xa8] sm:$0xf]
      %v3428 = vld [vmem:[#allocation3 + $0xac] sm:$0xf]
      %v3429 = vld [vmem:[#allocation3 + $0xb0] sm:$0xf]
      %v3430 = vld [vmem:[#allocation3 + $0xb4] sm:$0xf]
      %v3431 = vld [vmem:[#allocation3 + $0xb8] sm:$0xf]
      %v3432 = vld [vmem:[#allocation3 + $0xbc] sm:$0xf]
      %v3433 = vld [vmem:[#allocation3 + $0xc0] sm:$0xf]
      %v3434 = vld [vmem:[#allocation3 + $0xc4] sm:$0xf]
      %v3435 = vld [vmem:[#allocation3 + $0xc8] sm:$0xf]
      %v3436 = vld [vmem:[#allocation3 + $0xcc] sm:$0xf]
      %v3437 = vld [vmem:[#allocation3 + $0xd0] sm:$0xf]
      %v3438 = vld [vmem:[#allocation3 + $0xd4] sm:$0xf]
      %v3439 = vld [vmem:[#allocation3 + $0xd8] sm:$0xf]
      %v3494 = vunpack.c.l.b16 %v3385
      %v3495 = vunpack.c.l.b16 %v3386
      %v3496 = vunpack.c.l.b16 %v3387
      %v3497 = vunpack.c.l.b16 %v3388
      %v3498 = vunpack.c.l.b16 %v3389
      %v3499 = vunpack.c.l.b16 %v3390
      %v3500 = vunpack.c.l.b16 %v3391
      %v3501 = vunpack.c.l.b16 %v3392
      %v3502 = vunpack.c.l.b16 %v3393
      %v3503 = vunpack.c.l.b16 %v3394
      %v3504 = vunpack.c.l.b16 %v3395
      %v3505 = vunpack.c.l.b16 %v3396
      %v3506 = vunpack.c.l.b16 %v3397
      %v3507 = vunpack.c.l.b16 %v3398
      %v3508 = vunpack.c.l.b16 %v3399
      %v3509 = vunpack.c.l.b16 %v3400
      %v3510 = vunpack.c.l.b16 %v3401
      %v3511 = vunpack.c.l.b16 %v3402
      %v3512 = vunpack.c.l.b16 %v3403
      %v3513 = vunpack.c.l.b16 %v3404
      %v3514 = vunpack.c.l.b16 %v3405
      %v3515 = vunpack.c.l.b16 %v3406
      %v3516 = vunpack.c.l.b16 %v3407
      %v3517 = vunpack.c.l.b16 %v3408
      %v3518 = vunpack.c.l.b16 %v3409
      %v3519 = vunpack.c.l.b16 %v3410
      %v3520 = vunpack.c.l.b16 %v3411
      %v3521 = vunpack.c.l.b16 %v3412
      %v3522 = vunpack.c.l.b16 %v3413
      %v3523 = vunpack.c.l.b16 %v3414
      %v3524 = vunpack.c.l.b16 %v3415
      %v3525 = vunpack.c.l.b16 %v3416
      %v3526 = vunpack.c.l.b16 %v3417
      %v3527 = vunpack.c.l.b16 %v3418
      %v3528 = vunpack.c.l.b16 %v3419
      %v3529 = vunpack.c.l.b16 %v3420
      %v3530 = vunpack.c.l.b16 %v3421
      %v3531 = vunpack.c.l.b16 %v3422
      %v3532 = vunpack.c.l.b16 %v3423
      %v3533 = vunpack.c.l.b16 %v3424
      %v3534 = vunpack.c.l.b16 %v3425
      %v3535 = vunpack.c.l.b16 %v3426
      %v3536 = vunpack.c.l.b16 %v3427
      %v3537 = vunpack.c.l.b16 %v3428
      %v3538 = vunpack.c.l.b16 %v3429
      %v3539 = vunpack.c.l.b16 %v3430
      %v3540 = vunpack.c.l.b16 %v3431
      %v3541 = vunpack.c.l.b16 %v3432
      %v3542 = vunpack.c.l.b16 %v3433
      %v3543 = vunpack.c.l.b16 %v3434
      %v3544 = vunpack.c.l.b16 %v3435
      %v3545 = vunpack.c.l.b16 %v3436
      %v3546 = vunpack.c.l.b16 %v3437
      %v3547 = vunpack.c.l.b16 %v3438
      %v3548 = vpack.c.b16 %v3495, %v3494
      %v3549 = vpack.c.b16 %v3497, %v3496
      %v3550 = vpack.c.b16 %v3499, %v3498
      %v3551 = vpack.c.b16 %v3501, %v3500
      %v3552 = vpack.c.b16 %v3503, %v3502
      %v3553 = vpack.c.b16 %v3505, %v3504
      %v3554 = vpack.c.b16 %v3507, %v3506
      %v3555 = vpack.c.b16 %v3509, %v3508
      %v3556 = vpack.c.b16 %v3511, %v3510
      %v3557 = vpack.c.b16 %v3513, %v3512
      %v3558 = vpack.c.b16 %v3515, %v3514
      %v3559 = vpack.c.b16 %v3517, %v3516
      %v3560 = vpack.c.b16 %v3519, %v3518
      %v3561 = vpack.c.b16 %v3521, %v3520
      %v3562 = vpack.c.b16 %v3523, %v3522
      %v3563 = vpack.c.b16 %v3525, %v3524
      %v3564 = vpack.c.b16 %v3527, %v3526
      %v3565 = vpack.c.b16 %v3529, %v3528
      %v3566 = vpack.c.b16 %v3531, %v3530
      %v3567 = vpack.c.b16 %v3533, %v3532
      %v3568 = vpack.c.b16 %v3535, %v3534
      %v3569 = vpack.c.b16 %v3537, %v3536
      %v3570 = vpack.c.b16 %v3539, %v3538
      %v3571 = vpack.c.b16 %v3541, %v3540
      %v3572 = vpack.c.b16 %v3543, %v3542
      %v3573 = vpack.c.b16 %v3545, %v3544
      %v3574 = vpack.c.b16 %v3547, %v3546
      %v3576 = vunpack.c.l.b16 %v3439
      %v3577 = vpack.c.b16 %v3576, %v3576
      %v3579 = vshrl.u32 %v3548, 16
      %v3581 = vshll.u32 %v3548, 16
      %v3583 = vrot.slane %v3581, 1
      %v3584 = vor.u32 %v3579, %v3583
      %v3586 = vshll.u32 %v3549, 16
      %v3588 = vrot.slane %v3586, 1
      %v3589 = vsel %vm1132, %v3584, %v3588
      %v3590 = vshrl.u32 %v3549, 16
      %v3592 = vor.u32 %v3590, %v3588
      %v3594 = vshll.u32 %v3550, 16
      %v3596 = vrot.slane %v3594, 1
      %v3597 = vsel %vm1132, %v3592, %v3596
      %v3598 = vshrl.u32 %v3550, 16
      %v3600 = vor.u32 %v3598, %v3596
      %v3602 = vshll.u32 %v3551, 16
      %v3604 = vrot.slane %v3602, 1
      %v3605 = vsel %vm1132, %v3600, %v3604
      %v3606 = vshrl.u32 %v3551, 16
      %v3608 = vor.u32 %v3606, %v3604
      %v3610 = vshll.u32 %v3552, 16
      %v3612 = vrot.slane %v3610, 1
      %v3613 = vsel %vm1132, %v3608, %v3612
      %v3614 = vshrl.u32 %v3552, 16
      %v3616 = vor.u32 %v3614, %v3612
      %v3618 = vshll.u32 %v3553, 16
      %v3620 = vrot.slane %v3618, 1
      %v3621 = vsel %vm1132, %v3616, %v3620
      %v3622 = vshrl.u32 %v3553, 16
      %v3624 = vor.u32 %v3622, %v3620
      %v3626 = vshll.u32 %v3554, 16
      %v3628 = vrot.slane %v3626, 1
      %v3629 = vsel %vm1132, %v3624, %v3628
      %v3630 = vshrl.u32 %v3554, 16
      %v3632 = vor.u32 %v3630, %v3628
      %v3634 = vshll.u32 %v3555, 16
      %v3636 = vrot.slane %v3634, 1
      %v3637 = vsel %vm1132, %v3632, %v3636
      %v3638 = vshrl.u32 %v3555, 16
      %v3640 = vor.u32 %v3638, %v3636
      %v3642 = vshll.u32 %v3556, 16
      %v3644 = vrot.slane %v3642, 1
      %v3645 = vsel %vm1132, %v3640, %v3644
      %v3646 = vshrl.u32 %v3556, 16
      %v3648 = vor.u32 %v3646, %v3644
      %v3650 = vshll.u32 %v3557, 16
      %v3652 = vrot.slane %v3650, 1
      %v3653 = vsel %vm1132, %v3648, %v3652
      %v3654 = vshrl.u32 %v3557, 16
      %v3656 = vor.u32 %v3654, %v3652
      %v3658 = vshll.u32 %v3558, 16
      %v3660 = vrot.slane %v3658, 1
      %v3661 = vsel %vm1132, %v3656, %v3660
      %v3662 = vshrl.u32 %v3558, 16
      %v3664 = vor.u32 %v3662, %v3660
      %v3666 = vshll.u32 %v3559, 16
      %v3668 = vrot.slane %v3666, 1
      %v3669 = vsel %vm1132, %v3664, %v3668
      %v3670 = vshrl.u32 %v3559, 16
      %v3672 = vor.u32 %v3670, %v3668
      %v3674 = vshll.u32 %v3560, 16
      %v3676 = vrot.slane %v3674, 1
      %v3677 = vsel %vm1132, %v3672, %v3676
      %v3678 = vshrl.u32 %v3560, 16
      %v3680 = vor.u32 %v3678, %v3676
      %v3682 = vshll.u32 %v3561, 16
      %v3684 = vrot.slane %v3682, 1
      %v3685 = vsel %vm1132, %v3680, %v3684
      %v3686 = vshrl.u32 %v3561, 16
      %v3688 = vor.u32 %v3686, %v3684
      %v3690 = vshll.u32 %v3562, 16
      %v3692 = vrot.slane %v3690, 1
      %v3693 = vsel %vm1132, %v3688, %v3692
      %v3694 = vshrl.u32 %v3562, 16
      %v3696 = vor.u32 %v3694, %v3692
      %v3698 = vshll.u32 %v3563, 16
      %v3700 = vrot.slane %v3698, 1
      %v3701 = vsel %vm1132, %v3696, %v3700
      %v3702 = vshrl.u32 %v3563, 16
      %v3704 = vor.u32 %v3702, %v3700
      %v3706 = vshll.u32 %v3564, 16
      %v3708 = vrot.slane %v3706, 1
      %v3709 = vsel %vm1132, %v3704, %v3708
      %v3710 = vshrl.u32 %v3564, 16
      %v3712 = vor.u32 %v3710, %v3708
      %v3714 = vshll.u32 %v3565, 16
      %v3716 = vrot.slane %v3714, 1
      %v3717 = vsel %vm1132, %v3712, %v3716
      %v3718 = vshrl.u32 %v3565, 16
      %v3720 = vor.u32 %v3718, %v3716
      %v3722 = vshll.u32 %v3566, 16
      %v3724 = vrot.slane %v3722, 1
      %v3725 = vsel %vm1132, %v3720, %v3724
      %v3726 = vshrl.u32 %v3566, 16
      %v3728 = vor.u32 %v3726, %v3724
      %v3730 = vshll.u32 %v3567, 16
      %v3732 = vrot.slane %v3730, 1
      %v3733 = vsel %vm1132, %v3728, %v3732
      %v3734 = vshrl.u32 %v3567, 16
      %v3736 = vor.u32 %v3734, %v3732
      %v3738 = vshll.u32 %v3568, 16
      %v3740 = vrot.slane %v3738, 1
      %v3741 = vsel %vm1132, %v3736, %v3740
      %v3742 = vshrl.u32 %v3568, 16
      %v3744 = vor.u32 %v3742, %v3740
      %v3746 = vshll.u32 %v3569, 16
      %v3748 = vrot.slane %v3746, 1
      %v3749 = vsel %vm1132, %v3744, %v3748
      %v3750 = vshrl.u32 %v3569, 16
      %v3752 = vor.u32 %v3750, %v3748
      %v3754 = vshll.u32 %v3570, 16
      %v3756 = vrot.slane %v3754, 1
      %v3757 = vsel %vm1132, %v3752, %v3756
      %v3758 = vshrl.u32 %v3570, 16
      %v3760 = vor.u32 %v3758, %v3756
      %v3762 = vshll.u32 %v3571, 16
      %v3764 = vrot.slane %v3762, 1
      %v3765 = vsel %vm1132, %v3760, %v3764
      %v3766 = vshrl.u32 %v3571, 16
      %v3768 = vor.u32 %v3766, %v3764
      %v3770 = vshll.u32 %v3572, 16
      %v3772 = vrot.slane %v3770, 1
      %v3773 = vsel %vm1132, %v3768, %v3772
      %v3774 = vshrl.u32 %v3572, 16
      %v3776 = vor.u32 %v3774, %v3772
      %v3778 = vshll.u32 %v3573, 16
      %v3780 = vrot.slane %v3778, 1
      %v3781 = vsel %vm1132, %v3776, %v3780
      %v3782 = vshrl.u32 %v3573, 16
      %v3784 = vor.u32 %v3782, %v3780
      %v3786 = vshll.u32 %v3574, 16
      %v3788 = vrot.slane %v3786, 1
      %v3789 = vsel %vm1132, %v3784, %v3788
      %v3790 = vshrl.u32 %v3574, 16
      %v3792 = vor.u32 %v3790, %v3788
      %v3794 = vshll.u32 %v3577, 16
      %v3796 = vrot.slane %v3794, 1
      %v3797 = vsel %vm1132, %v3792, %v3796
      %3798 = vrot.lane.b32.xlu0 %v3589, 8
      %v3799 = vpop.permute.xlu0 %3798
      %3800 = vrot.lane.b32.xlu0 %v3597, 8
      %v3801 = vpop.permute.xlu0 %3800
      %3802 = vrot.lane.b32.xlu0 %v3605, 8
      %v3803 = vpop.permute.xlu0 %3802
      %3804 = vrot.lane.b32.xlu0 %v3613, 8
      %v3805 = vpop.permute.xlu0 %3804
      %3806 = vrot.lane.b32.xlu0 %v3621, 8
      %v3807 = vpop.permute.xlu0 %3806
      %3808 = vrot.lane.b32.xlu0 %v3629, 8
      %v3809 = vpop.permute.xlu0 %3808
      %3810 = vrot.lane.b32.xlu0 %v3637, 8
      %v3811 = vpop.permute.xlu0 %3810
      %3812 = vrot.lane.b32.xlu0 %v3645, 8
      %v3813 = vpop.permute.xlu0 %3812
      %3814 = vrot.lane.b32.xlu0 %v3653, 8
      %v3815 = vpop.permute.xlu0 %3814
      %3816 = vrot.lane.b32.xlu0 %v3661, 8
      %v3817 = vpop.permute.xlu0 %3816
      %3818 = vrot.lane.b32.xlu0 %v3669, 8
      %v3819 = vpop.permute.xlu0 %3818
      %3820 = vrot.lane.b32.xlu0 %v3677, 8
      %v3821 = vpop.permute.xlu0 %3820
      %3822 = vrot.lane.b32.xlu0 %v3685, 8
      %v3823 = vpop.permute.xlu0 %3822
      %3824 = vrot.lane.b32.xlu0 %v3693, 8
      %v3825 = vpop.permute.xlu0 %3824
      %3826 = vrot.lane.b32.xlu0 %v3701, 8
      %v3827 = vpop.permute.xlu0 %3826
      %3828 = vrot.lane.b32.xlu0 %v3709, 8
      %v3829 = vpop.permute.xlu0 %3828
      %3830 = vrot.lane.b32.xlu0 %v3717, 8
      %v3831 = vpop.permute.xlu0 %3830
      %3832 = vrot.lane.b32.xlu0 %v3725, 8
      %v3833 = vpop.permute.xlu0 %3832
      %3834 = vrot.lane.b32.xlu0 %v3733, 8
      %v3835 = vpop.permute.xlu0 %3834
      %3836 = vrot.lane.b32.xlu0 %v3741, 8
      %v3837 = vpop.permute.xlu0 %3836
      %3838 = vrot.lane.b32.xlu0 %v3749, 8
      %v3839 = vpop.permute.xlu0 %3838
      %3840 = vrot.lane.b32.xlu0 %v3757, 8
      %v3841 = vpop.permute.xlu0 %3840
      %3842 = vrot.lane.b32.xlu0 %v3765, 8
      %v3843 = vpop.permute.xlu0 %3842
      %3844 = vrot.lane.b32.xlu0 %v3773, 8
      %v3845 = vpop.permute.xlu0 %3844
      %3846 = vrot.lane.b32.xlu0 %v3781, 8
      %v3847 = vpop.permute.xlu0 %3846
      %3848 = vrot.lane.b32.xlu0 %v3789, 8
      %v3849 = vpop.permute.xlu0 %3848
      %3850 = vrot.lane.b32.xlu0 %v3797, 8
      %v3851 = vpop.permute.xlu0 %3850
      %v3852 = vrot.slane %v3548, 1
      %v3853 = vrot.slane %v3549, 1
      %v3854 = vsel %vm1407, %v3852, %v3853
      %v3855 = vrot.slane %v3550, 1
      %v3856 = vsel %vm1407, %v3853, %v3855
      %v3857 = vrot.slane %v3551, 1
      %v3858 = vsel %vm1407, %v3855, %v3857
      %v3859 = vrot.slane %v3552, 1
      %v3860 = vsel %vm1407, %v3857, %v3859
      %v3861 = vrot.slane %v3553, 1
      %v3862 = vsel %vm1407, %v3859, %v3861
      %v3863 = vrot.slane %v3554, 1
      %v3864 = vsel %vm1407, %v3861, %v3863
      %v3865 = vrot.slane %v3555, 1
      %v3866 = vsel %vm1407, %v3863, %v3865
      %v3867 = vrot.slane %v3556, 1
      %v3868 = vsel %vm1407, %v3865, %v3867
      %v3869 = vrot.slane %v3557, 1
      %v3870 = vsel %vm1407, %v3867, %v3869
      %v3871 = vrot.slane %v3558, 1
      %v3872 = vsel %vm1407, %v3869, %v3871
      %v3873 = vrot.slane %v3559, 1
      %v3874 = vsel %vm1407, %v3871, %v3873
      %v3875 = vrot.slane %v3560, 1
      %v3876 = vsel %vm1407, %v3873, %v3875
      %v3877 = vrot.slane %v3561, 1
      %v3878 = vsel %vm1407, %v3875, %v3877
      %v3879 = vrot.slane %v3562, 1
      %v3880 = vsel %vm1407, %v3877, %v3879
      %v3881 = vrot.slane %v3563, 1
      %v3882 = vsel %vm1407, %v3879, %v3881
      %v3883 = vrot.slane %v3564, 1
      %v3884 = vsel %vm1407, %v3881, %v3883
      %v3885 = vrot.slane %v3565, 1
      %v3886 = vsel %vm1407, %v3883, %v3885
      %v3887 = vrot.slane %v3566, 1
      %v3888 = vsel %vm1407, %v3885, %v3887
      %v3889 = vrot.slane %v3567, 1
      %v3890 = vsel %vm1407, %v3887, %v3889
      %v3891 = vrot.slane %v3568, 1
      %v3892 = vsel %vm1407, %v3889, %v3891
      %v3893 = vrot.slane %v3569, 1
      %v3894 = vsel %vm1407, %v3891, %v3893
      %v3895 = vrot.slane %v3570, 1
      %v3896 = vsel %vm1407, %v3893, %v3895
      %v3897 = vrot.slane %v3571, 1
      %v3898 = vsel %vm1407, %v3895, %v3897
      %v3899 = vrot.slane %v3572, 1
      %v3900 = vsel %vm1407, %v3897, %v3899
      %v3901 = vrot.slane %v3573, 1
      %v3902 = vsel %vm1407, %v3899, %v3901
      %v3903 = vrot.slane %v3574, 1
      %v3904 = vsel %vm1407, %v3901, %v3903
      %v3905 = vrot.slane %v3577, 1
      %v3906 = vsel %vm1407, %v3903, %v3905
      %3907 = vrot.lane.b32.xlu0 %v3854, 16
      %v3908 = vpop.permute.xlu0 %3907
      %3909 = vrot.lane.b32.xlu0 %v3856, 16
      %v3910 = vpop.permute.xlu0 %3909
      %3911 = vrot.lane.b32.xlu0 %v3858, 16
      %v3912 = vpop.permute.xlu0 %3911
      %3913 = vrot.lane.b32.xlu0 %v3860, 16
      %v3914 = vpop.permute.xlu0 %3913
      %3915 = vrot.lane.b32.xlu0 %v3862, 16
      %v3916 = vpop.permute.xlu0 %3915
      %3917 = vrot.lane.b32.xlu0 %v3864, 16
      %v3918 = vpop.permute.xlu0 %3917
      %3919 = vrot.lane.b32.xlu0 %v3866, 16
      %v3920 = vpop.permute.xlu0 %3919
      %3921 = vrot.lane.b32.xlu0 %v3868, 16
      %v3922 = vpop.permute.xlu0 %3921
      %3923 = vrot.lane.b32.xlu0 %v3870, 16
      %v3924 = vpop.permute.xlu0 %3923
      %3925 = vrot.lane.b32.xlu0 %v3872, 16
      %v3926 = vpop.permute.xlu0 %3925
      %3927 = vrot.lane.b32.xlu0 %v3874, 16
      %v3928 = vpop.permute.xlu0 %3927
      %3929 = vrot.lane.b32.xlu0 %v3876, 16
      %v3930 = vpop.permute.xlu0 %3929
      %3931 = vrot.lane.b32.xlu0 %v3878, 16
      %v3932 = vpop.permute.xlu0 %3931
      %3933 = vrot.lane.b32.xlu0 %v3880, 16
      %v3934 = vpop.permute.xlu0 %3933
      %3935 = vrot.lane.b32.xlu0 %v3882, 16
      %v3936 = vpop.permute.xlu0 %3935
      %3937 = vrot.lane.b32.xlu0 %v3884, 16
      %v3938 = vpop.permute.xlu0 %3937
      %3939 = vrot.lane.b32.xlu0 %v3886, 16
      %v3940 = vpop.permute.xlu0 %3939
      %3941 = vrot.lane.b32.xlu0 %v3888, 16
      %v3942 = vpop.permute.xlu0 %3941
      %3943 = vrot.lane.b32.xlu0 %v3890, 16
      %v3944 = vpop.permute.xlu0 %3943
      %3945 = vrot.lane.b32.xlu0 %v3892, 16
      %v3946 = vpop.permute.xlu0 %3945
      %3947 = vrot.lane.b32.xlu0 %v3894, 16
      %v3948 = vpop.permute.xlu0 %3947
      %3949 = vrot.lane.b32.xlu0 %v3896, 16
      %v3950 = vpop.permute.xlu0 %3949
      %3951 = vrot.lane.b32.xlu0 %v3898, 16
      %v3952 = vpop.permute.xlu0 %3951
      %3953 = vrot.lane.b32.xlu0 %v3900, 16
      %v3954 = vpop.permute.xlu0 %3953
      %3955 = vrot.lane.b32.xlu0 %v3902, 16
      %v3956 = vpop.permute.xlu0 %3955
      %3957 = vrot.lane.b32.xlu0 %v3904, 16
      %v3958 = vpop.permute.xlu0 %3957
      %3959 = vrot.lane.b32.xlu0 %v3906, 16
      %v3960 = vpop.permute.xlu0 %3959
      %v3962 = vsel %vm1572, %v3548, %v3799
      %v3964 = vsel %vm1572, %v3549, %v3801
      %v3966 = vsel %vm1572, %v3550, %v3803
      %v3968 = vsel %vm1572, %v3551, %v3805
      %v3970 = vsel %vm1572, %v3552, %v3807
      %v3972 = vsel %vm1572, %v3553, %v3809
      %v3974 = vsel %vm1572, %v3554, %v3811
      %v3976 = vsel %vm1572, %v3555, %v3813
      %v3978 = vsel %vm1572, %v3556, %v3815
      %v3980 = vsel %vm1572, %v3557, %v3817
      %v3982 = vsel %vm1572, %v3558, %v3819
      %v3984 = vsel %vm1572, %v3559, %v3821
      %v3986 = vsel %vm1572, %v3560, %v3823
      %v3988 = vsel %vm1572, %v3561, %v3825
      %v3990 = vsel %vm1572, %v3562, %v3827
      %v3992 = vsel %vm1572, %v3563, %v3829
      %v3994 = vsel %vm1572, %v3564, %v3831
      %v3996 = vsel %vm1572, %v3565, %v3833
      %v3998 = vsel %vm1572, %v3566, %v3835
      %v4000 = vsel %vm1572, %v3567, %v3837
      %v4002 = vsel %vm1572, %v3568, %v3839
      %v4004 = vsel %vm1572, %v3569, %v3841
      %v4006 = vsel %vm1572, %v3570, %v3843
      %v4008 = vsel %vm1572, %v3571, %v3845
      %v4010 = vsel %vm1572, %v3572, %v3847
      %v4012 = vsel %vm1572, %v3573, %v3849
      %v4014 = vsel %vm1572, %v3574, %v3851
      %vm4015 = vcmask 130048
      %v4017 = vsel %vm4015, %v3962, %v3908
      %v4019 = vsel %vm4015, %v3964, %v3910
      %v4021 = vsel %vm4015, %v3966, %v3912
      %v4023 = vsel %vm4015, %v3968, %v3914
      %v4025 = vsel %vm4015, %v3970, %v3916
      %v4027 = vsel %vm4015, %v3972, %v3918
      %v4029 = vsel %vm4015, %v3974, %v3920
      %v4031 = vsel %vm4015, %v3976, %v3922
      %v4033 = vsel %vm4015, %v3978, %v3924
      %v4035 = vsel %vm4015, %v3980, %v3926
      %v4037 = vsel %vm4015, %v3982, %v3928
      %v4039 = vsel %vm4015, %v3984, %v3930
      %v4041 = vsel %vm4015, %v3986, %v3932
      %v4043 = vsel %vm4015, %v3988, %v3934
      %v4045 = vsel %vm4015, %v3990, %v3936
      %v4047 = vsel %vm4015, %v3992, %v3938
      %v4049 = vsel %vm4015, %v3994, %v3940
      %v4051 = vsel %vm4015, %v3996, %v3942
      %v4053 = vsel %vm4015, %v3998, %v3944
      %v4055 = vsel %vm4015, %v4000, %v3946
      %v4057 = vsel %vm4015, %v4002, %v3948
      %v4059 = vsel %vm4015, %v4004, %v3950
      %v4061 = vsel %vm4015, %v4006, %v3952
      %v4063 = vsel %vm4015, %v4008, %v3954
      %v4065 = vsel %vm4015, %v4010, %v3956
      %v4067 = vsel %vm4015, %v4012, %v3958
      %v4069 = vsel %vm4015, %v4014, %v3960
      %v4070 = vld [vmem:[%s2] sm:$0xf]
      %v4071 = vld [vmem:[%s2 + $0x4] sm:$0xf]
      %v4072 = vld [vmem:[%s2 + $0x8] sm:$0xf]
      %s4073 = scalar_lea.vmem %s2, 12
      %v4074 = vld [vmem:[%s4073] sm:$0xf]
      %v4075 = vld [vmem:[%s4073 + $0x4] sm:$0xf]
      %v4076 = vld [vmem:[%s4073 + $0x8] sm:$0xf]
      %v4102 = vrot.slane %v4019, 4
      %v4103 = vrot.slane %v4021, 4
      %v4104 = vsel %vm1657, %v4102, %v4103
      %v4105 = vrot.slane %v4023, 4
      %v4106 = vsel %vm1657, %v4103, %v4105
      %v4107 = vrot.slane %v4025, 4
      %v4108 = vsel %vm1657, %v4105, %v4107
      %v4109 = vrot.slane %v4027, 4
      %v4110 = vsel %vm1657, %v4107, %v4109
      %v4111 = vrot.slane %v4029, 4
      %v4112 = vsel %vm1657, %v4109, %v4111
      %v4113 = vrot.slane %v4031, 4
      %v4114 = vsel %vm1657, %v4111, %v4113
      %v4115 = vrot.slane %v4033, 4
      %v4116 = vsel %vm1657, %v4113, %v4115
      %v4117 = vrot.slane %v4035, 4
      %v4118 = vsel %vm1657, %v4115, %v4117
      %v4119 = vrot.slane %v4037, 4
      %v4120 = vsel %vm1657, %v4117, %v4119
      %v4121 = vrot.slane %v4039, 4
      %v4122 = vsel %vm1657, %v4119, %v4121
      %v4123 = vrot.slane %v4041, 4
      %v4124 = vsel %vm1657, %v4121, %v4123
      %v4125 = vrot.slane %v4043, 4
      %v4126 = vsel %vm1657, %v4123, %v4125
      %v4127 = vrot.slane %v4045, 4
      %v4128 = vsel %vm1657, %v4125, %v4127
      %v4129 = vrot.slane %v4047, 4
      %v4130 = vsel %vm1657, %v4127, %v4129
      %v4131 = vrot.slane %v4049, 4
      %v4132 = vsel %vm1657, %v4129, %v4131
      %v4133 = vrot.slane %v4051, 4
      %v4134 = vsel %vm1657, %v4131, %v4133
      %v4135 = vrot.slane %v4053, 4
      %v4136 = vsel %vm1657, %v4133, %v4135
      %v4137 = vrot.slane %v4055, 4
      %v4138 = vsel %vm1657, %v4135, %v4137
      %v4139 = vrot.slane %v4057, 4
      %v4140 = vsel %vm1657, %v4137, %v4139
      %v4141 = vrot.slane %v4059, 4
      %v4142 = vsel %vm1657, %v4139, %v4141
      %v4143 = vrot.slane %v4061, 4
      %v4144 = vsel %vm1657, %v4141, %v4143
      %v4145 = vrot.slane %v4063, 4
      %v4146 = vsel %vm1657, %v4143, %v4145
      %v4147 = vrot.slane %v4065, 4
      %v4148 = vsel %vm1657, %v4145, %v4147
      %v4149 = vrot.slane %v4067, 4
      %v4150 = vsel %vm1657, %v4147, %v4149
      %v4154 = vunpack.c.l.b16 %v4074
      %v4155 = vunpack.c.l.b16 %v4075
      %v4156 = vunpack.c.l.b16 %v4076
      %v4157 = vpack.c.b16 %v4155, %v4154
      %v4158 = vpack.c.b16 %v4156, %v4156
      %vm4160 = vcmask 195584
      %v4162 = vsel %vm4160, %v4104, 0
      %v4165 = vsel %vm4160, %v4106, 0
      %v4168 = vsel %vm4160, %v4108, 0
      %v4171 = vsel %vm4160, %v4110, 0
      %v4174 = vsel %vm4160, %v4112, 0
      %v4177 = vsel %vm4160, %v4114, 0
      %v4180 = vsel %vm4160, %v4116, 0
      %v4183 = vsel %vm4160, %v4118, 0
      %v4186 = vsel %vm4160, %v4120, 0
      %v4189 = vsel %vm4160, %v4122, 0
      %v4192 = vsel %vm4160, %v4124, 0
      %v4195 = vsel %vm4160, %v4126, 0
      %v4198 = vsel %vm4160, %v4128, 0
      %v4201 = vsel %vm4160, %v4130, 0
      %v4204 = vsel %vm4160, %v4132, 0
      %v4207 = vsel %vm4160, %v4134, 0
      %v4210 = vsel %vm4160, %v4136, 0
      %v4213 = vsel %vm4160, %v4138, 0
      %v4216 = vsel %vm4160, %v4140, 0
      %v4219 = vsel %vm4160, %v4142, 0
      %v4222 = vsel %vm4160, %v4144, 0
      %v4225 = vsel %vm4160, %v4146, 0
      %v4228 = vsel %vm4160, %v4148, 0
      %v4231 = vsel %vm4160, %v4150, 0
      %vm4233 = vcmask 1043456
      %v4235 = vsel %vm4233, %v4158, 0
      %4237 = vmatprep.subr.bf16.mxu0 0
      %4238 = vmatpush1.bf16.msra.mxu0 0
      %4239 = vmatprep.subr.bf16.mxu0 0
      %4240 = vmatpush1.bf16.msra.mxu0 0
      %4241 = vmatprep.subr.bf16.mxu0 0
      %4242 = vmatpush1.bf16.msra.mxu0 0
      %4243 = vmatprep.subr.bf16.mxu0 0
      %4244 = vmatpush1.bf16.msra.mxu0 0
      %4245 = vmatprep.subr.bf16.mxu0 0
      %4246 = vmatpush1.bf16.msra.mxu0 0
      %4247 = vmatprep.subr.bf16.mxu0 0
      %4248 = vmatpush1.bf16.msra.mxu0 0
      %4249 = vmatprep.subr.bf16.mxu0 0
      %4250 = vmatpush1.bf16.msra.mxu0 %v4235
      %4251 = vmatprep.subr.bf16.mxu0 0
      %4252 = vmatpush1.bf16.msra.mxu0 %v4157
      %4253 = vmatprep.subr.bf16.mxu0 0
      %4254 = vmatpush2.bf16.msra.mxu0 0
      %4255 = vmatprep.subr.bf16.mxu0 0
      %4256 = vmatpush2.bf16.msra.mxu0 0
      %4257 = vmatprep.subr.bf16.mxu0 0
      %4258 = vmatpush2.bf16.msra.mxu0 0
      %4259 = vmatprep.subr.bf16.mxu0 0
      %4260 = vmatpush2.bf16.msra.mxu0 0
      %4261 = vmatprep.subr.bf16.mxu0 0
      %4262 = vmatpush2.bf16.msra.mxu0 0
      %4263 = vmatprep.subr.bf16.mxu0 0
      %4264 = vmatpush2.bf16.msra.mxu0 0
      %4265 = vmatprep.subr.bf16.mxu0 0
      %4266 = vmatpush2.bf16.msra.mxu0 0
      %4267 = vmatprep.subr.bf16.mxu0 0
      %4268 = vmatpush2.bf16.msra.mxu0 0
      %4269 = vmatprep.mubr.bf16.mxu0 0
      %4270 = vmatmul.mubr.bf16.gmra.mxu0 %v4162
      %v4271 = vpop.f32.mrf.mxu0
      %v4272 = vadd.f32 0.0, %v4271
      %v4273 = vpop.f32.mrf.mxu0
      %v4274 = vpop.f32.mrf.mxu0
      %v4275 = vadd.f32 0.0, %v4274
      %v4276 = vpop.f32.mrf.mxu0
      %4277 = vmatprep.mubr.bf16.mxu0 0
      %4278 = vmatmul.mubr.bf16.gmra.mxu0 %v4165
      %v4279 = vpop.f32.mrf.mxu0
      %v4280 = vpop.f32.mrf.mxu0
      %v4281 = vpop.f32.mrf.mxu0
      %v4282 = vadd.f32 0.0, %v4281
      %v4283 = vpop.f32.mrf.mxu0
      %4284 = vmatprep.mubr.bf16.mxu0 0
      %4285 = vmatmul.mubr.bf16.gmra.mxu0 %v4168
      %v4286 = vpop.f32.mrf.mxu0
      %v4287 = vadd.f32 0.0, %v4286
      %v4288 = vpop.f32.mrf.mxu0
      %v4289 = vpop.f32.mrf.mxu0
      %v4290 = vpop.f32.mrf.mxu0
      %4291 = vmatprep.mubr.bf16.mxu0 0
      %4292 = vmatmul.mubr.bf16.gmra.mxu0 %v4171
      %v4293 = vpop.f32.mrf.mxu0
      %v4294 = vadd.f32 0.0, %v4293
      %v4295 = vpop.f32.mrf.mxu0
      %v4296 = vpop.f32.mrf.mxu0
      %v4297 = vadd.f32 0.0, %v4296
      %v4298 = vpop.f32.mrf.mxu0
      %4299 = vmatprep.mubr.bf16.mxu0 0
      %4300 = vmatmul.mubr.bf16.gmra.mxu0 %v4174
      %v4301 = vpop.f32.mrf.mxu0
      %v4302 = vpop.f32.mrf.mxu0
      %v4303 = vpop.f32.mrf.mxu0
      %v4304 = vadd.f32 0.0, %v4303
      %v4305 = vpop.f32.mrf.mxu0
      %4306 = vmatprep.mubr.bf16.mxu0 0
      %4307 = vmatmul.mubr.bf16.gmra.mxu0 %v4177
      %v4308 = vpop.f32.mrf.mxu0
      %v4309 = vadd.f32 0.0, %v4308
      %v4310 = vpop.f32.mrf.mxu0
      %v4311 = vpop.f32.mrf.mxu0
      %v4312 = vpop.f32.mrf.mxu0
      %4313 = vmatprep.mubr.bf16.mxu0 0
      %4314 = vmatmul.mubr.bf16.gmra.mxu0 %v4180
      %v4315 = vpop.f32.mrf.mxu0
      %v4316 = vadd.f32 0.0, %v4315
      %v4317 = vpop.f32.mrf.mxu0
      %v4318 = vpop.f32.mrf.mxu0
      %v4319 = vadd.f32 0.0, %v4318
      %v4320 = vpop.f32.mrf.mxu0
      %4321 = vmatprep.mubr.bf16.mxu0 0
      %4322 = vmatmul.mubr.bf16.gmra.mxu0 %v4183
      %v4323 = vpop.f32.mrf.mxu0
      %v4324 = vpop.f32.mrf.mxu0
      %v4325 = vpop.f32.mrf.mxu0
      %v4326 = vadd.f32 0.0, %v4325
      %v4327 = vpop.f32.mrf.mxu0
      %4328 = vmatprep.mubr.bf16.mxu0 0
      %4329 = vmatmul.mubr.bf16.gmra.mxu0 %v4186
      %v4330 = vpop.f32.mrf.mxu0
      %v4331 = vadd.f32 0.0, %v4330
      %v4332 = vpop.f32.mrf.mxu0
      %v4333 = vpop.f32.mrf.mxu0
      %v4334 = vpop.f32.mrf.mxu0
      %4335 = vmatprep.mubr.bf16.mxu0 0
      %4336 = vmatmul.mubr.bf16.gmra.mxu0 %v4189
      %v4337 = vpop.f32.mrf.mxu0
      %v4338 = vadd.f32 0.0, %v4337
      %v4339 = vpop.f32.mrf.mxu0
      %v4340 = vpop.f32.mrf.mxu0
      %v4341 = vadd.f32 0.0, %v4340
      %v4342 = vpop.f32.mrf.mxu0
      %4343 = vmatprep.mubr.bf16.mxu0 0
      %4344 = vmatmul.mubr.bf16.gmra.mxu0 %v4192
      %v4345 = vpop.f32.mrf.mxu0
      %v4346 = vpop.f32.mrf.mxu0
      %v4347 = vpop.f32.mrf.mxu0
      %v4348 = vadd.f32 0.0, %v4347
      %v4349 = vpop.f32.mrf.mxu0
      %4350 = vmatprep.mubr.bf16.mxu0 0
      %4351 = vmatmul.mubr.bf16.gmra.mxu0 %v4195
      %v4352 = vpop.f32.mrf.mxu0
      %v4353 = vadd.f32 0.0, %v4352
      %v4354 = vpop.f32.mrf.mxu0
      %v4355 = vpop.f32.mrf.mxu0
      %v4356 = vpop.f32.mrf.mxu0
      %4357 = vmatprep.mubr.bf16.mxu0 0
      %4358 = vmatmul.mubr.bf16.gmra.mxu0 %v4198
      %v4359 = vpop.f32.mrf.mxu0
      %v4360 = vadd.f32 0.0, %v4359
      %v4361 = vpop.f32.mrf.mxu0
      %v4362 = vpop.f32.mrf.mxu0
      %v4363 = vadd.f32 0.0, %v4362
      %v4364 = vpop.f32.mrf.mxu0
      %4365 = vmatprep.mubr.bf16.mxu0 0
      %4366 = vmatmul.mubr.bf16.gmra.mxu0 %v4201
      %v4367 = vpop.f32.mrf.mxu0
      %v4368 = vpop.f32.mrf.mxu0
      %v4369 = vpop.f32.mrf.mxu0
      %v4370 = vadd.f32 0.0, %v4369
      %v4371 = vpop.f32.mrf.mxu0
      %4372 = vmatprep.mubr.bf16.mxu0 0
      %4373 = vmatmul.mubr.bf16.gmra.mxu0 %v4204
      %v4374 = vpop.f32.mrf.mxu0
      %v4375 = vadd.f32 0.0, %v4374
      %v4376 = vpop.f32.mrf.mxu0
      %v4377 = vpop.f32.mrf.mxu0
      %v4378 = vpop.f32.mrf.mxu0
      %4379 = vmatprep.mubr.bf16.mxu0 0
      %4380 = vmatmul.mubr.bf16.gmra.mxu0 %v4207
      %v4381 = vpop.f32.mrf.mxu0
      %v4382 = vadd.f32 0.0, %v4381
      %v4383 = vpop.f32.mrf.mxu0
      %v4384 = vpop.f32.mrf.mxu0
      %v4385 = vadd.f32 0.0, %v4384
      %v4386 = vpop.f32.mrf.mxu0
      %4387 = vmatprep.mubr.bf16.mxu0 0
      %4388 = vmatmul.mubr.bf16.gmra.mxu0 %v4210
      %v4389 = vpop.f32.mrf.mxu0
      %v4390 = vpop.f32.mrf.mxu0
      %v4391 = vpop.f32.mrf.mxu0
      %v4392 = vadd.f32 0.0, %v4391
      %v4393 = vpop.f32.mrf.mxu0
      %4394 = vmatprep.mubr.bf16.mxu0 0
      %4395 = vmatmul.mubr.bf16.gmra.mxu0 %v4213
      %v4396 = vpop.f32.mrf.mxu0
      %v4397 = vadd.f32 0.0, %v4396
      %v4398 = vpop.f32.mrf.mxu0
      %v4399 = vpop.f32.mrf.mxu0
      %v4400 = vpop.f32.mrf.mxu0
      %4401 = vmatprep.mubr.bf16.mxu0 0
      %4402 = vmatmul.mubr.bf16.gmra.mxu0 %v4216
      %v4403 = vpop.f32.mrf.mxu0
      %v4404 = vadd.f32 0.0, %v4403
      %v4405 = vpop.f32.mrf.mxu0
      %v4406 = vpop.f32.mrf.mxu0
      %v4407 = vadd.f32 0.0, %v4406
      %v4408 = vpop.f32.mrf.mxu0
      %4409 = vmatprep.mubr.bf16.mxu0 0
      %4410 = vmatmul.mubr.bf16.gmra.mxu0 %v4219
      %v4411 = vpop.f32.mrf.mxu0
      %v4412 = vpop.f32.mrf.mxu0
      %v4413 = vpop.f32.mrf.mxu0
      %v4414 = vadd.f32 0.0, %v4413
      %v4415 = vpop.f32.mrf.mxu0
      %4416 = vmatprep.mubr.bf16.mxu0 0
      %4417 = vmatmul.mubr.bf16.gmra.mxu0 %v4222
      %v4418 = vpop.f32.mrf.mxu0
      %v4419 = vadd.f32 0.0, %v4418
      %v4420 = vpop.f32.mrf.mxu0
      %v4421 = vpop.f32.mrf.mxu0
      %v4422 = vpop.f32.mrf.mxu0
      %4423 = vmatprep.mubr.bf16.mxu0 0
      %4424 = vmatmul.mubr.bf16.gmra.mxu0 %v4225
      %v4425 = vpop.f32.mrf.mxu0
      %v4426 = vadd.f32 0.0, %v4425
      %v4427 = vpop.f32.mrf.mxu0
      %v4428 = vpop.f32.mrf.mxu0
      %v4429 = vadd.f32 0.0, %v4428
      %v4430 = vpop.f32.mrf.mxu0
      %4431 = vmatprep.mubr.bf16.mxu0 0
      %4432 = vmatmul.mubr.bf16.gmra.mxu0 %v4228
      %v4433 = vpop.f32.mrf.mxu0
      %v4434 = vpop.f32.mrf.mxu0
      %v4435 = vpop.f32.mrf.mxu0
      %v4436 = vadd.f32 0.0, %v4435
      %v4437 = vpop.f32.mrf.mxu0
      %4438 = vmatprep.mubr.bf16.mxu0 0
      %4439 = vmatmul.mubr.bf16.gmra.mxu0 %v4231
      %v4440 = vpop.f32.mrf.mxu0
      %v4441 = vadd.f32 0.0, %v4440
      %v4442 = vpop.f32.mrf.mxu0
      %v4443 = vpop.f32.mrf.mxu0
      %v4444 = vpop.f32.mrf.mxu0
      %4445 = vdwg.mxu0
      %v4449 = vunpack.c.l.b16 %v4070
      %v4450 = vunpack.c.l.b16 %v4071
      %v4451 = vunpack.c.l.b16 %v4072
      %v4452 = vpack.c.b16 %v4450, %v4449
      %v4453 = vpack.c.b16 %v4451, %v4451
      %v4455 = vsel %vm4160, %v4017, 0
      %v4457 = vsel %vm4160, %v4019, 0
      %v4459 = vsel %vm4160, %v4021, 0
      %v4461 = vsel %vm4160, %v4023, 0
      %v4463 = vsel %vm4160, %v4025, 0
      %v4465 = vsel %vm4160, %v4027, 0
      %v4467 = vsel %vm4160, %v4029, 0
      %v4469 = vsel %vm4160, %v4031, 0
      %v4471 = vsel %vm4160, %v4033, 0
      %v4473 = vsel %vm4160, %v4035, 0
      %v4475 = vsel %vm4160, %v4037, 0
      %v4477 = vsel %vm4160, %v4039, 0
      %v4479 = vsel %vm4160, %v4041, 0
      %v4481 = vsel %vm4160, %v4043, 0
      %v4483 = vsel %vm4160, %v4045, 0
      %v4485 = vsel %vm4160, %v4047, 0
      %v4487 = vsel %vm4160, %v4049, 0
      %v4489 = vsel %vm4160, %v4051, 0
      %v4491 = vsel %vm4160, %v4053, 0
      %v4493 = vsel %vm4160, %v4055, 0
      %v4495 = vsel %vm4160, %v4057, 0
      %v4497 = vsel %vm4160, %v4059, 0
      %v4499 = vsel %vm4160, %v4061, 0
      %v4501 = vsel %vm4160, %v4063, 0
      %v4504 = vsel %vm4233, %v4453, 0
      %4506 = vmatprep.subr.bf16.mxu0 0
      %4507 = vmatpush1.bf16.msra.mxu0 0
      %4508 = vmatprep.subr.bf16.mxu0 0
      %4509 = vmatpush1.bf16.msra.mxu0 0
      %4510 = vmatprep.subr.bf16.mxu0 0
      %4511 = vmatpush1.bf16.msra.mxu0 0
      %4512 = vmatprep.subr.bf16.mxu0 0
      %4513 = vmatpush1.bf16.msra.mxu0 0
      %4514 = vmatprep.subr.bf16.mxu0 0
      %4515 = vmatpush1.bf16.msra.mxu0 0
      %4516 = vmatprep.subr.bf16.mxu0 0
      %4517 = vmatpush1.bf16.msra.mxu0 0
      %4518 = vmatprep.subr.bf16.mxu0 0
      %4519 = vmatpush1.bf16.msra.mxu0 %v4504
      %4520 = vmatprep.subr.bf16.mxu0 0
      %4521 = vmatpush1.bf16.msra.mxu0 %v4452
      %4522 = vmatprep.subr.bf16.mxu0 0
      %4523 = vmatpush2.bf16.msra.mxu0 0
      %4524 = vmatprep.subr.bf16.mxu0 0
      %4525 = vmatpush2.bf16.msra.mxu0 0
      %4526 = vmatprep.subr.bf16.mxu0 0
      %4527 = vmatpush2.bf16.msra.mxu0 0
      %4528 = vmatprep.subr.bf16.mxu0 0
      %4529 = vmatpush2.bf16.msra.mxu0 0
      %4530 = vmatprep.subr.bf16.mxu0 0
      %4531 = vmatpush2.bf16.msra.mxu0 0
      %4532 = vmatprep.subr.bf16.mxu0 0
      %4533 = vmatpush2.bf16.msra.mxu0 0
      %4534 = vmatprep.subr.bf16.mxu0 0
      %4535 = vmatpush2.bf16.msra.mxu0 0
      %4536 = vmatprep.subr.bf16.mxu0 0
      %4537 = vmatpush2.bf16.msra.mxu0 0
      %4538 = vmatprep.mubr.bf16.mxu0 0
      %4539 = vmatmul.mubr.bf16.gmra.mxu0 %v4455
      %v4540 = vpop.f32.mrf.mxu0
      %v4541 = vadd.f32 %v4272, %v4540
      %v4542 = vpop.f32.mrf.mxu0
      %v4543 = vpop.f32.mrf.mxu0
      %v4544 = vadd.f32 %v4275, %v4543
      %v4545 = vpop.f32.mrf.mxu0
      %4546 = vmatprep.mubr.bf16.mxu0 0
      %4547 = vmatmul.mubr.bf16.gmra.mxu0 %v4457
      %v4548 = vpop.f32.mrf.mxu0
      %v4549 = vpop.f32.mrf.mxu0
      %v4550 = vpop.f32.mrf.mxu0
      %v4551 = vadd.f32 %v4282, %v4550
      %v4552 = vpop.f32.mrf.mxu0
      %4553 = vmatprep.mubr.bf16.mxu0 0
      %4554 = vmatmul.mubr.bf16.gmra.mxu0 %v4459
      %v4555 = vpop.f32.mrf.mxu0
      %v4556 = vadd.f32 %v4287, %v4555
      %v4557 = vpop.f32.mrf.mxu0
      %v4558 = vpop.f32.mrf.mxu0
      %v4559 = vpop.f32.mrf.mxu0
      %4560 = vmatprep.mubr.bf16.mxu0 0
      %4561 = vmatmul.mubr.bf16.gmra.mxu0 %v4461
      %v4562 = vpop.f32.mrf.mxu0
      %v4563 = vadd.f32 %v4294, %v4562
      %v4564 = vpop.f32.mrf.mxu0
      %v4565 = vpop.f32.mrf.mxu0
      %v4566 = vadd.f32 %v4297, %v4565
      %v4567 = vpop.f32.mrf.mxu0
      %4568 = vmatprep.mubr.bf16.mxu0 0
      %4569 = vmatmul.mubr.bf16.gmra.mxu0 %v4463
      %v4570 = vpop.f32.mrf.mxu0
      %v4571 = vpop.f32.mrf.mxu0
      %v4572 = vpop.f32.mrf.mxu0
      %v4573 = vadd.f32 %v4304, %v4572
      %v4574 = vpop.f32.mrf.mxu0
      %4575 = vmatprep.mubr.bf16.mxu0 0
      %4576 = vmatmul.mubr.bf16.gmra.mxu0 %v4465
      %v4577 = vpop.f32.mrf.mxu0
      %v4578 = vadd.f32 %v4309, %v4577
      %v4579 = vpop.f32.mrf.mxu0
      %v4580 = vpop.f32.mrf.mxu0
      %v4581 = vpop.f32.mrf.mxu0
      %4582 = vmatprep.mubr.bf16.mxu0 0
      %4583 = vmatmul.mubr.bf16.gmra.mxu0 %v4467
      %v4584 = vpop.f32.mrf.mxu0
      %v4585 = vadd.f32 %v4316, %v4584
      %v4586 = vpop.f32.mrf.mxu0
      %v4587 = vpop.f32.mrf.mxu0
      %v4588 = vadd.f32 %v4319, %v4587
      %v4589 = vpop.f32.mrf.mxu0
      %4590 = vmatprep.mubr.bf16.mxu0 0
      %4591 = vmatmul.mubr.bf16.gmra.mxu0 %v4469
      %v4592 = vpop.f32.mrf.mxu0
      %v4593 = vpop.f32.mrf.mxu0
      %v4594 = vpop.f32.mrf.mxu0
      %v4595 = vadd.f32 %v4326, %v4594
      %v4596 = vpop.f32.mrf.mxu0
      %4597 = vmatprep.mubr.bf16.mxu0 0
      %4598 = vmatmul.mubr.bf16.gmra.mxu0 %v4471
      %v4599 = vpop.f32.mrf.mxu0
      %v4600 = vadd.f32 %v4331, %v4599
      %v4601 = vpop.f32.mrf.mxu0
      %v4602 = vpop.f32.mrf.mxu0
      %v4603 = vpop.f32.mrf.mxu0
      %4604 = vmatprep.mubr.bf16.mxu0 0
      %4605 = vmatmul.mubr.bf16.gmra.mxu0 %v4473
      %v4606 = vpop.f32.mrf.mxu0
      %v4607 = vadd.f32 %v4338, %v4606
      %v4608 = vpop.f32.mrf.mxu0
      %v4609 = vpop.f32.mrf.mxu0
      %v4610 = vadd.f32 %v4341, %v4609
      %v4611 = vpop.f32.mrf.mxu0
      %4612 = vmatprep.mubr.bf16.mxu0 0
      %4613 = vmatmul.mubr.bf16.gmra.mxu0 %v4475
      %v4614 = vpop.f32.mrf.mxu0
      %v4615 = vpop.f32.mrf.mxu0
      %v4616 = vpop.f32.mrf.mxu0
      %v4617 = vadd.f32 %v4348, %v4616
      %v4618 = vpop.f32.mrf.mxu0
      %4619 = vmatprep.mubr.bf16.mxu0 0
      %4620 = vmatmul.mubr.bf16.gmra.mxu0 %v4477
      %v4621 = vpop.f32.mrf.mxu0
      %v4622 = vadd.f32 %v4353, %v4621
      %v4623 = vpop.f32.mrf.mxu0
      %v4624 = vpop.f32.mrf.mxu0
      %v4625 = vpop.f32.mrf.mxu0
      %4626 = vmatprep.mubr.bf16.mxu0 0
      %4627 = vmatmul.mubr.bf16.gmra.mxu0 %v4479
      %v4628 = vpop.f32.mrf.mxu0
      %v4629 = vadd.f32 %v4360, %v4628
      %v4630 = vpop.f32.mrf.mxu0
      %v4631 = vpop.f32.mrf.mxu0
      %v4632 = vadd.f32 %v4363, %v4631
      %v4633 = vpop.f32.mrf.mxu0
      %4634 = vmatprep.mubr.bf16.mxu0 0
      %4635 = vmatmul.mubr.bf16.gmra.mxu0 %v4481
      %v4636 = vpop.f32.mrf.mxu0
      %v4637 = vpop.f32.mrf.mxu0
      %v4638 = vpop.f32.mrf.mxu0
      %v4639 = vadd.f32 %v4370, %v4638
      %v4640 = vpop.f32.mrf.mxu0
      %4641 = vmatprep.mubr.bf16.mxu0 0
      %4642 = vmatmul.mubr.bf16.gmra.mxu0 %v4483
      %v4643 = vpop.f32.mrf.mxu0
      %v4644 = vadd.f32 %v4375, %v4643
      %v4645 = vpop.f32.mrf.mxu0
      %v4646 = vpop.f32.mrf.mxu0
      %v4647 = vpop.f32.mrf.mxu0
      %4648 = vmatprep.mubr.bf16.mxu0 0
      %4649 = vmatmul.mubr.bf16.gmra.mxu0 %v4485
      %v4650 = vpop.f32.mrf.mxu0
      %v4651 = vadd.f32 %v4382, %v4650
      %v4652 = vpop.f32.mrf.mxu0
      %v4653 = vpop.f32.mrf.mxu0
      %v4654 = vadd.f32 %v4385, %v4653
      %v4655 = vpop.f32.mrf.mxu0
      %4656 = vmatprep.mubr.bf16.mxu0 0
      %4657 = vmatmul.mubr.bf16.gmra.mxu0 %v4487
      %v4658 = vpop.f32.mrf.mxu0
      %v4659 = vpop.f32.mrf.mxu0
      %v4660 = vpop.f32.mrf.mxu0
      %v4661 = vadd.f32 %v4392, %v4660
      %v4662 = vpop.f32.mrf.mxu0
      %4663 = vmatprep.mubr.bf16.mxu0 0
      %4664 = vmatmul.mubr.bf16.gmra.mxu0 %v4489
      %v4665 = vpop.f32.mrf.mxu0
      %v4666 = vadd.f32 %v4397, %v4665
      %v4667 = vpop.f32.mrf.mxu0
      %v4668 = vpop.f32.mrf.mxu0
      %v4669 = vpop.f32.mrf.mxu0
      %4670 = vmatprep.mubr.bf16.mxu0 0
      %4671 = vmatmul.mubr.bf16.gmra.mxu0 %v4491
      %v4672 = vpop.f32.mrf.mxu0
      %v4673 = vadd.f32 %v4404, %v4672
      %v4674 = vpop.f32.mrf.mxu0
      %v4675 = vpop.f32.mrf.mxu0
      %v4676 = vadd.f32 %v4407, %v4675
      %v4677 = vpop.f32.mrf.mxu0
      %4678 = vmatprep.mubr.bf16.mxu0 0
      %4679 = vmatmul.mubr.bf16.gmra.mxu0 %v4493
      %v4680 = vpop.f32.mrf.mxu0
      %v4681 = vpop.f32.mrf.mxu0
      %v4682 = vpop.f32.mrf.mxu0
      %v4683 = vadd.f32 %v4414, %v4682
      %v4684 = vpop.f32.mrf.mxu0
      %4685 = vmatprep.mubr.bf16.mxu0 0
      %4686 = vmatmul.mubr.bf16.gmra.mxu0 %v4495
      %v4687 = vpop.f32.mrf.mxu0
      %v4688 = vadd.f32 %v4419, %v4687
      %v4689 = vpop.f32.mrf.mxu0
      %v4690 = vpop.f32.mrf.mxu0
      %v4691 = vpop.f32.mrf.mxu0
      %4692 = vmatprep.mubr.bf16.mxu0 0
      %4693 = vmatmul.mubr.bf16.gmra.mxu0 %v4497
      %v4694 = vpop.f32.mrf.mxu0
      %v4695 = vadd.f32 %v4426, %v4694
      %v4696 = vpop.f32.mrf.mxu0
      %v4697 = vpop.f32.mrf.mxu0
      %v4698 = vadd.f32 %v4429, %v4697
      %v4699 = vpop.f32.mrf.mxu0
      %4700 = vmatprep.mubr.bf16.mxu0 0
      %4701 = vmatmul.mubr.bf16.gmra.mxu0 %v4499
      %v4702 = vpop.f32.mrf.mxu0
      %v4703 = vpop.f32.mrf.mxu0
      %v4704 = vpop.f32.mrf.mxu0
      %v4705 = vadd.f32 %v4436, %v4704
      %v4706 = vpop.f32.mrf.mxu0
      %4707 = vmatprep.mubr.bf16.mxu0 0
      %4708 = vmatmul.mubr.bf16.gmra.mxu0 %v4501
      %v4709 = vpop.f32.mrf.mxu0
      %v4710 = vadd.f32 %v4441, %v4709
      %v4711 = vpop.f32.mrf.mxu0
      %v4712 = vpop.f32.mrf.mxu0
      %v4713 = vpop.f32.mrf.mxu0
      %4714 = vdwg.mxu0
      %s4715 = scalar_lea.vmem %s2, 24
      %v4716 = vld [vmem:[%s4715] sm:$0xf]
      %v4717 = vld [vmem:[%s4715 + $0x4] sm:$0xf]
      %v4718 = vld [vmem:[%s4715 + $0x8] sm:$0xf]
      %v4722 = vunpack.c.l.b16 %v4716
      %v4723 = vunpack.c.l.b16 %v4717
      %v4724 = vunpack.c.l.b16 %v4718
      %v4725 = vpack.c.b16 %v4723, %v4722
      %v4726 = vpack.c.b16 %v4724, %v4724
      %v4728 = vsel %vm4160, %v4065, 0
      %v4730 = vsel %vm4160, %v4067, 0
      %v4732 = vsel %vm4160, %v4069, 0
      %v4735 = vsel %vm4233, %v4726, 0
      %4737 = vmatprep.subr.bf16.mxu0 0
      %4738 = vmatpush1.bf16.msra.mxu0 0
      %4739 = vmatprep.subr.bf16.mxu0 0
      %4740 = vmatpush1.bf16.msra.mxu0 0
      %4741 = vmatprep.subr.bf16.mxu0 0
      %4742 = vmatpush1.bf16.msra.mxu0 0
      %4743 = vmatprep.subr.bf16.mxu0 0
      %4744 = vmatpush1.bf16.msra.mxu0 0
      %4745 = vmatprep.subr.bf16.mxu0 0
      %4746 = vmatpush1.bf16.msra.mxu0 0
      %4747 = vmatprep.subr.bf16.mxu0 0
      %4748 = vmatpush1.bf16.msra.mxu0 0
      %4749 = vmatprep.subr.bf16.mxu0 0
      %4750 = vmatpush1.bf16.msra.mxu0 %v4735
      %4751 = vmatprep.subr.bf16.mxu0 0
      %4752 = vmatpush1.bf16.msra.mxu0 %v4725
      %4753 = vmatprep.subr.bf16.mxu0 0
      %4754 = vmatpush2.bf16.msra.mxu0 0
      %4755 = vmatprep.subr.bf16.mxu0 0
      %4756 = vmatpush2.bf16.msra.mxu0 0
      %4757 = vmatprep.subr.bf16.mxu0 0
      %4758 = vmatpush2.bf16.msra.mxu0 0
      %4759 = vmatprep.subr.bf16.mxu0 0
      %4760 = vmatpush2.bf16.msra.mxu0 0
      %4761 = vmatprep.subr.bf16.mxu0 0
      %4762 = vmatpush2.bf16.msra.mxu0 0
      %4763 = vmatprep.subr.bf16.mxu0 0
      %4764 = vmatpush2.bf16.msra.mxu0 0
      %4765 = vmatprep.subr.bf16.mxu0 0
      %4766 = vmatpush2.bf16.msra.mxu0 0
      %4767 = vmatprep.subr.bf16.mxu0 0
      %4768 = vmatpush2.bf16.msra.mxu0 0
      %4769 = vmatprep.mubr.bf16.mxu0 0
      %4770 = vmatmul.mubr.bf16.gmra.mxu0 %v4461
      %v4771 = vpop.f32.mrf.mxu0
      %v4772 = vadd.f32 0.0, %v4771
      %v4773 = vpop.f32.mrf.mxu0
      %v4774 = vpop.f32.mrf.mxu0
      %v4775 = vadd.f32 0.0, %v4774
      %v4776 = vpop.f32.mrf.mxu0
      %4777 = vmatprep.mubr.bf16.mxu0 0
      %4778 = vmatmul.mubr.bf16.gmra.mxu0 %v4463
      %v4779 = vpop.f32.mrf.mxu0
      %v4780 = vpop.f32.mrf.mxu0
      %v4781 = vpop.f32.mrf.mxu0
      %v4782 = vadd.f32 0.0, %v4781
      %v4783 = vpop.f32.mrf.mxu0
      %4784 = vmatprep.mubr.bf16.mxu0 0
      %4785 = vmatmul.mubr.bf16.gmra.mxu0 %v4465
      %v4786 = vpop.f32.mrf.mxu0
      %v4787 = vadd.f32 0.0, %v4786
      %v4788 = vpop.f32.mrf.mxu0
      %v4789 = vpop.f32.mrf.mxu0
      %v4790 = vpop.f32.mrf.mxu0
      %4791 = vmatprep.mubr.bf16.mxu0 0
      %4792 = vmatmul.mubr.bf16.gmra.mxu0 %v4467
      %v4793 = vpop.f32.mrf.mxu0
      %v4794 = vadd.f32 0.0, %v4793
      %v4795 = vpop.f32.mrf.mxu0
      %v4796 = vpop.f32.mrf.mxu0
      %v4797 = vadd.f32 0.0, %v4796
      %v4798 = vpop.f32.mrf.mxu0
      %4799 = vmatprep.mubr.bf16.mxu0 0
      %4800 = vmatmul.mubr.bf16.gmra.mxu0 %v4469
      %v4801 = vpop.f32.mrf.mxu0
      %v4802 = vpop.f32.mrf.mxu0
      %v4803 = vpop.f32.mrf.mxu0
      %v4804 = vadd.f32 0.0, %v4803
      %v4805 = vpop.f32.mrf.mxu0
      %4806 = vmatprep.mubr.bf16.mxu0 0
      %4807 = vmatmul.mubr.bf16.gmra.mxu0 %v4471
      %v4808 = vpop.f32.mrf.mxu0
      %v4809 = vadd.f32 0.0, %v4808
      %v4810 = vpop.f32.mrf.mxu0
      %v4811 = vpop.f32.mrf.mxu0
      %v4812 = vpop.f32.mrf.mxu0
      %4813 = vmatprep.mubr.bf16.mxu0 0
      %4814 = vmatmul.mubr.bf16.gmra.mxu0 %v4473
      %v4815 = vpop.f32.mrf.mxu0
      %v4816 = vadd.f32 0.0, %v4815
      %v4817 = vpop.f32.mrf.mxu0
      %v4818 = vpop.f32.mrf.mxu0
      %v4819 = vadd.f32 0.0, %v4818
      %v4820 = vpop.f32.mrf.mxu0
      %4821 = vmatprep.mubr.bf16.mxu0 0
      %4822 = vmatmul.mubr.bf16.gmra.mxu0 %v4475
      %v4823 = vpop.f32.mrf.mxu0
      %v4824 = vpop.f32.mrf.mxu0
      %v4825 = vpop.f32.mrf.mxu0
      %v4826 = vadd.f32 0.0, %v4825
      %v4827 = vpop.f32.mrf.mxu0
      %4828 = vmatprep.mubr.bf16.mxu0 0
      %4829 = vmatmul.mubr.bf16.gmra.mxu0 %v4477
      %v4830 = vpop.f32.mrf.mxu0
      %v4831 = vadd.f32 0.0, %v4830
      %v4832 = vpop.f32.mrf.mxu0
      %v4833 = vpop.f32.mrf.mxu0
      %v4834 = vpop.f32.mrf.mxu0
      %4835 = vmatprep.mubr.bf16.mxu0 0
      %4836 = vmatmul.mubr.bf16.gmra.mxu0 %v4479
      %v4837 = vpop.f32.mrf.mxu0
      %v4838 = vadd.f32 0.0, %v4837
      %v4839 = vpop.f32.mrf.mxu0
      %v4840 = vpop.f32.mrf.mxu0
      %v4841 = vadd.f32 0.0, %v4840
      %v4842 = vpop.f32.mrf.mxu0
      %4843 = vmatprep.mubr.bf16.mxu0 0
      %4844 = vmatmul.mubr.bf16.gmra.mxu0 %v4481
      %v4845 = vpop.f32.mrf.mxu0
      %v4846 = vpop.f32.mrf.mxu0
      %v4847 = vpop.f32.mrf.mxu0
      %v4848 = vadd.f32 0.0, %v4847
      %v4849 = vpop.f32.mrf.mxu0
      %4850 = vmatprep.mubr.bf16.mxu0 0
      %4851 = vmatmul.mubr.bf16.gmra.mxu0 %v4483
      %v4852 = vpop.f32.mrf.mxu0
      %v4853 = vadd.f32 0.0, %v4852
      %v4854 = vpop.f32.mrf.mxu0
      %v4855 = vpop.f32.mrf.mxu0
      %v4856 = vpop.f32.mrf.mxu0
      %4857 = vmatprep.mubr.bf16.mxu0 0
      %4858 = vmatmul.mubr.bf16.gmra.mxu0 %v4485
      %v4859 = vpop.f32.mrf.mxu0
      %v4860 = vadd.f32 0.0, %v4859
      %v4861 = vpop.f32.mrf.mxu0
      %v4862 = vpop.f32.mrf.mxu0
      %v4863 = vadd.f32 0.0, %v4862
      %v4864 = vpop.f32.mrf.mxu0
      %4865 = vmatprep.mubr.bf16.mxu0 0
      %4866 = vmatmul.mubr.bf16.gmra.mxu0 %v4487
      %v4867 = vpop.f32.mrf.mxu0
      %v4868 = vpop.f32.mrf.mxu0
      %v4869 = vpop.f32.mrf.mxu0
      %v4870 = vadd.f32 0.0, %v4869
      %v4871 = vpop.f32.mrf.mxu0
      %4872 = vmatprep.mubr.bf16.mxu0 0
      %4873 = vmatmul.mubr.bf16.gmra.mxu0 %v4489
      %v4874 = vpop.f32.mrf.mxu0
      %v4875 = vadd.f32 0.0, %v4874
      %v4876 = vpop.f32.mrf.mxu0
      %v4877 = vpop.f32.mrf.mxu0
      %v4878 = vpop.f32.mrf.mxu0
      %4879 = vmatprep.mubr.bf16.mxu0 0
      %4880 = vmatmul.mubr.bf16.gmra.mxu0 %v4491
      %v4881 = vpop.f32.mrf.mxu0
      %v4882 = vadd.f32 0.0, %v4881
      %v4883 = vpop.f32.mrf.mxu0
      %v4884 = vpop.f32.mrf.mxu0
      %v4885 = vadd.f32 0.0, %v4884
      %v4886 = vpop.f32.mrf.mxu0
      %4887 = vmatprep.mubr.bf16.mxu0 0
      %4888 = vmatmul.mubr.bf16.gmra.mxu0 %v4493
      %v4889 = vpop.f32.mrf.mxu0
      %v4890 = vpop.f32.mrf.mxu0
      %v4891 = vpop.f32.mrf.mxu0
      %v4892 = vadd.f32 0.0, %v4891
      %v4893 = vpop.f32.mrf.mxu0
      %4894 = vmatprep.mubr.bf16.mxu0 0
      %4895 = vmatmul.mubr.bf16.gmra.mxu0 %v4495
      %v4896 = vpop.f32.mrf.mxu0
      %v4897 = vadd.f32 0.0, %v4896
      %v4898 = vpop.f32.mrf.mxu0
      %v4899 = vpop.f32.mrf.mxu0
      %v4900 = vpop.f32.mrf.mxu0
      %4901 = vmatprep.mubr.bf16.mxu0 0
      %4902 = vmatmul.mubr.bf16.gmra.mxu0 %v4497
      %v4903 = vpop.f32.mrf.mxu0
      %v4904 = vadd.f32 0.0, %v4903
      %v4905 = vpop.f32.mrf.mxu0
      %v4906 = vpop.f32.mrf.mxu0
      %v4907 = vadd.f32 0.0, %v4906
      %v4908 = vpop.f32.mrf.mxu0
      %4909 = vmatprep.mubr.bf16.mxu0 0
      %4910 = vmatmul.mubr.bf16.gmra.mxu0 %v4499
      %v4911 = vpop.f32.mrf.mxu0
      %v4912 = vpop.f32.mrf.mxu0
      %v4913 = vpop.f32.mrf.mxu0
      %v4914 = vadd.f32 0.0, %v4913
      %v4915 = vpop.f32.mrf.mxu0
      %4916 = vmatprep.mubr.bf16.mxu0 0
      %4917 = vmatmul.mubr.bf16.gmra.mxu0 %v4501
      %v4918 = vpop.f32.mrf.mxu0
      %v4919 = vadd.f32 0.0, %v4918
      %v4920 = vpop.f32.mrf.mxu0
      %v4921 = vpop.f32.mrf.mxu0
      %v4922 = vpop.f32.mrf.mxu0
      %4923 = vmatprep.mubr.bf16.mxu0 0
      %4924 = vmatmul.mubr.bf16.gmra.mxu0 %v4728
      %v4925 = vpop.f32.mrf.mxu0
      %v4926 = vadd.f32 0.0, %v4925
      %v4927 = vpop.f32.mrf.mxu0
      %v4928 = vpop.f32.mrf.mxu0
      %v4929 = vadd.f32 0.0, %v4928
      %v4930 = vpop.f32.mrf.mxu0
      %4931 = vmatprep.mubr.bf16.mxu0 0
      %4932 = vmatmul.mubr.bf16.gmra.mxu0 %v4730
      %v4933 = vpop.f32.mrf.mxu0
      %v4934 = vpop.f32.mrf.mxu0
      %v4935 = vpop.f32.mrf.mxu0
      %v4936 = vadd.f32 0.0, %v4935
      %v4937 = vpop.f32.mrf.mxu0
      %4938 = vmatprep.mubr.bf16.mxu0 0
      %4939 = vmatmul.mubr.bf16.gmra.mxu0 %v4732
      %v4940 = vpop.f32.mrf.mxu0
      %v4941 = vadd.f32 0.0, %v4940
      %v4942 = vpop.f32.mrf.mxu0
      %v4943 = vpop.f32.mrf.mxu0
      %v4944 = vpop.f32.mrf.mxu0
      %4945 = vdwg.mxu0
      %v4946 = vadd.f32 %v4541, %v4772
      %v4947 = vadd.f32 %v4544, %v4775
      %v4948 = vadd.f32 %v4551, %v4782
      %v4949 = vadd.f32 %v4556, %v4787
      %v4950 = vadd.f32 %v4563, %v4794
      %v4951 = vadd.f32 %v4566, %v4797
      %v4952 = vadd.f32 %v4573, %v4804
      %v4953 = vadd.f32 %v4578, %v4809
      %v4954 = vadd.f32 %v4585, %v4816
      %v4955 = vadd.f32 %v4588, %v4819
      %v4956 = vadd.f32 %v4595, %v4826
      %v4957 = vadd.f32 %v4600, %v4831
      %v4958 = vadd.f32 %v4607, %v4838
      %v4959 = vadd.f32 %v4610, %v4841
      %v4960 = vadd.f32 %v4617, %v4848
      %v4961 = vadd.f32 %v4622, %v4853
      %v4962 = vadd.f32 %v4629, %v4860
      %v4963 = vadd.f32 %v4632, %v4863
      %v4964 = vadd.f32 %v4639, %v4870
      %v4965 = vadd.f32 %v4644, %v4875
      %v4966 = vadd.f32 %v4651, %v4882
      %v4967 = vadd.f32 %v4654, %v4885
      %v4968 = vadd.f32 %v4661, %v4892
      %v4969 = vadd.f32 %v4666, %v4897
      %v4970 = vadd.f32 %v4673, %v4904
      %v4971 = vadd.f32 %v4676, %v4907
      %v4972 = vadd.f32 %v4683, %v4914
      %v4973 = vadd.f32 %v4688, %v4919
      %v4974 = vadd.f32 %v4695, %v4926
      %v4975 = vadd.f32 %v4698, %v4929
      %v4976 = vadd.f32 %v4705, %v4936
      %v4977 = vadd.f32 %v4710, %v4941
      %v4978 = vmul.f32 %v4946, 1.5
      %v4979 = vmul.f32 %v4947, 1.5
      %v4980 = vmul.f32 %v4948, 1.5
      %v4981 = vmul.f32 %v4949, 1.5
      %v4982 = vmul.f32 %v4950, 1.5
      %v4983 = vmul.f32 %v4951, 1.5
      %v4984 = vmul.f32 %v4952, 1.5
      %v4985 = vmul.f32 %v4953, 1.5
      %v4986 = vmul.f32 %v4954, 1.5
      %v4987 = vmul.f32 %v4955, 1.5
      %v4988 = vmul.f32 %v4956, 1.5
      %v4989 = vmul.f32 %v4957, 1.5
      %v4990 = vmul.f32 %v4958, 1.5
      %v4991 = vmul.f32 %v4959, 1.5
      %v4992 = vmul.f32 %v4960, 1.5
      %v4993 = vmul.f32 %v4961, 1.5
      %v4994 = vmul.f32 %v4962, 1.5
      %v4995 = vmul.f32 %v4963, 1.5
      %v4996 = vmul.f32 %v4964, 1.5
      %v4997 = vmul.f32 %v4965, 1.5
      %v4998 = vmul.f32 %v4966, 1.5
      %v4999 = vmul.f32 %v4967, 1.5
      %v5000 = vmul.f32 %v4968, 1.5
      %v5001 = vmul.f32 %v4969, 1.5
      %v5002 = vmul.f32 %v4970, 1.5
      %v5003 = vmul.f32 %v4971, 1.5
      %v5004 = vmul.f32 %v4972, 1.5
      %v5005 = vmul.f32 %v4973, 1.5
      %v5006 = vmul.f32 %v4974, 1.5
      %v5007 = vmul.f32 %v4975, 1.5
      %v5008 = vmul.f32 %v4976, 1.5
      %v5009 = vmul.f32 %v4977, 1.5
      %v5010 = vadd.f32 %v4978, 0.03
      %v5011 = vadd.f32 %v4979, 0.03
      %v5012 = vadd.f32 %v4980, 0.03
      %v5013 = vadd.f32 %v4981, 0.03
      %v5014 = vadd.f32 %v4982, 0.03
      %v5015 = vadd.f32 %v4983, 0.03
      %v5016 = vadd.f32 %v4984, 0.03
      %v5017 = vadd.f32 %v4985, 0.03
      %v5018 = vadd.f32 %v4986, 0.03
      %v5019 = vadd.f32 %v4987, 0.03
      %v5020 = vadd.f32 %v4988, 0.03
      %v5021 = vadd.f32 %v4989, 0.03
      %v5022 = vadd.f32 %v4990, 0.03
      %v5023 = vadd.f32 %v4991, 0.03
      %v5024 = vadd.f32 %v4992, 0.03
      %v5025 = vadd.f32 %v4993, 0.03
      %v5026 = vadd.f32 %v4994, 0.03
      %v5027 = vadd.f32 %v4995, 0.03
      %v5028 = vadd.f32 %v4996, 0.03
      %v5029 = vadd.f32 %v4997, 0.03
      %v5030 = vadd.f32 %v4998, 0.03
      %v5031 = vadd.f32 %v4999, 0.03
      %v5032 = vadd.f32 %v5000, 0.03
      %v5033 = vadd.f32 %v5001, 0.03
      %v5034 = vadd.f32 %v5002, 0.03
      %v5035 = vadd.f32 %v5003, 0.03
      %v5036 = vadd.f32 %v5004, 0.03
      %v5037 = vadd.f32 %v5005, 0.03
      %v5038 = vadd.f32 %v5006, 0.03
      %v5039 = vadd.f32 %v5007, 0.03
      %v5040 = vadd.f32 %v5008, 0.03
      %v5041 = vadd.f32 %v5009, 0.03
      %v5042 = vld [vmem:[%s3] sm:$0x3]
      %v5044 = vsel %vm1517, %v295, 0
      %v5047 = vsel %vm1517, %v296, 0
      %v5050 = vsel %vm1517, %v297, 0
      %v5053 = vsel %vm1517, %v298, 0
      %v5056 = vsel %vm1517, %v299, 0
      %v5059 = vsel %vm1517, %v300, 0
      %v5062 = vsel %vm1517, %v301, 0
      %v5065 = vsel %vm1517, %v302, 0
      %v5068 = vsel %vm1517, %v303, 0
      %v5071 = vsel %vm1517, %v304, 0
      %v5074 = vsel %vm1517, %v305, 0
      %v5077 = vsel %vm1517, %v306, 0
      %v5080 = vsel %vm1517, %v307, 0
      %v5083 = vsel %vm1517, %v308, 0
      %v5086 = vsel %vm1517, %v309, 0
      %v5089 = vsel %vm1517, %v310, 0
      %vm5091 = vcmask 1041408
      %v5093 = vsel %vm5091, %v5042, 0
      %5095 = vmatprep.subr.bf16.mxu0 0
      %5096 = vmatpush1.bf16.msra.mxu0 0
      %5097 = vmatprep.subr.bf16.mxu0 0
      %5098 = vmatpush1.bf16.msra.mxu0 0
      %5099 = vmatprep.subr.bf16.mxu0 0
      %5100 = vmatpush1.bf16.msra.mxu0 0
      %5101 = vmatprep.subr.bf16.mxu0 0
      %5102 = vmatpush1.bf16.msra.mxu0 0
      %5103 = vmatprep.subr.bf16.mxu0 0
      %5104 = vmatpush1.bf16.msra.mxu0 0
      %5105 = vmatprep.subr.bf16.mxu0 0
      %5106 = vmatpush1.bf16.msra.mxu0 0
      %5107 = vmatprep.subr.bf16.mxu0 0
      %5108 = vmatpush1.bf16.msra.mxu0 0
      %5109 = vmatprep.subr.bf16.mxu0 0
      %5110 = vmatpush1.bf16.msra.mxu0 %v5093
      %5111 = vmatprep.subr.bf16.mxu0 0
      %5112 = vmatpush2.bf16.msra.mxu0 0
      %5113 = vmatprep.subr.bf16.mxu0 0
      %5114 = vmatpush2.bf16.msra.mxu0 0
      %5115 = vmatprep.subr.bf16.mxu0 0
      %5116 = vmatpush2.bf16.msra.mxu0 0
      %5117 = vmatprep.subr.bf16.mxu0 0
      %5118 = vmatpush2.bf16.msra.mxu0 0
      %5119 = vmatprep.subr.bf16.mxu0 0
      %5120 = vmatpush2.bf16.msra.mxu0 0
      %5121 = vmatprep.subr.bf16.mxu0 0
      %5122 = vmatpush2.bf16.msra.mxu0 0
      %5123 = vmatprep.subr.bf16.mxu0 0
      %5124 = vmatpush2.bf16.msra.mxu0 0
      %5125 = vmatprep.subr.bf16.mxu0 0
      %5126 = vmatpush2.bf16.msra.mxu0 0
      %5127 = vmatprep.mubr.bf16.mxu0 0
      %5128 = vmatmul.mubr.bf16.gmra.mxu0 %v5044
      %v5129 = vpop.f32.mrf.mxu0
      %v5130 = vadd.f32 0.0, %v5129
      %v5131 = vpop.f32.mrf.mxu0
      %v5132 = vpop.f32.mrf.mxu0
      %v5133 = vadd.f32 0.0, %v5132
      %v5134 = vpop.f32.mrf.mxu0
      %5135 = vmatprep.mubr.bf16.mxu0 0
      %5136 = vmatmul.mubr.bf16.gmra.mxu0 %v5047
      %v5137 = vpop.f32.mrf.mxu0
      %v5138 = vadd.f32 0.0, %v5137
      %v5139 = vpop.f32.mrf.mxu0
      %v5140 = vpop.f32.mrf.mxu0
      %v5141 = vadd.f32 0.0, %v5140
      %v5142 = vpop.f32.mrf.mxu0
      %5143 = vmatprep.mubr.bf16.mxu0 0
      %5144 = vmatmul.mubr.bf16.gmra.mxu0 %v5050
      %v5145 = vpop.f32.mrf.mxu0
      %v5146 = vadd.f32 0.0, %v5145
      %v5147 = vpop.f32.mrf.mxu0
      %v5148 = vpop.f32.mrf.mxu0
      %v5149 = vadd.f32 0.0, %v5148
      %v5150 = vpop.f32.mrf.mxu0
      %5151 = vmatprep.mubr.bf16.mxu0 0
      %5152 = vmatmul.mubr.bf16.gmra.mxu0 %v5053
      %v5153 = vpop.f32.mrf.mxu0
      %v5154 = vadd.f32 0.0, %v5153
      %v5155 = vpop.f32.mrf.mxu0
      %v5156 = vpop.f32.mrf.mxu0
      %v5157 = vadd.f32 0.0, %v5156
      %v5158 = vpop.f32.mrf.mxu0
      %5159 = vmatprep.mubr.bf16.mxu0 0
      %5160 = vmatmul.mubr.bf16.gmra.mxu0 %v5056
      %v5161 = vpop.f32.mrf.mxu0
      %v5162 = vadd.f32 0.0, %v5161
      %v5163 = vpop.f32.mrf.mxu0
      %v5164 = vpop.f32.mrf.mxu0
      %v5165 = vadd.f32 0.0, %v5164
      %v5166 = vpop.f32.mrf.mxu0
      %5167 = vmatprep.mubr.bf16.mxu0 0
      %5168 = vmatmul.mubr.bf16.gmra.mxu0 %v5059
      %v5169 = vpop.f32.mrf.mxu0
      %v5170 = vadd.f32 0.0, %v5169
      %v5171 = vpop.f32.mrf.mxu0
      %v5172 = vpop.f32.mrf.mxu0
      %v5173 = vadd.f32 0.0, %v5172
      %v5174 = vpop.f32.mrf.mxu0
      %5175 = vmatprep.mubr.bf16.mxu0 0
      %5176 = vmatmul.mubr.bf16.gmra.mxu0 %v5062
      %v5177 = vpop.f32.mrf.mxu0
      %v5178 = vadd.f32 0.0, %v5177
      %v5179 = vpop.f32.mrf.mxu0
      %v5180 = vpop.f32.mrf.mxu0
      %v5181 = vadd.f32 0.0, %v5180
      %v5182 = vpop.f32.mrf.mxu0
      %5183 = vmatprep.mubr.bf16.mxu0 0
      %5184 = vmatmul.mubr.bf16.gmra.mxu0 %v5065
      %v5185 = vpop.f32.mrf.mxu0
      %v5186 = vadd.f32 0.0, %v5185
      %v5187 = vpop.f32.mrf.mxu0
      %v5188 = vpop.f32.mrf.mxu0
      %v5189 = vadd.f32 0.0, %v5188
      %v5190 = vpop.f32.mrf.mxu0
      %5191 = vmatprep.mubr.bf16.mxu0 0
      %5192 = vmatmul.mubr.bf16.gmra.mxu0 %v5068
      %v5193 = vpop.f32.mrf.mxu0
      %v5194 = vadd.f32 0.0, %v5193
      %v5195 = vpop.f32.mrf.mxu0
      %v5196 = vpop.f32.mrf.mxu0
      %v5197 = vadd.f32 0.0, %v5196
      %v5198 = vpop.f32.mrf.mxu0
      %5199 = vmatprep.mubr.bf16.mxu0 0
      %5200 = vmatmul.mubr.bf16.gmra.mxu0 %v5071
      %v5201 = vpop.f32.mrf.mxu0
      %v5202 = vadd.f32 0.0, %v5201
      %v5203 = vpop.f32.mrf.mxu0
      %v5204 = vpop.f32.mrf.mxu0
      %v5205 = vadd.f32 0.0, %v5204
      %v5206 = vpop.f32.mrf.mxu0
      %5207 = vmatprep.mubr.bf16.mxu0 0
      %5208 = vmatmul.mubr.bf16.gmra.mxu0 %v5074
      %v5209 = vpop.f32.mrf.mxu0
      %v5210 = vadd.f32 0.0, %v5209
      %v5211 = vpop.f32.mrf.mxu0
      %v5212 = vpop.f32.mrf.mxu0
      %v5213 = vadd.f32 0.0, %v5212
      %v5214 = vpop.f32.mrf.mxu0
      %5215 = vmatprep.mubr.bf16.mxu0 0
      %5216 = vmatmul.mubr.bf16.gmra.mxu0 %v5077
      %v5217 = vpop.f32.mrf.mxu0
      %v5218 = vadd.f32 0.0, %v5217
      %v5219 = vpop.f32.mrf.mxu0
      %v5220 = vpop.f32.mrf.mxu0
      %v5221 = vadd.f32 0.0, %v5220
      %v5222 = vpop.f32.mrf.mxu0
      %5223 = vmatprep.mubr.bf16.mxu0 0
      %5224 = vmatmul.mubr.bf16.gmra.mxu0 %v5080
      %v5225 = vpop.f32.mrf.mxu0
      %v5226 = vadd.f32 0.0, %v5225
      %v5227 = vpop.f32.mrf.mxu0
      %v5228 = vpop.f32.mrf.mxu0
      %v5229 = vadd.f32 0.0, %v5228
      %v5230 = vpop.f32.mrf.mxu0
      %5231 = vmatprep.mubr.bf16.mxu0 0
      %5232 = vmatmul.mubr.bf16.gmra.mxu0 %v5083
      %v5233 = vpop.f32.mrf.mxu0
      %v5234 = vadd.f32 0.0, %v5233
      %v5235 = vpop.f32.mrf.mxu0
      %v5236 = vpop.f32.mrf.mxu0
      %v5237 = vadd.f32 0.0, %v5236
      %v5238 = vpop.f32.mrf.mxu0
      %5239 = vmatprep.mubr.bf16.mxu0 0
      %5240 = vmatmul.mubr.bf16.gmra.mxu0 %v5086
      %v5241 = vpop.f32.mrf.mxu0
      %v5242 = vadd.f32 0.0, %v5241
      %v5243 = vpop.f32.mrf.mxu0
      %v5244 = vpop.f32.mrf.mxu0
      %v5245 = vadd.f32 0.0, %v5244
      %v5246 = vpop.f32.mrf.mxu0
      %5247 = vmatprep.mubr.bf16.mxu0 0
      %5248 = vmatmul.mubr.bf16.gmra.mxu0 %v5089
      %v5249 = vpop.f32.mrf.mxu0
      %v5250 = vadd.f32 0.0, %v5249
      %v5251 = vpop.f32.mrf.mxu0
      %v5252 = vpop.f32.mrf.mxu0
      %v5253 = vadd.f32 0.0, %v5252
      %v5254 = vpop.f32.mrf.mxu0
      %5255 = vdwg.mxu0
      %v5256 = vadd.f32 %v5010, %v5130
      %v5257 = vadd.f32 %v5011, %v5133
      %v5258 = vadd.f32 %v5012, %v5138
      %v5259 = vadd.f32 %v5013, %v5141
      %v5260 = vadd.f32 %v5014, %v5146
      %v5261 = vadd.f32 %v5015, %v5149
      %v5262 = vadd.f32 %v5016, %v5154
      %v5263 = vadd.f32 %v5017, %v5157
      %v5264 = vadd.f32 %v5018, %v5162
      %v5265 = vadd.f32 %v5019, %v5165
      %v5266 = vadd.f32 %v5020, %v5170
      %v5267 = vadd.f32 %v5021, %v5173
      %v5268 = vadd.f32 %v5022, %v5178
      %v5269 = vadd.f32 %v5023, %v5181
      %v5270 = vadd.f32 %v5024, %v5186
      %v5271 = vadd.f32 %v5025, %v5189
      %v5272 = vadd.f32 %v5026, %v5194
      %v5273 = vadd.f32 %v5027, %v5197
      %v5274 = vadd.f32 %v5028, %v5202
      %v5275 = vadd.f32 %v5029, %v5205
      %v5276 = vadd.f32 %v5030, %v5210
      %v5277 = vadd.f32 %v5031, %v5213
      %v5278 = vadd.f32 %v5032, %v5218
      %v5279 = vadd.f32 %v5033, %v5221
      %v5280 = vadd.f32 %v5034, %v5226
      %v5281 = vadd.f32 %v5035, %v5229
      %v5282 = vadd.f32 %v5036, %v5234
      %v5283 = vadd.f32 %v5037, %v5237
      %v5284 = vadd.f32 %v5038, %v5242
      %v5285 = vadd.f32 %v5039, %v5245
      %v5286 = vadd.f32 %v5040, %v5250
      %v5287 = vadd.f32 %v5041, %v5253
      %5288 = vst.msk [vmem:[%s197] sm:$0xff] %vm1572, %v5256
      %5289 = vst.msk [vmem:[%s197 + $0x8] sm:$0xff] %vm1572, %v5257
      %5290 = vst.msk [vmem:[%s197 + $0x10] sm:$0xff] %vm1572, %v5258
      %5291 = vst.msk [vmem:[%s197 + $0x18] sm:$0xff] %vm1572, %v5259
      %5292 = vst.msk [vmem:[%s197 + $0x20] sm:$0xff] %vm1572, %v5260
      %5293 = vst.msk [vmem:[%s197 + $0x28] sm:$0xff] %vm1572, %v5261
      %5294 = vst.msk [vmem:[%s197 + $0x30] sm:$0xff] %vm1572, %v5262
      %5295 = vst.msk [vmem:[%s197 + $0x38] sm:$0xff] %vm1572, %v5263
      %5296 = vst.msk [vmem:[%s197 + $0x40] sm:$0xff] %vm1572, %v5264
      %5297 = vst.msk [vmem:[%s197 + $0x48] sm:$0xff] %vm1572, %v5265
      %5298 = vst.msk [vmem:[%s197 + $0x50] sm:$0xff] %vm1572, %v5266
      %5299 = vst.msk [vmem:[%s197 + $0x58] sm:$0xff] %vm1572, %v5267
      %5300 = vst.msk [vmem:[%s197 + $0x60] sm:$0xff] %vm1572, %v5268
      %5301 = vst.msk [vmem:[%s197 + $0x68] sm:$0xff] %vm1572, %v5269
      %5302 = vst.msk [vmem:[%s197 + $0x70] sm:$0xff] %vm1572, %v5270
      %5303 = vst.msk [vmem:[%s197 + $0x78] sm:$0xff] %vm1572, %v5271
      %5304 = vst.msk [vmem:[%s197 + $0x80] sm:$0xff] %vm1572, %v5272
      %5305 = vst.msk [vmem:[%s197 + $0x88] sm:$0xff] %vm1572, %v5273
      %5306 = vst.msk [vmem:[%s197 + $0x90] sm:$0xff] %vm1572, %v5274
      %5307 = vst.msk [vmem:[%s197 + $0x98] sm:$0xff] %vm1572, %v5275
      %5308 = vst.msk [vmem:[%s197 + $0xa0] sm:$0xff] %vm1572, %v5276
      %5309 = vst.msk [vmem:[%s197 + $0xa8] sm:$0xff] %vm1572, %v5277
      %5310 = vst.msk [vmem:[%s197 + $0xb0] sm:$0xff] %vm1572, %v5278
      %5311 = vst.msk [vmem:[%s197 + $0xb8] sm:$0xff] %vm1572, %v5279
      %5312 = vst.msk [vmem:[%s197 + $0xc0] sm:$0xff] %vm1572, %v5280
      %5313 = vst.msk [vmem:[%s197 + $0xc8] sm:$0xff] %vm1572, %v5281
      %5314 = vst.msk [vmem:[%s197 + $0xd0] sm:$0xff] %vm1572, %v5282
      %5315 = vst.msk [vmem:[%s197 + $0xd8] sm:$0xff] %vm1572, %v5283
      %5316 = vst.msk [vmem:[%s197 + $0xe0] sm:$0xff] %vm1572, %v5284
      %5317 = vst.msk [vmem:[%s197 + $0xe8] sm:$0xff] %vm1572, %v5285
      %5318 = vst.msk [vmem:[%s197 + $0xf0] sm:$0xff] %vm1572, %v5286
      %5319 = vst.msk [vmem:[%s197 + $0xf8] sm:$0xff] %vm1572, %v5287
      %p5320 = scmp.lt.s32.totalorder %s15, 1
      %s5321 = scalar_select %p5320, %s15, 1
      %s5322 = smul.addr %s5321, 32
      %s5323 = smul.addr %s5322, 8
      %s5324 = scalar_lea.vmem %s4, %s5323
      // Predicated region
      $region37: #{tpu_custom_call.1} parent=35 // pred_check
        %p5325 = pneg %p122
      $region38: #{tpu_custom_call.1} parent=35 // pred_check_branch
        %5327 = sbr.rel (%p5325) target = $region40
      $region39: #{tpu_custom_call.1} parent=35 // pred_region
        _
      $region40: #{tpu_custom_call.1} parent=35 // pred_fallthru
        _
    $region36: #{tpu_custom_call.1} parent=5 // pred_fallthru
      _
    %p5328 = scmp.le.s32.totalorder 2, %s10
    // Predicated region
    $region41: #{tpu_custom_call.1} parent=5 // pred_check
      %p5329 = pneg %p5328
    $region42: #{tpu_custom_call.1} parent=5 // pred_check_branch
      %5331 = sbr.rel (%p5329) target = $region44
    $region43: #{tpu_custom_call.1} parent=5 // pred_region
      %s5332 = ssub.s32 %s10, 2
      // Predicated region
      $region45: #{tpu_custom_call.1} parent=43 // pred_check
        %p5333 = pneg %p128
      $region46: #{tpu_custom_call.1} parent=43 // pred_check_branch
        %5335 = sbr.rel (%p5333) target = $region48
      $region47: #{tpu_custom_call.1} parent=43 // pred_region
        %p5336 = scmp.lt.s32.totalorder %s16, 1
        %s5337 = scalar_select %p5336, %s16, 1
        %s5338 = smul.addr %s5337, 32
        %s5339 = smul.addr %s5338, 8
        %s5340 = scalar_lea.vmem %s4, %s5339
      $region48: #{tpu_custom_call.1} parent=43 // pred_fallthru
        _
    $region44: #{tpu_custom_call.1} parent=5 // pred_fallthru
      _
  $region6: #{tpu_custom_call.1} parent=0 // loop_footer
    %s14 = sadd.s32 1, %s10
  $region7: #{tpu_custom_call.1} parent=0 // loop_footer_branch
    %9 = sbr.rel target = $region3
  $region8: #{tpu_custom_call.1} parent=0 // loop_exit
    _

</llo_original>
